<compile_context>
chip_gen: v5e
topology: v5e:2x2
jax: 0.10.0
libtpu: 0.0.40
codegen_flags: <defaults>
</compile_context>

<pallas_src>
import functools
import math

import jax
import jax.numpy as jnp
from jax import lax
from jax.experimental import pallas as pl
from jax.experimental.pallas import tpu as pltpu


def _round_up(x, m):
    return ((x + m - 1) // m) * m


def _vmem_capacity_bytes():
    """Per-TensorCore VMEM capacity; conservative (v7x) default if unknown."""
    try:
        info = pltpu.get_tpu_info()
        for attr in ("vmem_capacity_bytes", "vmem_bytes", "vmem_size_bytes"):
            v = getattr(info, attr, None)
            if v:
                return int(v)
    except Exception:
        pass
    return 64 << 20


def _normalize_padding(padding, dilation, kernel_size):
    """-> ((top, bottom), (left, right))  (supports ints, pairs, 'same'/'valid')."""
    if isinstance(padding, str):
        if padding == "valid":
            return ((0, 0), (0, 0))
        if padding == "same":
            pads = []
            for d, k in zip(dilation, kernel_size):
                total = d * (k - 1)
                lo = total // 2
                pads.append((lo, total - lo))
            return tuple(pads)
        raise ValueError(f"invalid padding string {padding!r}")
    if isinstance(padding, int):
        padding = (padding, padding)
    out = []
    for p in padding:
        out.append((p, p) if isinstance(p, int) else (int(p[0]), int(p[1])))
    return tuple(out)


def _conv2d_kernel(x_ref, w_ref, b_ref, o_ref, acc_ref, *, KH, KW, sh, sw, dh, dw,
                   R_out, W_out):
    """One (input-row-slab, C_out-tile) grid step.

    x_ref  : (1, R_in, W_in, C_in)   NHWC input slab (includes the KH/KW halo)
    w_ref  : (KH*KW, C_in, TC)       per-tap weight slices for this C_out tile
    b_ref  : (1, TC)                 f32 bias tile (zero padded)
    o_ref  : (1, R_out*W_out, TC)    flattened-spatial output tile (lane dense)
    acc_ref: (R_out*W_out, TC) f32   VMEM accumulator scratch
    """
    C_in = x_ref.shape[-1]
    M = R_out * W_out
    row_ext = (R_out - 1) * sh + 1
    col_ext = (W_out - 1) * sw + 1

    # Initialize the accumulator with the broadcast bias (saves a separate add pass).
    acc_ref[...] = jnp.broadcast_to(b_ref[...], acc_ref.shape)

    if sh == 1 and sw == 1:
        # Per-tap accumulated MXU matmuls; every tap window is a contiguous ref load
        # (no lane-axis concat, no strided gathers).
        for kh in range(KH):
            for kw in range(KW):
                tap = x_ref[0, kh * dh: kh * dh + R_out, kw * dw: kw * dw + W_out, :]
                acc_ref[...] += jnp.dot(tap.reshape(M, C_in), w_ref[kh * KW + kw],
                                        preferred_element_type=jnp.float32)
    else:
        # Strided convolution: slice the loaded slab value with steps.
        x = x_ref[0]
        for kh in range(KH):
            for kw in range(KW):
                tap = x[kh * dh: kh * dh + row_ext: sh,
                        kw * dw: kw * dw + col_ext: sw, :]
                acc_ref[...] += jnp.dot(tap.reshape(M, C_in), w_ref[kh * KW + kw],
                                        preferred_element_type=jnp.float32)

    o_ref[0] = acc_ref[...].astype(o_ref.dtype)


def conv2d_pallas(x_nchw, weight_oihw, bias, *, stride=(1, 1), padding=(0, 0),
                  dilation=(1, 1), groups=1, padding_mode="zeros",
                  compute_dtype=None, out_format="NCHW"):
    if groups != 1:
        # TODO(synk): grouped / depthwise convolution (groups > 1) not implemented.
        raise NotImplementedError("groups > 1 not supported")
    if isinstance(stride, int):
        stride = (stride, stride)
    if isinstance(dilation, int):
        dilation = (dilation, dilation)

    N, C_in, H, W = x_nchw.shape
    C_out, _, KH, KW = weight_oihw.shape
    sh, sw = stride
    dh, dw = dilation
    (ph_t, ph_b), (pw_l, pw_r) = _normalize_padding(padding, (dh, dw), (KH, KW))
    out_dtype = x_nchw.dtype

    # ---- layout plumbing: NCHW -> NHWC, spatial padding, optional bf16 operands ----
    x = jnp.transpose(x_nchw, (0, 2, 3, 1))
    pad_mode = {"zeros": "constant", "reflect": "reflect",
                "replicate": "edge", "circular": "wrap"}[padding_mode]
    x = jnp.pad(x, ((0, 0), (ph_t, ph_b), (pw_l, pw_r), (0, 0)), mode=pad_mode)
    H_pad, W_pad = H + ph_t + ph_b, W + pw_l + pw_r
    H_out = (H_pad - dh * (KH - 1) - 1) // sh + 1
    W_out = (W_pad - dw * (KW - 1) - 1) // sw + 1
    if compute_dtype is not None:
        x = x.astype(compute_dtype)
        weight_oihw = weight_oihw.astype(compute_dtype)
    itemsize = jnp.dtype(x.dtype).itemsize
    out_itemsize = jnp.dtype(out_dtype).itemsize

    # Keep only the input columns the conv actually reads.
    W_in = (W_out - 1) * sw + (KW - 1) * dw + 1
    x = x[:, :, :W_in, :]

    # ---- generation-aware VMEM budgets (v7x: 64 MiB/TC, v5e/v6e: 128 MiB) ----
    vmem_cap = _vmem_capacity_bytes()
    vmem_ceiling = (96 << 20) if vmem_cap > (100 << 20) else (48 << 20)
    x_budget = max(2 << 20, vmem_cap // 10)
    acc_budget = max(2 << 20, vmem_cap // 10)

    # ---- C_out tiling: lane-dense 256-wide (MXU-width) blocks, bounded residency ----
    C_out_p = _round_up(C_out, 128)
    TC = min(C_out_p, 256)
    while TC > 128 and 2 * KH * KW * C_in * TC * itemsize > max(vmem_cap // 4, 8 << 20):
        TC -= 128
    C_out_p = _round_up(C_out, TC)
    n_cout = C_out_p // TC

    # ---- weight OIHW -> (KH*KW, C_in, C_out_p); bias -> (1, C_out_p) f32 ----
    w3 = jnp.transpose(weight_oihw, (2, 3, 1, 0)).reshape(KH * KW, C_in, C_out)
    if C_out_p != C_out:
        w3 = jnp.pad(w3, ((0, 0), (0, 0), (0, C_out_p - C_out)))
    b = bias if bias is not None else jnp.zeros((C_out,), jnp.float32)
    b = jnp.pad(b.astype(jnp.float32), (0, C_out_p - C_out)).reshape(1, C_out_p)

    # ---- row tiling: large M, bounded by the input-slab and accumulator budgets ----
    def in_rows(th):
        return (th - 1) * sh + (KH - 1) * dh + 1

    def slab_bytes(th):
        return in_rows(th) * W_in * C_in * itemsize

    def acc_bytes(th):
        return th * W_out * TC * 4

    max_M = 2048
    TH = H_out if H_out * W_out <= max_M else max(1, max_M // max(1, W_out))
    while TH > 1 and (slab_bytes(TH) > x_budget or acc_bytes(TH) > acc_budget):
        TH = max(1, TH // 2)
    # v7x: a single-image, single-C_out-tile conv should still give >= 2 "parallel"
    # grid steps so both TensorCores get work.
    if N == 1 and n_cout == 1 and TH >= H_out and H_out * W_out >= 512:
        TH = (H_out + 1) // 2
    if TH < H_out:
        # Sublane-align M = TH*W_out (8 f32 rows per vreg) when possible.
        g = 8 // math.gcd(W_out, 8)
        if TH >= g:
            TH = (TH // g) * g
    TH = max(1, min(TH, H_out))
    n_t = -(-H_out // TH)
    TH_in = in_rows(TH)
    M = TH * W_out

    # ---- build the input slabs ----
    if n_t == 1:
        # Common path: one slab per batch image -- a pure view, NO extra HBM pass.
        x_slabs = x[:, :TH_in]
    else:
        # Fallback for very large images: halo'd row slabs.  Only the (KH-1)*dh halo
        # rows of a large tile are duplicated; the bottom zero-pad rows only feed
        # output rows >= H_out, which are sliced off below (safe for all pad modes).
        # TODO(synk): replace with element-offset (pl.Element) or manual-DMA windows
        # to remove this extra HBM pass entirely.
        rows_needed = (n_t * TH - 1) * sh + (KH - 1) * dh + 1
        rows_have = x.shape[1]
        if rows_needed > rows_have:
            x = jnp.pad(x, ((0, 0), (0, rows_needed - rows_have), (0, 0), (0, 0)))
        x_slabs = jnp.stack(
            [x[:, t * TH * sh: t * TH * sh + TH_in] for t in range(n_t)], axis=1)
        x_slabs = x_slabs.reshape(N * n_t, TH_in, W_in, C_in)
    n_slabs = x_slabs.shape[0]

    kernel = functools.partial(_conv2d_kernel, KH=KH, KW=KW, sh=sh, sw=sw,
                               dh=dh, dw=dw, R_out=TH, W_out=W_out)

    # ---- cost estimate + explicit VMEM accounting ----
    flops = 2 * N * H_out * W_out * C_out * KH * KW * C_in
    bytes_accessed = int(x_slabs.size * itemsize
                         + n_slabs * w3.size * itemsize      # weight re-streamed/slab
                         + b.size * 4
                         + n_slabs * M * C_out_p * out_itemsize)
    x_slab_b = TH_in * W_in * C_in * itemsize
    w_blk_b = KH * KW * C_in * TC * itemsize
    o_blk_b = M * TC * out_itemsize
    acc_b = M * TC * 4
    need = (2 * x_slab_b + 2 * w_blk_b + 2 * o_blk_b + 2 * TC * 4
            + acc_b + (acc_b + x_slab_b) + (1 << 20))        # + per-tap temporaries
    vmem_limit = int(min(max(need, 32 << 20), vmem_ceiling))

    out_flat = pl.pallas_call(
        kernel,
        out_shape=jax.ShapeDtypeStruct((n_slabs, M, C_out_p), out_dtype),
        grid=(n_slabs, n_cout),
        in_specs=[
            # x slab depends only on the outer axis -> fetched once, resident over j.
            pl.BlockSpec((1, TH_in, W_in, C_in), lambda i, j: (i, 0, 0, 0)),
            pl.BlockSpec((KH * KW, C_in, TC), lambda i, j: (0, 0, j)),
            pl.BlockSpec((1, TC), lambda i, j: (0, j)),
        ],
        out_specs=pl.BlockSpec((1, M, TC), lambda i, j: (i, 0, j)),
        scratch_shapes=[pltpu.VMEM((M, TC), jnp.float32)],
        compiler_params=pltpu.CompilerParams(
            dimension_semantics=("parallel", "parallel"),
            vmem_limit_bytes=vmem_limit),
        cost_estimate=pl.CostEstimate(flops=flops, transcendentals=0,
                                      bytes_accessed=bytes_accessed),
    )(x_slabs, w3, b)

    # (n_slabs, M, C_out_p) -> NHWC -> strip padding.
    out = out_flat.reshape(N, n_t * TH, W_out, C_out_p)[:, :H_out, :, :C_out]
    if out_format == "NHWC":
        # Skips the extra HBM pass of the NCHW transpose; fuse into the consumer.
        return out
    return jnp.transpose(out, (0, 3, 1, 2))


def conv2d_module_forward(x, weight, bias, *, use_straight_through=False,
                          compress_bias=False, weight_decoder=lambda w: w,
                          bias_decoder=lambda b: b, stride=(1, 1), padding=(0, 0),
                          dilation=(1, 1), groups=1, padding_mode="zeros",
                          compute_dtype=jnp.bfloat16, out_format="NCHW"):
    """Mirror of Conv2d.forward (decoders are user-supplied; identity by default).

    compute_dtype=bf16 by default (MXU peak on v5e/v6e/v7x; f32 accumulation stays
    in-kernel).  Pass compute_dtype=None for exact f32 operands.
    """
    w = jnp.round(weight) if use_straight_through else weight
    b = bias
    if bias is not None and use_straight_through and compress_bias:
        b = jnp.round(bias)
    w = weight_decoder(w)
    b = bias_decoder(b) if b is not None else None
    return conv2d_pallas(x, w, b, stride=stride, padding=padding, dilation=dilation,
                         groups=groups, padding_mode=padding_mode,
                         compute_dtype=compute_dtype, out_format=out_format)


if __name__ == "__main__":
    # Conv2d(4, 8, kernel_size=3, stride=1, padding=1, bias=True)
    N, C_in, H, W = 2, 4, 16, 16
    C_out, KH, KW = 8, 3, 3
    stride, padding, dilation, groups = (1, 1), (1, 1), (1, 1), 1

    key = jax.random.PRNGKey(0)
    kx, kw_, kb = jax.random.split(key, 3)
    x = jax.random.normal(kx, (N, C_in, H, W), dtype=jnp.float32)

    # reset_parameters(): kaiming_uniform(a=sqrt(5)) -> U(-1/sqrt(fan_in), 1/sqrt(fan_in))
    fan_in = (C_in // groups) * KH * KW
    bound = 1.0 / math.sqrt(fan_in)
    weight = jax.random.uniform(kw_, (C_out, C_in // groups, KH, KW),
                                minval=-bound, maxval=bound, dtype=jnp.float32)
    bias = jax.random.uniform(kb, (C_out,), minval=-bound, maxval=bound,
                              dtype=jnp.float32)

    def ref_conv(xv, wv):
        return lax.conv_general_dilated(
            xv, wv, window_strides=stride,
            padding=[(padding[0], padding[0]), (padding[1], padding[1])],
            rhs_dilation=dilation, dimension_numbers=("NCHW", "OIHW", "NCHW"),
            feature_group_count=groups) + bias[None, :, None, None]

    # --- exact f32 path: tight reference check ---
    out_f32 = conv2d_module_forward(x, weight, bias, stride=stride, padding=padding,
                                    dilation=dilation, groups=groups,
                                    compute_dtype=None)
    out_f32 = jax.block_until_ready(out_f32)
    ref_f32 = ref_conv(x, weight)
    assert out_f32.shape == (N, C_out, H, W), out_f32.shape
    assert jnp.allclose(out_f32, ref_f32, atol=1e-4, rtol=1e-4), \
        float(jnp.max(jnp.abs(out_f32 - ref_f32)))

    # --- default path: bf16 MXU operands, f32 accumulation ---
    out_bf16 = conv2d_module_forward(x, weight, bias, stride=stride, padding=padding,
                                     dilation=dilation, groups=groups)
    out_bf16 = jax.block_until_ready(out_bf16)
    ref_bf16 = ref_conv(x.astype(jnp.bfloat16).astype(jnp.float32),
                        weight.astype(jnp.bfloat16).astype(jnp.float32))
    assert out_bf16.shape == (N, C_out, H, W), out_bf16.shape
    assert jnp.allclose(out_bf16, ref_bf16, atol=1e-3, rtol=1e-3), \
        float(jnp.max(jnp.abs(out_bf16 - ref_bf16)))

    print("KERNEL_OK")
</pallas_src>

<mosaic_0001>
module attributes {stable_mosaic.version = 11 : i64} {
  func.func @_conv2d_kernel(%arg0: i32, %arg1: i32, %arg2: memref<1x18x18x4xf32, #tpu.memory_space<vmem>>, %arg3: memref<9x4x128xf32, #tpu.memory_space<vmem>>, %arg4: memref<1x128xf32, #tpu.memory_space<vmem>>, %arg5: memref<1x256x128xf32, #tpu.memory_space<vmem>>, %arg6: memref<256x128xf32, #tpu.memory_space<vmem>>) attributes {dimension_semantics = [#tpu.dimension_semantics<parallel>, #tpu.dimension_semantics<parallel>], iteration_bounds = array<i64: 2, 1>, scalar_prefetch = 0 : i64, scratch_operands = 1 : i64, tpu.core_type = #tpu.core_type<tc>, window_params = [{transform_indices = @transform_0, window_bounds = array<i64: 1, 18, 18, 4>}, {transform_indices = @transform_1, window_bounds = array<i64: 9, 4, 128>}, {transform_indices = @transform_2, window_bounds = array<i64: 1, 128>}, {transform_indices = @transform_3, window_bounds = array<i64: 1, 256, 128>}]} {
    %c0 = arith.constant 0 : index
    %c0_0 = arith.constant 0 : index
    %0 = vector.load %arg4[%c0, %c0_0] : memref<1x128xf32, #tpu.memory_space<vmem>>, vector<1x128xf32>
    %1 = vector.shape_cast %0 : vector<1x128xf32> to vector<1x128xf32>
    %2 = vector.broadcast %1 : vector<1x128xf32> to vector<256x128xf32>
    %c0_1 = arith.constant 0 : index
    %c0_2 = arith.constant 0 : index
    %3 = vector.load %arg6[%c0_1, %c0_2] : memref<256x128xf32, #tpu.memory_space<vmem>>, vector<256x128xf32>
    tpu.vector_store %arg6[%c0_1, %c0_2], %2 {strides = array<i32>} : memref<256x128xf32, #tpu.memory_space<vmem>>, vector<256x128xf32>,
    %c0_3 = arith.constant 0 : index
    %c0_4 = arith.constant 0 : index
    %c0_5 = arith.constant 0 : index
    %c0_6 = arith.constant 0 : index
    %4 = vector.load %arg2[%c0_3, %c0_4, %c0_5, %c0_6] : memref<1x18x18x4xf32, #tpu.memory_space<vmem>>, vector<1x16x16x4xf32>
    %5 = vector.shape_cast %4 : vector<1x16x16x4xf32> to vector<16x16x4xf32>
    %c0_7 = arith.constant 0 : index
    %c0_8 = arith.constant 0 : index
    %6 = vector.load %arg6[%c0_7, %c0_8] : memref<256x128xf32, #tpu.memory_space<vmem>>, vector<256x128xf32>
    %7 = vector.shape_cast %5 : vector<16x16x4xf32> to vector<256x4xf32>
    %c0_9 = arith.constant 0 : index
    %c0_10 = arith.constant 0 : index
    %c0_11 = arith.constant 0 : index
    %8 = vector.load %arg3[%c0_9, %c0_10, %c0_11] : memref<9x4x128xf32, #tpu.memory_space<vmem>>, vector<1x4x128xf32>
    %9 = vector.shape_cast %8 : vector<1x4x128xf32> to vector<4x128xf32>
    %cst = arith.constant dense<0.000000e+00> : vector<256x128xf32>
    %10 = tpu.matmul %7, %9, %cst {dimension_numbers = #tpu.dot_dimension_numbers<[1], [0], [0], [1], [0, 0, 1, 1], [], []>} : vector<256x4xf32>, vector<4x128xf32>, vector<256x128xf32> -> vector<256x128xf32>
    %11 = arith.addf %6, %10 : vector<256x128xf32>
    %c0_12 = arith.constant 0 : index
    %c0_13 = arith.constant 0 : index
    %12 = vector.load %arg6[%c0_12, %c0_13] : memref<256x128xf32, #tpu.memory_space<vmem>>, vector<256x128xf32>
    tpu.vector_store %arg6[%c0_12, %c0_13], %11 {strides = array<i32>} : memref<256x128xf32, #tpu.memory_space<vmem>>, vector<256x128xf32>,
    %c0_14 = arith.constant 0 : index
    %c0_15 = arith.constant 0 : index
    %c1 = arith.constant 1 : index
    %c0_16 = arith.constant 0 : index
    %13 = vector.load %arg2[%c0_14, %c0_15, %c1, %c0_16] : memref<1x18x18x4xf32, #tpu.memory_space<vmem>>, vector<1x16x16x4xf32>
    %14 = vector.shape_cast %13 : vector<1x16x16x4xf32> to vector<16x16x4xf32>
    %c0_17 = arith.constant 0 : index
    %c0_18 = arith.constant 0 : index
    %15 = vector.load %arg6[%c0_17, %c0_18] : memref<256x128xf32, #tpu.memory_space<vmem>>, vector<256x128xf32>
    %16 = vector.shape_cast %14 : vector<16x16x4xf32> to vector<256x4xf32>
    %c1_19 = arith.constant 1 : index
    %c0_20 = arith.constant 0 : index
    %c0_21 = arith.constant 0 : index
    %17 = vector.load %arg3[%c1_19, %c0_20, %c0_21] : memref<9x4x128xf32, #tpu.memory_space<vmem>>, vector<1x4x128xf32>
    %18 = vector.shape_cast %17 : vector<1x4x128xf32> to vector<4x128xf32>
    %cst_22 = arith.constant dense<0.000000e+00> : vector<256x128xf32>
    %19 = tpu.matmul %16, %18, %cst_22 {dimension_numbers = #tpu.dot_dimension_numbers<[1], [0], [0], [1], [0, 0, 1, 1], [], []>} : vector<256x4xf32>, vector<4x128xf32>, vector<256x128xf32> -> vector<256x128xf32>
    %20 = arith.addf %15, %19 : vector<256x128xf32>
    %c0_23 = arith.constant 0 : index
    %c0_24 = arith.constant 0 : index
    %21 = vector.load %arg6[%c0_23, %c0_24] : memref<256x128xf32, #tpu.memory_space<vmem>>, vector<256x128xf32>
    tpu.vector_store %arg6[%c0_23, %c0_24], %20 {strides = array<i32>} : memref<256x128xf32, #tpu.memory_space<vmem>>, vector<256x128xf32>,
    %c0_25 = arith.constant 0 : index
    %c0_26 = arith.constant 0 : index
    %c2 = arith.constant 2 : index
    %c0_27 = arith.constant 0 : index
    %22 = vector.load %arg2[%c0_25, %c0_26, %c2, %c0_27] : memref<1x18x18x4xf32, #tpu.memory_space<vmem>>, vector<1x16x16x4xf32>
    %23 = vector.shape_cast %22 : vector<1x16x16x4xf32> to vector<16x16x4xf32>
    %c0_28 = arith.constant 0 : index
    %c0_29 = arith.constant 0 : index
    %24 = vector.load %arg6[%c0_28, %c0_29] : memref<256x128xf32, #tpu.memory_space<vmem>>, vector<256x128xf32>
    %25 = vector.shape_cast %23 : vector<16x16x4xf32> to vector<256x4xf32>
    %c2_30 = arith.constant 2 : index
    %c0_31 = arith.constant 0 : index
    %c0_32 = arith.constant 0 : index
    %26 = vector.load %arg3[%c2_30, %c0_31, %c0_32] : memref<9x4x128xf32, #tpu.memory_space<vmem>>, vector<1x4x128xf32>
    %27 = vector.shape_cast %26 : vector<1x4x128xf32> to vector<4x128xf32>
    %cst_33 = arith.constant dense<0.000000e+00> : vector<256x128xf32>
    %28 = tpu.matmul %25, %27, %cst_33 {dimension_numbers = #tpu.dot_dimension_numbers<[1], [0], [0], [1], [0, 0, 1, 1], [], []>} : vector<256x4xf32>, vector<4x128xf32>, vector<256x128xf32> -> vector<256x128xf32>
    %29 = arith.addf %24, %28 : vector<256x128xf32>
    %c0_34 = arith.constant 0 : index
    %c0_35 = arith.constant 0 : index
    %30 = vector.load %arg6[%c0_34, %c0_35] : memref<256x128xf32, #tpu.memory_space<vmem>>, vector<256x128xf32>
    tpu.vector_store %arg6[%c0_34, %c0_35], %29 {strides = array<i32>} : memref<256x128xf32, #tpu.memory_space<vmem>>, vector<256x128xf32>,
    %c0_36 = arith.constant 0 : index
    %c1_37 = arith.constant 1 : index
    %c0_38 = arith.constant 0 : index
    %c0_39 = arith.constant 0 : index
    %31 = vector.load %arg2[%c0_36, %c1_37, %c0_38, %c0_39] : memref<1x18x18x4xf32, #tpu.memory_space<vmem>>, vector<1x16x16x4xf32>
    %32 = vector.shape_cast %31 : vector<1x16x16x4xf32> to vector<16x16x4xf32>
    %c0_40 = arith.constant 0 : index
    %c0_41 = arith.constant 0 : index
    %33 = vector.load %arg6[%c0_40, %c0_41] : memref<256x128xf32, #tpu.memory_space<vmem>>, vector<256x128xf32>
    %34 = vector.shape_cast %32 : vector<16x16x4xf32> to vector<256x4xf32>
    %c3 = arith.constant 3 : index
    %c0_42 = arith.constant 0 : index
    %c0_43 = arith.constant 0 : index
    %35 = vector.load %arg3[%c3, %c0_42, %c0_43] : memref<9x4x128xf32, #tpu.memory_space<vmem>>, vector<1x4x128xf32>
    %36 = vector.shape_cast %35 : vector<1x4x128xf32> to vector<4x128xf32>
    %cst_44 = arith.constant dense<0.000000e+00> : vector<256x128xf32>
    %37 = tpu.matmul %34, %36, %cst_44 {dimension_numbers = #tpu.dot_dimension_numbers<[1], [0], [0], [1], [0, 0, 1, 1], [], []>} : vector<256x4xf32>, vector<4x128xf32>, vector<256x128xf32> -> vector<256x128xf32>
    %38 = arith.addf %33, %37 : vector<256x128xf32>
    %c0_45 = arith.constant 0 : index
    %c0_46 = arith.constant 0 : index
    %39 = vector.load %arg6[%c0_45, %c0_46] : memref<256x128xf32, #tpu.memory_space<vmem>>, vector<256x128xf32>
    tpu.vector_store %arg6[%c0_45, %c0_46], %38 {strides = array<i32>} : memref<256x128xf32, #tpu.memory_space<vmem>>, vector<256x128xf32>,
    %c0_47 = arith.constant 0 : index
    %c1_48 = arith.constant 1 : index
    %c1_49 = arith.constant 1 : index
    %c0_50 = arith.constant 0 : index
    %40 = vector.load %arg2[%c0_47, %c1_48, %c1_49, %c0_50] : memref<1x18x18x4xf32, #tpu.memory_space<vmem>>, vector<1x16x16x4xf32>
    %41 = vector.shape_cast %40 : vector<1x16x16x4xf32> to vector<16x16x4xf32>
    %c0_51 = arith.constant 0 : index
    %c0_52 = arith.constant 0 : index
    %42 = vector.load %arg6[%c0_51, %c0_52] : memref<256x128xf32, #tpu.memory_space<vmem>>, vector<256x128xf32>
    %43 = vector.shape_cast %41 : vector<16x16x4xf32> to vector<256x4xf32>
    %c4 = arith.constant 4 : index
    %c0_53 = arith.constant 0 : index
    %c0_54 = arith.constant 0 : index
    %44 = vector.load %arg3[%c4, %c0_53, %c0_54] : memref<9x4x128xf32, #tpu.memory_space<vmem>>, vector<1x4x128xf32>
    %45 = vector.shape_cast %44 : vector<1x4x128xf32> to vector<4x128xf32>
    %cst_55 = arith.constant dense<0.000000e+00> : vector<256x128xf32>
    %46 = tpu.matmul %43, %45, %cst_55 {dimension_numbers = #tpu.dot_dimension_numbers<[1], [0], [0], [1], [0, 0, 1, 1], [], []>} : vector<256x4xf32>, vector<4x128xf32>, vector<256x128xf32> -> vector<256x128xf32>
    %47 = arith.addf %42, %46 : vector<256x128xf32>
    %c0_56 = arith.constant 0 : index
    %c0_57 = arith.constant 0 : index
    %48 = vector.load %arg6[%c0_56, %c0_57] : memref<256x128xf32, #tpu.memory_space<vmem>>, vector<256x128xf32>
    tpu.vector_store %arg6[%c0_56, %c0_57], %47 {strides = array<i32>} : memref<256x128xf32, #tpu.memory_space<vmem>>, vector<256x128xf32>,
    %c0_58 = arith.constant 0 : index
    %c1_59 = arith.constant 1 : index
    %c2_60 = arith.constant 2 : index
    %c0_61 = arith.constant 0 : index
    %49 = vector.load %arg2[%c0_58, %c1_59, %c2_60, %c0_61] : memref<1x18x18x4xf32, #tpu.memory_space<vmem>>, vector<1x16x16x4xf32>
    %50 = vector.shape_cast %49 : vector<1x16x16x4xf32> to vector<16x16x4xf32>
    %c0_62 = arith.constant 0 : index
    %c0_63 = arith.constant 0 : index
    %51 = vector.load %arg6[%c0_62, %c0_63] : memref<256x128xf32, #tpu.memory_space<vmem>>, vector<256x128xf32>
    %52 = vector.shape_cast %50 : vector<16x16x4xf32> to vector<256x4xf32>
    %c5 = arith.constant 5 : index
    %c0_64 = arith.constant 0 : index
    %c0_65 = arith.constant 0 : index
    %53 = vector.load %arg3[%c5, %c0_64, %c0_65] : memref<9x4x128xf32, #tpu.memory_space<vmem>>, vector<1x4x128xf32>
    %54 = vector.shape_cast %53 : vector<1x4x128xf32> to vector<4x128xf32>
    %cst_66 = arith.constant dense<0.000000e+00> : vector<256x128xf32>
    %55 = tpu.matmul %52, %54, %cst_66 {dimension_numbers = #tpu.dot_dimension_numbers<[1], [0], [0], [1], [0, 0, 1, 1], [], []>} : vector<256x4xf32>, vector<4x128xf32>, vector<256x128xf32> -> vector<256x128xf32>
    %56 = arith.addf %51, %55 : vector<256x128xf32>
    %c0_67 = arith.constant 0 : index
    %c0_68 = arith.constant 0 : index
    %57 = vector.load %arg6[%c0_67, %c0_68] : memref<256x128xf32, #tpu.memory_space<vmem>>, vector<256x128xf32>
    tpu.vector_store %arg6[%c0_67, %c0_68], %56 {strides = array<i32>} : memref<256x128xf32, #tpu.memory_space<vmem>>, vector<256x128xf32>,
    %c0_69 = arith.constant 0 : index
    %c2_70 = arith.constant 2 : index
    %c0_71 = arith.constant 0 : index
    %c0_72 = arith.constant 0 : index
    %58 = vector.load %arg2[%c0_69, %c2_70, %c0_71, %c0_72] : memref<1x18x18x4xf32, #tpu.memory_space<vmem>>, vector<1x16x16x4xf32>
    %59 = vector.shape_cast %58 : vector<1x16x16x4xf32> to vector<16x16x4xf32>
    %c0_73 = arith.constant 0 : index
    %c0_74 = arith.constant 0 : index
    %60 = vector.load %arg6[%c0_73, %c0_74] : memref<256x128xf32, #tpu.memory_space<vmem>>, vector<256x128xf32>
    %61 = vector.shape_cast %59 : vector<16x16x4xf32> to vector<256x4xf32>
    %c6 = arith.constant 6 : index
    %c0_75 = arith.constant 0 : index
    %c0_76 = arith.constant 0 : index
    %62 = vector.load %arg3[%c6, %c0_75, %c0_76] : memref<9x4x128xf32, #tpu.memory_space<vmem>>, vector<1x4x128xf32>
    %63 = vector.shape_cast %62 : vector<1x4x128xf32> to vector<4x128xf32>
    %cst_77 = arith.constant dense<0.000000e+00> : vector<256x128xf32>
    %64 = tpu.matmul %61, %63, %cst_77 {dimension_numbers = #tpu.dot_dimension_numbers<[1], [0], [0], [1], [0, 0, 1, 1], [], []>} : vector<256x4xf32>, vector<4x128xf32>, vector<256x128xf32> -> vector<256x128xf32>
    %65 = arith.addf %60, %64 : vector<256x128xf32>
    %c0_78 = arith.constant 0 : index
    %c0_79 = arith.constant 0 : index
    %66 = vector.load %arg6[%c0_78, %c0_79] : memref<256x128xf32, #tpu.memory_space<vmem>>, vector<256x128xf32>
    tpu.vector_store %arg6[%c0_78, %c0_79], %65 {strides = array<i32>} : memref<256x128xf32, #tpu.memory_space<vmem>>, vector<256x128xf32>,
    %c0_80 = arith.constant 0 : index
    %c2_81 = arith.constant 2 : index
    %c1_82 = arith.constant 1 : index
    %c0_83 = arith.constant 0 : index
    %67 = vector.load %arg2[%c0_80, %c2_81, %c1_82, %c0_83] : memref<1x18x18x4xf32, #tpu.memory_space<vmem>>, vector<1x16x16x4xf32>
    %68 = vector.shape_cast %67 : vector<1x16x16x4xf32> to vector<16x16x4xf32>
    %c0_84 = arith.constant 0 : index
    %c0_85 = arith.constant 0 : index
    %69 = vector.load %arg6[%c0_84, %c0_85] : memref<256x128xf32, #tpu.memory_space<vmem>>, vector<256x128xf32>
    %70 = vector.shape_cast %68 : vector<16x16x4xf32> to vector<256x4xf32>
    %c7 = arith.constant 7 : index
    %c0_86 = arith.constant 0 : index
    %c0_87 = arith.constant 0 : index
    %71 = vector.load %arg3[%c7, %c0_86, %c0_87] : memref<9x4x128xf32, #tpu.memory_space<vmem>>, vector<1x4x128xf32>
    %72 = vector.shape_cast %71 : vector<1x4x128xf32> to vector<4x128xf32>
    %cst_88 = arith.constant dense<0.000000e+00> : vector<256x128xf32>
    %73 = tpu.matmul %70, %72, %cst_88 {dimension_numbers = #tpu.dot_dimension_numbers<[1], [0], [0], [1], [0, 0, 1, 1], [], []>} : vector<256x4xf32>, vector<4x128xf32>, vector<256x128xf32> -> vector<256x128xf32>
    %74 = arith.addf %69, %73 : vector<256x128xf32>
    %c0_89 = arith.constant 0 : index
    %c0_90 = arith.constant 0 : index
    %75 = vector.load %arg6[%c0_89, %c0_90] : memref<256x128xf32, #tpu.memory_space<vmem>>, vector<256x128xf32>
    tpu.vector_store %arg6[%c0_89, %c0_90], %74 {strides = array<i32>} : memref<256x128xf32, #tpu.memory_space<vmem>>, vector<256x128xf32>,
    %c0_91 = arith.constant 0 : index
    %c2_92 = arith.constant 2 : index
    %c2_93 = arith.constant 2 : index
    %c0_94 = arith.constant 0 : index
    %76 = vector.load %arg2[%c0_91, %c2_92, %c2_93, %c0_94] : memref<1x18x18x4xf32, #tpu.memory_space<vmem>>, vector<1x16x16x4xf32>
    %77 = vector.shape_cast %76 : vector<1x16x16x4xf32> to vector<16x16x4xf32>
    %c0_95 = arith.constant 0 : index
    %c0_96 = arith.constant 0 : index
    %78 = vector.load %arg6[%c0_95, %c0_96] : memref<256x128xf32, #tpu.memory_space<vmem>>, vector<256x128xf32>
    %79 = vector.shape_cast %77 : vector<16x16x4xf32> to vector<256x4xf32>
    %c8 = arith.constant 8 : index
    %c0_97 = arith.constant 0 : index
    %c0_98 = arith.constant 0 : index
    %80 = vector.load %arg3[%c8, %c0_97, %c0_98] : memref<9x4x128xf32, #tpu.memory_space<vmem>>, vector<1x4x128xf32>
    %81 = vector.shape_cast %80 : vector<1x4x128xf32> to vector<4x128xf32>
    %cst_99 = arith.constant dense<0.000000e+00> : vector<256x128xf32>
    %82 = tpu.matmul %79, %81, %cst_99 {dimension_numbers = #tpu.dot_dimension_numbers<[1], [0], [0], [1], [0, 0, 1, 1], [], []>} : vector<256x4xf32>, vector<4x128xf32>, vector<256x128xf32> -> vector<256x128xf32>
    %83 = arith.addf %78, %82 : vector<256x128xf32>
    %c0_100 = arith.constant 0 : index
    %c0_101 = arith.constant 0 : index
    %84 = vector.load %arg6[%c0_100, %c0_101] : memref<256x128xf32, #tpu.memory_space<vmem>>, vector<256x128xf32>
    tpu.vector_store %arg6[%c0_100, %c0_101], %83 {strides = array<i32>} : memref<256x128xf32, #tpu.memory_space<vmem>>, vector<256x128xf32>,
    %c0_102 = arith.constant 0 : index
    %c0_103 = arith.constant 0 : index
    %85 = vector.load %arg6[%c0_102, %c0_103] : memref<256x128xf32, #tpu.memory_space<vmem>>, vector<256x128xf32>
    %c0_104 = arith.constant 0 : index
    %c0_105 = arith.constant 0 : index
    %c0_106 = arith.constant 0 : index
    %86 = vector.load %arg5[%c0_104, %c0_105, %c0_106] : memref<1x256x128xf32, #tpu.memory_space<vmem>>, vector<1x256x128xf32>
    %87 = vector.shape_cast %86 : vector<1x256x128xf32> to vector<256x128xf32>
    %88 = vector.shape_cast %85 : vector<256x128xf32> to vector<1x256x128xf32>
    tpu.vector_store %arg5[%c0_104, %c0_105, %c0_106], %88 {strides = array<i32>} : memref<1x256x128xf32, #tpu.memory_space<vmem>>, vector<1x256x128xf32>,
    return
  }
  func.func @transform_0(%arg0: i32, %arg1: i32) -> (i32, i32, i32, i32) {
    %c0_i32 = arith.constant 0 : i32
    %c0_i32_0 = arith.constant 0 : i32
    %c0_i32_1 = arith.constant 0 : i32
    %c0_i32_2 = arith.constant 0 : i32
    return %arg0, %c0_i32, %c0_i32_0, %c0_i32_1 : i32, i32, i32, i32
  }
  func.func @transform_1(%arg0: i32, %arg1: i32) -> (i32, i32, i32) {
    %c0_i32 = arith.constant 0 : i32
    %c0_i32_0 = arith.constant 0 : i32
    %c0_i32_1 = arith.constant 0 : i32
    return %c0_i32, %c0_i32_0, %arg1 : i32, i32, i32
  }
  func.func @transform_2(%arg0: i32, %arg1: i32) -> (i32, i32) {
    %c0_i32 = arith.constant 0 : i32
    %c0_i32_0 = arith.constant 0 : i32
    return %c0_i32, %arg1 : i32, i32
  }
  func.func @transform_3(%arg0: i32, %arg1: i32) -> (i32, i32, i32) {
    %c0_i32 = arith.constant 0 : i32
    %c0_i32_0 = arith.constant 0 : i32
    return %arg0, %c0_i32, %arg1 : i32, i32, i32
  }
}

</mosaic_0001>

<llo_original>
// kernel: tpu_custom_call.1
$region0: #{tpu_custom_call.1}
  #allocation0 [shape = 'u32[]', space=smem, size = 0x4, offset = 0x4, fixed_abs, tag = 'smem constant byte address 0x4 - core index']
  #allocation1 [shape = 'u32[72,128]{1,0:T(1,128)}', space=vmem, size = 0x9000, scoped, tag = 'internal scratch']
  #allocation2 [shape = 'f32[256,128]{1,0:T(8,128)}', space=vmem, size = 0x20000, scoped, tag = 'scratch operand']
  %s0 = inlined_call_operand.vmem [shape: f32[2,18,18,4], index: 0, kind: input, shape index: {}]
  %s1 = inlined_call_operand.vmem [shape: f32[9,4,128], index: 1, kind: input, shape index: {}]
  %s2 = inlined_call_operand.vmem [shape: f32[1,128], index: 2, kind: input, shape index: {}]
  %s3 = inlined_call_operand.hbm [shape: f32[2,256,128], index: 3, kind: output, shape index: {}]
  %s4 = sld [smem:[#allocation0]]
  $region45: #{tpu_custom_call.1} parent=0
    _
  %s6 = ssub.s32 1, %s4
  %s7 = scalar_select 0, %s6, %s4
  $region1: #{tpu_custom_call.1} parent=0
    #allocation3 [shape = 'u8[262144]{0}', space=vmem, size = 0x40000, scoped, tag = 'output window, operand 0']
    #allocation4 [shape = 's32[2]{0}', space=sflag, size = 0x8, scoped, tag = 'scoped memory for tpu_custom_call.1']
    %8 = vsyncpa [#allocation4], 0
    %s9 = scalar_lea.sflag [#allocation4], 1
    %10 = vsyncpa %s9, 0
    loop: start=0, step=1, limit=4
    $region2: #{tpu_custom_call.1} parent=1 // loop_pre_header
      _
    $region3: #{tpu_custom_call.1} parent=1 // loop_header
      %s12 = sphi 0, %s16
      %p13 = scmp.ge.s32.totalorder %s12, 4
      %s19 = sphi 0, %s31
      %s20 = sphi 0, %s27
      %s21 = sphi 0, %s19
      %s22 = sphi 0, %s20
      %s23 = sphi 0, %s21
      %s24 = sphi 0, %s22
      %s34 = sphi 0, %s36
      %s37 = sphi 0, %s34
      %s38 = sphi 0, %s37
      %s54 = sphi 0, %s38
      %s60 = sphi 0, %s62
      %s63 = sphi 0, %s60
      %s64 = sphi 0, %s63
      %s80 = sphi 0, %s64
      %s86 = sphi 0, %s88
      %s89 = sphi 0, %s86
      %s90 = sphi 0, %s89
      %s106 = sphi 0, %s90
      %s114 = sphi 0, %s116
      %s117 = sphi 0, %s114
      %s118 = sphi 0, %s117
      %s134 = sphi 0, %s118
    $region4: #{tpu_custom_call.1} parent=1 // loop_header_branch
      %15 = sbr.rel (%p13) target = $region8
    $region5: #{tpu_custom_call.1} parent=1 // loop_body
      %s17 = ssub.s32 %s12, 1
      %s18 = ssub.s32 %s12, 2
      %s25 = sadd.s32 1, %s20
      %p26 = scmp.ge.s32.totalorder %s25, 1
      %s27 = scalar_select %p26, 0, %s25
      %s28 = sadd.s32 1, %s19
      %s29 = scalar_select %p26, %s28, %s19
      %p30 = scmp.ge.s32.totalorder %s29, 2
      %s31 = scalar_select %p30, 0, %s29
      %s32 = ssub.s32 %s19, %s31
      %p33 = scmp.eq.s32.totalorder %s32, 0
      %s35 = sadd.s32 %s34, 1
      %s36 = scalar_select %p33, %s34, %s35
      %p39 = pneg %p33
      %p40 = scmp.eq.s32.totalorder %s12, 1
      %p41 = por %p39, %p40
      %p42 = scmp.ne.s32.totalorder %s34, %s37
      %p43 = scmp.eq.s32.totalorder %s12, 0
      %p44 = por %p42, %p43
      %p45 = scmp.ne.s32.totalorder %s34, %s37
      %p46 = scmp.eq.s32.totalorder %s17, 1
      %p47 = por %p45, %p46
      %p48 = scmp.ne.s32.totalorder %s37, %s38
      %p49 = scmp.eq.s32.totalorder %s17, 0
      %p50 = por %p48, %p49
      %p51 = scmp.ne.s32.totalorder %s37, %s38
      %p52 = scmp.eq.s32.totalorder %s18, 1
      %p53 = por %p51, %p52
      %p55 = scmp.ne.s32.totalorder %s38, %s54
      %p56 = scmp.eq.s32.totalorder %s18, 0
      %p57 = por %p55, %p56
      %s58 = ssub.s32 %s20, %s27
      %p59 = scmp.eq.s32.totalorder %s58, 0
      %s61 = sadd.s32 %s60, 1
      %s62 = scalar_select %p59, %s60, %s61
      %p65 = pneg %p59
      %p66 = scmp.eq.s32.totalorder %s12, 1
      %p67 = por %p65, %p66
      %p68 = scmp.ne.s32.totalorder %s60, %s63
      %p69 = scmp.eq.s32.totalorder %s12, 0
      %p70 = por %p68, %p69
      %p71 = scmp.ne.s32.totalorder %s60, %s63
      %p72 = scmp.eq.s32.totalorder %s17, 1
      %p73 = por %p71, %p72
      %p74 = scmp.ne.s32.totalorder %s63, %s64
      %p75 = scmp.eq.s32.totalorder %s17, 0
      %p76 = por %p74, %p75
      %p77 = scmp.ne.s32.totalorder %s63, %s64
      %p78 = scmp.eq.s32.totalorder %s18, 1
      %p79 = por %p77, %p78
      %p81 = scmp.ne.s32.totalorder %s64, %s80
      %p82 = scmp.eq.s32.totalorder %s18, 0
      %p83 = por %p81, %p82
      %s84 = ssub.s32 %s20, %s27
      %p85 = scmp.eq.s32.totalorder %s84, 0
      %s87 = sadd.s32 %s86, 1
      %s88 = scalar_select %p85, %s86, %s87
      %p91 = pneg %p85
      %p92 = scmp.eq.s32.totalorder %s12, 1
      %p93 = por %p91, %p92
      %p94 = scmp.ne.s32.totalorder %s86, %s89
      %p95 = scmp.eq.s32.totalorder %s12, 0
      %p96 = por %p94, %p95
      %p97 = scmp.ne.s32.totalorder %s86, %s89
      %p98 = scmp.eq.s32.totalorder %s17, 1
      %p99 = por %p97, %p98
      %p100 = scmp.ne.s32.totalorder %s89, %s90
      %p101 = scmp.eq.s32.totalorder %s17, 0
      %p102 = por %p100, %p101
      %p103 = scmp.ne.s32.totalorder %s89, %s90
      %p104 = scmp.eq.s32.totalorder %s18, 1
      %p105 = por %p103, %p104
      %p107 = scmp.ne.s32.totalorder %s90, %s106
      %p108 = scmp.eq.s32.totalorder %s18, 0
      %p109 = por %p107, %p108
      %s110 = ssub.s32 %s19, %s31
      %s111 = ssub.s32 %s20, %s27
      %s112 = sor.u32 %s110, %s111
      %p113 = scmp.eq.s32.totalorder %s112, 0
      %s115 = sadd.s32 %s114, 1
      %s116 = scalar_select %p113, %s114, %s115
      %p119 = pneg %p113
      %p120 = scmp.eq.s32.totalorder %s12, 1
      %p121 = por %p119, %p120
      %p122 = scmp.ne.s32.totalorder %s114, %s117
      %p123 = scmp.eq.s32.totalorder %s12, 0
      %p124 = por %p122, %p123
      %p125 = scmp.ne.s32.totalorder %s114, %s117
      %p126 = scmp.eq.s32.totalorder %s17, 1
      %p127 = por %p125, %p126
      %p128 = scmp.ne.s32.totalorder %s117, %s118
      %p129 = scmp.eq.s32.totalorder %s17, 0
      %p130 = por %p128, %p129
      %p131 = scmp.ne.s32.totalorder %s117, %s118
      %p132 = scmp.eq.s32.totalorder %s18, 1
      %p133 = por %p131, %p132
      %p135 = scmp.ne.s32.totalorder %s118, %s134
      %p136 = scmp.eq.s32.totalorder %s18, 0
      %p137 = por %p135, %p136
      %p138 = scmp.le.s32.totalorder 1, %s12
      %p139 = scmp.lt.s32.totalorder %s12, 3
      %p140 = pnand %p138, %p139
      %p141 = pneg %p140
      // Predicated region
      $region9: #{tpu_custom_call.1} parent=5 // pred_check
        _
      $region10: #{tpu_custom_call.1} parent=5 // pred_check_branch
        %143 = sbr.rel (%p140) target = $region12
      $region11: #{tpu_custom_call.1} parent=5 // pred_region
        %s144 = ssub.s32 %s12, 1
        // Predicated region
        $region13: #{tpu_custom_call.1} parent=11 // pred_check
          %p145 = pneg %p76
        $region14: #{tpu_custom_call.1} parent=11 // pred_check_branch
          %147 = sbr.rel (%p145) target = $region16
        $region15: #{tpu_custom_call.1} parent=11 // pred_region
          %p148 = scmp.lt.s32.totalorder %s22, 0
          %s149 = scalar_select %p148, %s22, 0
          %s150 = smul.addr %s149, 4
          %s151 = scalar_lea.vmem %s1, %s150
        $region16: #{tpu_custom_call.1} parent=11 // pred_fallthru
          _
        // Predicated region
        $region17: #{tpu_custom_call.1} parent=11 // pred_check
          %p152 = pneg %p102
        $region18: #{tpu_custom_call.1} parent=11 // pred_check_branch
          %154 = sbr.rel (%p152) target = $region20
        $region19: #{tpu_custom_call.1} parent=11 // pred_region
          %p155 = scmp.lt.s32.totalorder %s22, 0
          %s156 = scalar_select %p155, %s22, 0
          %s157 = scalar_lea.vmem %s2, %s156
        $region20: #{tpu_custom_call.1} parent=11 // pred_fallthru
          _
      $region12: #{tpu_custom_call.1} parent=5 // pred_fallthru
        _
      %p158 = scmp.lt.s32.totalorder %s12, 2
      // Predicated region
      $region21: #{tpu_custom_call.1} parent=5 // pred_check
        %p159 = pneg %p158
      $region22: #{tpu_custom_call.1} parent=5 // pred_check_branch
        %161 = sbr.rel (%p159) target = $region24
      $region23: #{tpu_custom_call.1} parent=5 // pred_region
        // Predicated region
        $region25: #{tpu_custom_call.1} parent=23 // pred_check
          %p162 = pneg %p44
        $region26: #{tpu_custom_call.1} parent=23 // pred_check_branch
          %164 = sbr.rel (%p162) target = $region28
        $region27: #{tpu_custom_call.1} parent=23 // pred_region
          %p165 = scmp.lt.s32.totalorder %s19, 1
          %s166 = scalar_select %p165, %s19, 1
          %s167 = smul.addr %s166, 54
          %s168 = smul.addr %s167, 8
          %s169 = scalar_lea.vmem %s0, %s168
        $region28: #{tpu_custom_call.1} parent=23 // pred_fallthru
          _
      $region24: #{tpu_custom_call.1} parent=5 // pred_fallthru
        _
      %p170 = scmp.le.s32.totalorder 1, %s12
      %p171 = scmp.lt.s32.totalorder %s12, 3
      %p172 = pnand %p170, %p171
      %p173 = pneg %p172
      // Predicated region
      $region29: #{tpu_custom_call.1} parent=5 // pred_check
        _
      $region30: #{tpu_custom_call.1} parent=5 // pred_check_branch
        %175 = sbr.rel (%p172) target = $region32
      $region31: #{tpu_custom_call.1} parent=5 // pred_region
        %s176 = ssub.s32 %s12, 1
        %p177 = scmp.lt.s32.totalorder %s21, 1
        %s178 = scalar_select %p177, %s21, 1
        %s179 = smul.addr %s178, 54
        %s180 = smul.addr %s179, 8
        %s181 = scalar_lea.vmem %s0, %s180
        %p182 = pneg %p50
        %p183 = pneg %p47
        %p184 = scmp.lt.s32.totalorder %s22, 0
        %s185 = scalar_select %p184, %s22, 0
        %s186 = smul.addr %s185, 4
        %s187 = scalar_lea.vmem %s1, %s186
        %p188 = pneg %p76
        %p189 = pneg %p73
        %p190 = scmp.lt.s32.totalorder %s22, 0
        %s191 = scalar_select %p190, %s22, 0
        %s192 = scalar_lea.vmem %s2, %s191
        %p193 = pneg %p102
        %p194 = pneg %p99
        %p195 = pneg %p130
        %p196 = pneg %p127
        %s197 = sand.u32 %s117, 1
        %s198 = scalar_lea.sflag [#allocation4], %s197
        %s199 = sand.u32 %s117, 1
        %s200 = smul.addr %s199, 256
        %s201 = scalar_lea.vmem [#allocation3], %s200
        %p202 = scmp.lt.s32.totalorder %s21, 1
        %s203 = scalar_select %p202, %s21, 1
        %s204 = smul.addr %s203, 54
        %s205 = smul.addr %s204, 8
        %s206 = scalar_lea.vmem %s0, %s205
        %p207 = scmp.lt.s32.totalorder %s22, 0
        %s208 = scalar_select %p207, %s22, 0
        %s209 = smul.addr %s208, 4
        %s210 = scalar_lea.vmem %s1, %s209
        %p211 = scmp.lt.s32.totalorder %s22, 0
        %s212 = scalar_select %p211, %s22, 0
        %s213 = scalar_lea.vmem %s2, %s212
        %v214 = vld [vmem:[%s213] sm:$0x1]
        %v216 = vperm.slane %v214, 0
        %218 = vst [vmem:[#allocation2] sm:$0xff] %v216
        %219 = vst [vmem:[#allocation2 + $0x8] sm:$0xff] %v216
        %220 = vst [vmem:[#allocation2 + $0x10] sm:$0xff] %v216
        %221 = vst [vmem:[#allocation2 + $0x18] sm:$0xff] %v216
        %222 = vst [vmem:[#allocation2 + $0x20] sm:$0xff] %v216
        %223 = vst [vmem:[#allocation2 + $0x28] sm:$0xff] %v216
        %224 = vst [vmem:[#allocation2 + $0x30] sm:$0xff] %v216
        %225 = vst [vmem:[#allocation2 + $0x38] sm:$0xff] %v216
        %226 = vst [vmem:[#allocation2 + $0x40] sm:$0xff] %v216
        %227 = vst [vmem:[#allocation2 + $0x48] sm:$0xff] %v216
        %228 = vst [vmem:[#allocation2 + $0x50] sm:$0xff] %v216
        %229 = vst [vmem:[#allocation2 + $0x58] sm:$0xff] %v216
        %230 = vst [vmem:[#allocation2 + $0x60] sm:$0xff] %v216
        %231 = vst [vmem:[#allocation2 + $0x68] sm:$0xff] %v216
        %232 = vst [vmem:[#allocation2 + $0x70] sm:$0xff] %v216
        %233 = vst [vmem:[#allocation2 + $0x78] sm:$0xff] %v216
        %234 = vst [vmem:[#allocation2 + $0x80] sm:$0xff] %v216
        %235 = vst [vmem:[#allocation2 + $0x88] sm:$0xff] %v216
        %236 = vst [vmem:[#allocation2 + $0x90] sm:$0xff] %v216
        %237 = vst [vmem:[#allocation2 + $0x98] sm:$0xff] %v216
        %238 = vst [vmem:[#allocation2 + $0xa0] sm:$0xff] %v216
        %239 = vst [vmem:[#allocation2 + $0xa8] sm:$0xff] %v216
        %240 = vst [vmem:[#allocation2 + $0xb0] sm:$0xff] %v216
        %241 = vst [vmem:[#allocation2 + $0xb8] sm:$0xff] %v216
        %242 = vst [vmem:[#allocation2 + $0xc0] sm:$0xff] %v216
        %243 = vst [vmem:[#allocation2 + $0xc8] sm:$0xff] %v216
        %244 = vst [vmem:[#allocation2 + $0xd0] sm:$0xff] %v216
        %245 = vst [vmem:[#allocation2 + $0xd8] sm:$0xff] %v216
        %246 = vst [vmem:[#allocation2 + $0xe0] sm:$0xff] %v216
        %247 = vst [vmem:[#allocation2 + $0xe8] sm:$0xff] %v216
        %248 = vst [vmem:[#allocation2 + $0xf0] sm:$0xff] %v216
        %249 = vst [vmem:[#allocation2 + $0xf8] sm:$0xff] %v216
        %v250 = vld [vmem:[%s206] sm:$0xff]
        %v251 = vld [vmem:[%s206 + $0x8] sm:$0xff]
        %v252 = vld [vmem:[%s206 + $0x18] sm:$0xff]
        %v253 = vld [vmem:[%s206 + $0x20] sm:$0xff]
        %v254 = vld [vmem:[%s206 + $0x30] sm:$0xff]
        %v255 = vld [vmem:[%s206 + $0x38] sm:$0xff]
        %v256 = vld [vmem:[%s206 + $0x48] sm:$0xff]
        %v257 = vld [vmem:[%s206 + $0x50] sm:$0xff]
        %v258 = vld [vmem:[%s206 + $0x60] sm:$0xff]
        %v259 = vld [vmem:[%s206 + $0x68] sm:$0xff]
        %v260 = vld [vmem:[%s206 + $0x78] sm:$0xff]
        %v261 = vld [vmem:[%s206 + $0x80] sm:$0xff]
        %v262 = vld [vmem:[%s206 + $0x90] sm:$0xff]
        %v263 = vld [vmem:[%s206 + $0x98] sm:$0xff]
        %v264 = vld [vmem:[%s206 + $0xa8] sm:$0xff]
        %v265 = vld [vmem:[%s206 + $0xb0] sm:$0xff]
        %v266 = vld [vmem:[%s206 + $0xc0] sm:$0xff]
        %v267 = vld [vmem:[%s206 + $0xc8] sm:$0xff]
        %v268 = vld [vmem:[%s206 + $0xd8] sm:$0xff]
        %v269 = vld [vmem:[%s206 + $0xe0] sm:$0xff]
        %v270 = vld [vmem:[%s206 + $0xf0] sm:$0xff]
        %v271 = vld [vmem:[%s206 + $0xf8] sm:$0xff]
        %v272 = vld [vmem:[%s206 + $0x108] sm:$0xff]
        %v273 = vld [vmem:[%s206 + $0x110] sm:$0xff]
        %v274 = vld [vmem:[%s206 + $0x120] sm:$0xff]
        %v275 = vld [vmem:[%s206 + $0x128] sm:$0xff]
        %v276 = vld [vmem:[%s206 + $0x138] sm:$0xff]
        %v277 = vld [vmem:[%s206 + $0x140] sm:$0xff]
        %v278 = vld [vmem:[%s206 + $0x150] sm:$0xff]
        %v279 = vld [vmem:[%s206 + $0x158] sm:$0xff]
        %v280 = vld [vmem:[%s206 + $0x168] sm:$0xff]
        %v281 = vld [vmem:[%s206 + $0x170] sm:$0xff]
        %v282 = vld [vmem:[#allocation2] sm:$0xff]
        %v283 = vld [vmem:[#allocation2 + $0x8] sm:$0xff]
        %v284 = vld [vmem:[#allocation2 + $0x10] sm:$0xff]
        %v285 = vld [vmem:[#allocation2 + $0x18] sm:$0xff]
        %v286 = vld [vmem:[#allocation2 + $0x20] sm:$0xff]
        %v287 = vld [vmem:[#allocation2 + $0x28] sm:$0xff]
        %v288 = vld [vmem:[#allocation2 + $0x30] sm:$0xff]
        %v289 = vld [vmem:[#allocation2 + $0x38] sm:$0xff]
        %v290 = vld [vmem:[#allocation2 + $0x40] sm:$0xff]
        %v291 = vld [vmem:[#allocation2 + $0x48] sm:$0xff]
        %v292 = vld [vmem:[#allocation2 + $0x50] sm:$0xff]
        %v293 = vld [vmem:[#allocation2 + $0x58] sm:$0xff]
        %v294 = vld [vmem:[#allocation2 + $0x60] sm:$0xff]
        %v295 = vld [vmem:[#allocation2 + $0x68] sm:$0xff]
        %v296 = vld [vmem:[#allocation2 + $0x70] sm:$0xff]
        %v297 = vld [vmem:[#allocation2 + $0x78] sm:$0xff]
        %v298 = vld [vmem:[#allocation2 + $0x80] sm:$0xff]
        %v299 = vld [vmem:[#allocation2 + $0x88] sm:$0xff]
        %v300 = vld [vmem:[#allocation2 + $0x90] sm:$0xff]
        %v301 = vld [vmem:[#allocation2 + $0x98] sm:$0xff]
        %v302 = vld [vmem:[#allocation2 + $0xa0] sm:$0xff]
        %v303 = vld [vmem:[#allocation2 + $0xa8] sm:$0xff]
        %v304 = vld [vmem:[#allocation2 + $0xb0] sm:$0xff]
        %v305 = vld [vmem:[#allocation2 + $0xb8] sm:$0xff]
        %v306 = vld [vmem:[#allocation2 + $0xc0] sm:$0xff]
        %v307 = vld [vmem:[#allocation2 + $0xc8] sm:$0xff]
        %v308 = vld [vmem:[#allocation2 + $0xd0] sm:$0xff]
        %v309 = vld [vmem:[#allocation2 + $0xd8] sm:$0xff]
        %v310 = vld [vmem:[#allocation2 + $0xe0] sm:$0xff]
        %v311 = vld [vmem:[#allocation2 + $0xe8] sm:$0xff]
        %v312 = vld [vmem:[#allocation2 + $0xf0] sm:$0xff]
        %v313 = vld [vmem:[#allocation2 + $0xf8] sm:$0xff]
        %v314 = vld [vmem:[%s210] sm:$0xf]
        %vm315 = vcmask 31744
        %v317 = vsel %vm315, %v250, 0
        %v320 = vsel %vm315, %v251, 0
        %v323 = vsel %vm315, %v252, 0
        %v326 = vsel %vm315, %v253, 0
        %v329 = vsel %vm315, %v254, 0
        %v332 = vsel %vm315, %v255, 0
        %v335 = vsel %vm315, %v256, 0
        %v338 = vsel %vm315, %v257, 0
        %v341 = vsel %vm315, %v258, 0
        %v344 = vsel %vm315, %v259, 0
        %v347 = vsel %vm315, %v260, 0
        %v350 = vsel %vm315, %v261, 0
        %v353 = vsel %vm315, %v262, 0
        %v356 = vsel %vm315, %v263, 0
        %v359 = vsel %vm315, %v264, 0
        %v362 = vsel %vm315, %v265, 0
        %v365 = vsel %vm315, %v266, 0
        %v368 = vsel %vm315, %v267, 0
        %v371 = vsel %vm315, %v268, 0
        %v374 = vsel %vm315, %v269, 0
        %v377 = vsel %vm315, %v270, 0
        %v380 = vsel %vm315, %v271, 0
        %v383 = vsel %vm315, %v272, 0
        %v386 = vsel %vm315, %v273, 0
        %v389 = vsel %vm315, %v274, 0
        %v392 = vsel %vm315, %v275, 0
        %v395 = vsel %vm315, %v276, 0
        %v398 = vsel %vm315, %v277, 0
        %v401 = vsel %vm315, %v278, 0
        %v404 = vsel %vm315, %v279, 0
        %v407 = vsel %vm315, %v280, 0
        %v410 = vsel %vm315, %v281, 0
        %vm412 = vcmask 1043456
        %v414 = vsel %vm412, %v314, 0
        %416 = vmatpush.msra.mxu0 0.0
        %417 = vmatpush.msra.mxu0 0.0
        %418 = vmatpush.msra.mxu0 0.0
        %419 = vmatpush.msra.mxu0 0.0
        %420 = vmatpush.msra.mxu0 0.0
        %421 = vmatpush.msra.mxu0 0.0
        %422 = vmatpush.msra.mxu0 0.0
        %423 = vmatpush.msra.mxu0 0.0
        %424 = vmatpush.msra.mxu0 0.0
        %425 = vmatpush.msra.mxu0 0.0
        %426 = vmatpush.msra.mxu0 0.0
        %427 = vmatpush.msra.mxu0 0.0
        %428 = vmatpush.msra.mxu0 0.0
        %429 = vmatpush.msra.mxu0 0.0
        %430 = vmatpush.msra.mxu0 0.0
        %431 = vmatpush.msra.mxu0 %v414
        %432 = vmatmul.f32.gmra.mxu0 %v317
        %v433 = vpop.f32.mrf.mxu0
        %v434 = vadd.f32 0.0, %v433
        %435 = vmatmul.f32.gmra.mxu0 %v320
        %v436 = vpop.f32.mrf.mxu0
        %v437 = vadd.f32 0.0, %v436
        %438 = vmatmul.f32.gmra.mxu0 %v323
        %v439 = vpop.f32.mrf.mxu0
        %v440 = vadd.f32 0.0, %v439
        %441 = vmatmul.f32.gmra.mxu0 %v326
        %v442 = vpop.f32.mrf.mxu0
        %v443 = vadd.f32 0.0, %v442
        %444 = vmatmul.f32.gmra.mxu0 %v329
        %v445 = vpop.f32.mrf.mxu0
        %v446 = vadd.f32 0.0, %v445
        %447 = vmatmul.f32.gmra.mxu0 %v332
        %v448 = vpop.f32.mrf.mxu0
        %v449 = vadd.f32 0.0, %v448
        %450 = vmatmul.f32.gmra.mxu0 %v335
        %v451 = vpop.f32.mrf.mxu0
        %v452 = vadd.f32 0.0, %v451
        %453 = vmatmul.f32.gmra.mxu0 %v338
        %v454 = vpop.f32.mrf.mxu0
        %v455 = vadd.f32 0.0, %v454
        %456 = vmatmul.f32.gmra.mxu0 %v341
        %v457 = vpop.f32.mrf.mxu0
        %v458 = vadd.f32 0.0, %v457
        %459 = vmatmul.f32.gmra.mxu0 %v344
        %v460 = vpop.f32.mrf.mxu0
        %v461 = vadd.f32 0.0, %v460
        %462 = vmatmul.f32.gmra.mxu0 %v347
        %v463 = vpop.f32.mrf.mxu0
        %v464 = vadd.f32 0.0, %v463
        %465 = vmatmul.f32.gmra.mxu0 %v350
        %v466 = vpop.f32.mrf.mxu0
        %v467 = vadd.f32 0.0, %v466
        %468 = vmatmul.f32.gmra.mxu0 %v353
        %v469 = vpop.f32.mrf.mxu0
        %v470 = vadd.f32 0.0, %v469
        %471 = vmatmul.f32.gmra.mxu0 %v356
        %v472 = vpop.f32.mrf.mxu0
        %v473 = vadd.f32 0.0, %v472
        %474 = vmatmul.f32.gmra.mxu0 %v359
        %v475 = vpop.f32.mrf.mxu0
        %v476 = vadd.f32 0.0, %v475
        %477 = vmatmul.f32.gmra.mxu0 %v362
        %v478 = vpop.f32.mrf.mxu0
        %v479 = vadd.f32 0.0, %v478
        %480 = vmatmul.f32.gmra.mxu0 %v365
        %v481 = vpop.f32.mrf.mxu0
        %v482 = vadd.f32 0.0, %v481
        %483 = vmatmul.f32.gmra.mxu0 %v368
        %v484 = vpop.f32.mrf.mxu0
        %v485 = vadd.f32 0.0, %v484
        %486 = vmatmul.f32.gmra.mxu0 %v371
        %v487 = vpop.f32.mrf.mxu0
        %v488 = vadd.f32 0.0, %v487
        %489 = vmatmul.f32.gmra.mxu0 %v374
        %v490 = vpop.f32.mrf.mxu0
        %v491 = vadd.f32 0.0, %v490
        %492 = vmatmul.f32.gmra.mxu0 %v377
        %v493 = vpop.f32.mrf.mxu0
        %v494 = vadd.f32 0.0, %v493
        %495 = vmatmul.f32.gmra.mxu0 %v380
        %v496 = vpop.f32.mrf.mxu0
        %v497 = vadd.f32 0.0, %v496
        %498 = vmatmul.f32.gmra.mxu0 %v383
        %v499 = vpop.f32.mrf.mxu0
        %v500 = vadd.f32 0.0, %v499
        %501 = vmatmul.f32.gmra.mxu0 %v386
        %v502 = vpop.f32.mrf.mxu0
        %v503 = vadd.f32 0.0, %v502
        %504 = vmatmul.f32.gmra.mxu0 %v389
        %v505 = vpop.f32.mrf.mxu0
        %v506 = vadd.f32 0.0, %v505
        %507 = vmatmul.f32.gmra.mxu0 %v392
        %v508 = vpop.f32.mrf.mxu0
        %v509 = vadd.f32 0.0, %v508
        %510 = vmatmul.f32.gmra.mxu0 %v395
        %v511 = vpop.f32.mrf.mxu0
        %v512 = vadd.f32 0.0, %v511
        %513 = vmatmul.f32.gmra.mxu0 %v398
        %v514 = vpop.f32.mrf.mxu0
        %v515 = vadd.f32 0.0, %v514
        %516 = vmatmul.f32.gmra.mxu0 %v401
        %v517 = vpop.f32.mrf.mxu0
        %v518 = vadd.f32 0.0, %v517
        %519 = vmatmul.f32.gmra.mxu0 %v404
        %v520 = vpop.f32.mrf.mxu0
        %v521 = vadd.f32 0.0, %v520
        %522 = vmatmul.f32.gmra.mxu0 %v407
        %v523 = vpop.f32.mrf.mxu0
        %v524 = vadd.f32 0.0, %v523
        %525 = vmatmul.f32.gmra.mxu0 %v410
        %v526 = vpop.f32.mrf.mxu0
        %v527 = vadd.f32 0.0, %v526
        %528 = vdwg.mxu0
        %v529 = vadd.f32 %v282, %v434
        %v530 = vadd.f32 %v283, %v437
        %v531 = vadd.f32 %v284, %v440
        %v532 = vadd.f32 %v285, %v443
        %v533 = vadd.f32 %v286, %v446
        %v534 = vadd.f32 %v287, %v449
        %v535 = vadd.f32 %v288, %v452
        %v536 = vadd.f32 %v289, %v455
        %v537 = vadd.f32 %v290, %v458
        %v538 = vadd.f32 %v291, %v461
        %v539 = vadd.f32 %v292, %v464
        %v540 = vadd.f32 %v293, %v467
        %v541 = vadd.f32 %v294, %v470
        %v542 = vadd.f32 %v295, %v473
        %v543 = vadd.f32 %v296, %v476
        %v544 = vadd.f32 %v297, %v479
        %v545 = vadd.f32 %v298, %v482
        %v546 = vadd.f32 %v299, %v485
        %v547 = vadd.f32 %v300, %v488
        %v548 = vadd.f32 %v301, %v491
        %v549 = vadd.f32 %v302, %v494
        %v550 = vadd.f32 %v303, %v497
        %v551 = vadd.f32 %v304, %v500
        %v552 = vadd.f32 %v305, %v503
        %v553 = vadd.f32 %v306, %v506
        %v554 = vadd.f32 %v307, %v509
        %v555 = vadd.f32 %v308, %v512
        %v556 = vadd.f32 %v309, %v515
        %v557 = vadd.f32 %v310, %v518
        %v558 = vadd.f32 %v311, %v521
        %v559 = vadd.f32 %v312, %v524
        %v560 = vadd.f32 %v313, %v527
        %561 = vst [vmem:[#allocation2] sm:$0xff] %v529
        %562 = vst [vmem:[#allocation2 + $0x8] sm:$0xff] %v530
        %563 = vst [vmem:[#allocation2 + $0x10] sm:$0xff] %v531
        %564 = vst [vmem:[#allocation2 + $0x18] sm:$0xff] %v532
        %565 = vst [vmem:[#allocation2 + $0x20] sm:$0xff] %v533
        %566 = vst [vmem:[#allocation2 + $0x28] sm:$0xff] %v534
        %567 = vst [vmem:[#allocation2 + $0x30] sm:$0xff] %v535
        %568 = vst [vmem:[#allocation2 + $0x38] sm:$0xff] %v536
        %569 = vst [vmem:[#allocation2 + $0x40] sm:$0xff] %v537
        %570 = vst [vmem:[#allocation2 + $0x48] sm:$0xff] %v538
        %571 = vst [vmem:[#allocation2 + $0x50] sm:$0xff] %v539
        %572 = vst [vmem:[#allocation2 + $0x58] sm:$0xff] %v540
        %573 = vst [vmem:[#allocation2 + $0x60] sm:$0xff] %v541
        %574 = vst [vmem:[#allocation2 + $0x68] sm:$0xff] %v542
        %575 = vst [vmem:[#allocation2 + $0x70] sm:$0xff] %v543
        %576 = vst [vmem:[#allocation2 + $0x78] sm:$0xff] %v544
        %577 = vst [vmem:[#allocation2 + $0x80] sm:$0xff] %v545
        %578 = vst [vmem:[#allocation2 + $0x88] sm:$0xff] %v546
        %579 = vst [vmem:[#allocation2 + $0x90] sm:$0xff] %v547
        %580 = vst [vmem:[#allocation2 + $0x98] sm:$0xff] %v548
        %581 = vst [vmem:[#allocation2 + $0xa0] sm:$0xff] %v549
        %582 = vst [vmem:[#allocation2 + $0xa8] sm:$0xff] %v550
        %583 = vst [vmem:[#allocation2 + $0xb0] sm:$0xff] %v551
        %584 = vst [vmem:[#allocation2 + $0xb8] sm:$0xff] %v552
        %585 = vst [vmem:[#allocation2 + $0xc0] sm:$0xff] %v553
        %586 = vst [vmem:[#allocation2 + $0xc8] sm:$0xff] %v554
        %587 = vst [vmem:[#allocation2 + $0xd0] sm:$0xff] %v555
        %588 = vst [vmem:[#allocation2 + $0xd8] sm:$0xff] %v556
        %589 = vst [vmem:[#allocation2 + $0xe0] sm:$0xff] %v557
        %590 = vst [vmem:[#allocation2 + $0xe8] sm:$0xff] %v558
        %591 = vst [vmem:[#allocation2 + $0xf0] sm:$0xff] %v559
        %592 = vst [vmem:[#allocation2 + $0xf8] sm:$0xff] %v560
        %v593 = vld [vmem:[%s206 + $0x1] sm:$0xff]
        %v594 = vld [vmem:[%s206 + $0x9] sm:$0xff]
        %v595 = vld [vmem:[%s206 + $0x19] sm:$0xff]
        %v596 = vld [vmem:[%s206 + $0x21] sm:$0xff]
        %v597 = vld [vmem:[%s206 + $0x31] sm:$0xff]
        %v598 = vld [vmem:[%s206 + $0x39] sm:$0xff]
        %v599 = vld [vmem:[%s206 + $0x49] sm:$0xff]
        %v600 = vld [vmem:[%s206 + $0x51] sm:$0xff]
        %v601 = vld [vmem:[%s206 + $0x61] sm:$0xff]
        %v602 = vld [vmem:[%s206 + $0x69] sm:$0xff]
        %v603 = vld [vmem:[%s206 + $0x79] sm:$0xff]
        %v604 = vld [vmem:[%s206 + $0x81] sm:$0xff]
        %v605 = vld [vmem:[%s206 + $0x91] sm:$0xff]
        %v606 = vld [vmem:[%s206 + $0x99] sm:$0xff]
        %v607 = vld [vmem:[%s206 + $0xa9] sm:$0xff]
        %v608 = vld [vmem:[%s206 + $0xb1] sm:$0xff]
        %v609 = vld [vmem:[%s206 + $0xc1] sm:$0xff]
        %v610 = vld [vmem:[%s206 + $0xc9] sm:$0xff]
        %v611 = vld [vmem:[%s206 + $0xd9] sm:$0xff]
        %v612 = vld [vmem:[%s206 + $0xe1] sm:$0xff]
        %v613 = vld [vmem:[%s206 + $0xf1] sm:$0xff]
        %v614 = vld [vmem:[%s206 + $0xf9] sm:$0xff]
        %v615 = vld [vmem:[%s206 + $0x109] sm:$0xff]
        %v616 = vld [vmem:[%s206 + $0x111] sm:$0xff]
        %v617 = vld [vmem:[%s206 + $0x121] sm:$0xff]
        %v618 = vld [vmem:[%s206 + $0x129] sm:$0xff]
        %v619 = vld [vmem:[%s206 + $0x139] sm:$0xff]
        %v620 = vld [vmem:[%s206 + $0x141] sm:$0xff]
        %v621 = vld [vmem:[%s206 + $0x151] sm:$0xff]
        %v622 = vld [vmem:[%s206 + $0x159] sm:$0xff]
        %v623 = vld [vmem:[%s206 + $0x169] sm:$0xff]
        %v624 = vld [vmem:[%s206 + $0x171] sm:$0xff]
        %v625 = vld [vmem:[#allocation2] sm:$0xff]
        %v626 = vld [vmem:[#allocation2 + $0x8] sm:$0xff]
        %v627 = vld [vmem:[#allocation2 + $0x10] sm:$0xff]
        %v628 = vld [vmem:[#allocation2 + $0x18] sm:$0xff]
        %v629 = vld [vmem:[#allocation2 + $0x20] sm:$0xff]
        %v630 = vld [vmem:[#allocation2 + $0x28] sm:$0xff]
        %v631 = vld [vmem:[#allocation2 + $0x30] sm:$0xff]
        %v632 = vld [vmem:[#allocation2 + $0x38] sm:$0xff]
        %v633 = vld [vmem:[#allocation2 + $0x40] sm:$0xff]
        %v634 = vld [vmem:[#allocation2 + $0x48] sm:$0xff]
        %v635 = vld [vmem:[#allocation2 + $0x50] sm:$0xff]
        %v636 = vld [vmem:[#allocation2 + $0x58] sm:$0xff]
        %v637 = vld [vmem:[#allocation2 + $0x60] sm:$0xff]
        %v638 = vld [vmem:[#allocation2 + $0x68] sm:$0xff]
        %v639 = vld [vmem:[#allocation2 + $0x70] sm:$0xff]
        %v640 = vld [vmem:[#allocation2 + $0x78] sm:$0xff]
        %v641 = vld [vmem:[#allocation2 + $0x80] sm:$0xff]
        %v642 = vld [vmem:[#allocation2 + $0x88] sm:$0xff]
        %v643 = vld [vmem:[#allocation2 + $0x90] sm:$0xff]
        %v644 = vld [vmem:[#allocation2 + $0x98] sm:$0xff]
        %v645 = vld [vmem:[#allocation2 + $0xa0] sm:$0xff]
        %v646 = vld [vmem:[#allocation2 + $0xa8] sm:$0xff]
        %v647 = vld [vmem:[#allocation2 + $0xb0] sm:$0xff]
        %v648 = vld [vmem:[#allocation2 + $0xb8] sm:$0xff]
        %v649 = vld [vmem:[#allocation2 + $0xc0] sm:$0xff]
        %v650 = vld [vmem:[#allocation2 + $0xc8] sm:$0xff]
        %v651 = vld [vmem:[#allocation2 + $0xd0] sm:$0xff]
        %v652 = vld [vmem:[#allocation2 + $0xd8] sm:$0xff]
        %v653 = vld [vmem:[#allocation2 + $0xe0] sm:$0xff]
        %v654 = vld [vmem:[#allocation2 + $0xe8] sm:$0xff]
        %v655 = vld [vmem:[#allocation2 + $0xf0] sm:$0xff]
        %v656 = vld [vmem:[#allocation2 + $0xf8] sm:$0xff]
        %s657 = scalar_lea.vmem %s210, 4
        %v658 = vld [vmem:[%s657] sm:$0xf]
        %v660 = vsel %vm315, %v593, 0
        %v663 = vsel %vm315, %v594, 0
        %v666 = vsel %vm315, %v595, 0
        %v669 = vsel %vm315, %v596, 0
        %v672 = vsel %vm315, %v597, 0
        %v675 = vsel %vm315, %v598, 0
        %v678 = vsel %vm315, %v599, 0
        %v681 = vsel %vm315, %v600, 0
        %v684 = vsel %vm315, %v601, 0
        %v687 = vsel %vm315, %v602, 0
        %v690 = vsel %vm315, %v603, 0
        %v693 = vsel %vm315, %v604, 0
        %v696 = vsel %vm315, %v605, 0
        %v699 = vsel %vm315, %v606, 0
        %v702 = vsel %vm315, %v607, 0
        %v705 = vsel %vm315, %v608, 0
        %v708 = vsel %vm315, %v609, 0
        %v711 = vsel %vm315, %v610, 0
        %v714 = vsel %vm315, %v611, 0
        %v717 = vsel %vm315, %v612, 0
        %v720 = vsel %vm315, %v613, 0
        %v723 = vsel %vm315, %v614, 0
        %v726 = vsel %vm315, %v615, 0
        %v729 = vsel %vm315, %v616, 0
        %v732 = vsel %vm315, %v617, 0
        %v735 = vsel %vm315, %v618, 0
        %v738 = vsel %vm315, %v619, 0
        %v741 = vsel %vm315, %v620, 0
        %v744 = vsel %vm315, %v621, 0
        %v747 = vsel %vm315, %v622, 0
        %v750 = vsel %vm315, %v623, 0
        %v753 = vsel %vm315, %v624, 0
        %v756 = vsel %vm412, %v658, 0
        %758 = vmatpush.msra.mxu0 0.0
        %759 = vmatpush.msra.mxu0 0.0
        %760 = vmatpush.msra.mxu0 0.0
        %761 = vmatpush.msra.mxu0 0.0
        %762 = vmatpush.msra.mxu0 0.0
        %763 = vmatpush.msra.mxu0 0.0
        %764 = vmatpush.msra.mxu0 0.0
        %765 = vmatpush.msra.mxu0 0.0
        %766 = vmatpush.msra.mxu0 0.0
        %767 = vmatpush.msra.mxu0 0.0
        %768 = vmatpush.msra.mxu0 0.0
        %769 = vmatpush.msra.mxu0 0.0
        %770 = vmatpush.msra.mxu0 0.0
        %771 = vmatpush.msra.mxu0 0.0
        %772 = vmatpush.msra.mxu0 0.0
        %773 = vmatpush.msra.mxu0 %v756
        %774 = vmatmul.f32.gmra.mxu0 %v660
        %v775 = vpop.f32.mrf.mxu0
        %v776 = vadd.f32 0.0, %v775
        %777 = vmatmul.f32.gmra.mxu0 %v663
        %v778 = vpop.f32.mrf.mxu0
        %v779 = vadd.f32 0.0, %v778
        %780 = vmatmul.f32.gmra.mxu0 %v666
        %v781 = vpop.f32.mrf.mxu0
        %v782 = vadd.f32 0.0, %v781
        %783 = vmatmul.f32.gmra.mxu0 %v669
        %v784 = vpop.f32.mrf.mxu0
        %v785 = vadd.f32 0.0, %v784
        %786 = vmatmul.f32.gmra.mxu0 %v672
        %v787 = vpop.f32.mrf.mxu0
        %v788 = vadd.f32 0.0, %v787
        %789 = vmatmul.f32.gmra.mxu0 %v675
        %v790 = vpop.f32.mrf.mxu0
        %v791 = vadd.f32 0.0, %v790
        %792 = vmatmul.f32.gmra.mxu0 %v678
        %v793 = vpop.f32.mrf.mxu0
        %v794 = vadd.f32 0.0, %v793
        %795 = vmatmul.f32.gmra.mxu0 %v681
        %v796 = vpop.f32.mrf.mxu0
        %v797 = vadd.f32 0.0, %v796
        %798 = vmatmul.f32.gmra.mxu0 %v684
        %v799 = vpop.f32.mrf.mxu0
        %v800 = vadd.f32 0.0, %v799
        %801 = vmatmul.f32.gmra.mxu0 %v687
        %v802 = vpop.f32.mrf.mxu0
        %v803 = vadd.f32 0.0, %v802
        %804 = vmatmul.f32.gmra.mxu0 %v690
        %v805 = vpop.f32.mrf.mxu0
        %v806 = vadd.f32 0.0, %v805
        %807 = vmatmul.f32.gmra.mxu0 %v693
        %v808 = vpop.f32.mrf.mxu0
        %v809 = vadd.f32 0.0, %v808
        %810 = vmatmul.f32.gmra.mxu0 %v696
        %v811 = vpop.f32.mrf.mxu0
        %v812 = vadd.f32 0.0, %v811
        %813 = vmatmul.f32.gmra.mxu0 %v699
        %v814 = vpop.f32.mrf.mxu0
        %v815 = vadd.f32 0.0, %v814
        %816 = vmatmul.f32.gmra.mxu0 %v702
        %v817 = vpop.f32.mrf.mxu0
        %v818 = vadd.f32 0.0, %v817
        %819 = vmatmul.f32.gmra.mxu0 %v705
        %v820 = vpop.f32.mrf.mxu0
        %v821 = vadd.f32 0.0, %v820
        %822 = vmatmul.f32.gmra.mxu0 %v708
        %v823 = vpop.f32.mrf.mxu0
        %v824 = vadd.f32 0.0, %v823
        %825 = vmatmul.f32.gmra.mxu0 %v711
        %v826 = vpop.f32.mrf.mxu0
        %v827 = vadd.f32 0.0, %v826
        %828 = vmatmul.f32.gmra.mxu0 %v714
        %v829 = vpop.f32.mrf.mxu0
        %v830 = vadd.f32 0.0, %v829
        %831 = vmatmul.f32.gmra.mxu0 %v717
        %v832 = vpop.f32.mrf.mxu0
        %v833 = vadd.f32 0.0, %v832
        %834 = vmatmul.f32.gmra.mxu0 %v720
        %v835 = vpop.f32.mrf.mxu0
        %v836 = vadd.f32 0.0, %v835
        %837 = vmatmul.f32.gmra.mxu0 %v723
        %v838 = vpop.f32.mrf.mxu0
        %v839 = vadd.f32 0.0, %v838
        %840 = vmatmul.f32.gmra.mxu0 %v726
        %v841 = vpop.f32.mrf.mxu0
        %v842 = vadd.f32 0.0, %v841
        %843 = vmatmul.f32.gmra.mxu0 %v729
        %v844 = vpop.f32.mrf.mxu0
        %v845 = vadd.f32 0.0, %v844
        %846 = vmatmul.f32.gmra.mxu0 %v732
        %v847 = vpop.f32.mrf.mxu0
        %v848 = vadd.f32 0.0, %v847
        %849 = vmatmul.f32.gmra.mxu0 %v735
        %v850 = vpop.f32.mrf.mxu0
        %v851 = vadd.f32 0.0, %v850
        %852 = vmatmul.f32.gmra.mxu0 %v738
        %v853 = vpop.f32.mrf.mxu0
        %v854 = vadd.f32 0.0, %v853
        %855 = vmatmul.f32.gmra.mxu0 %v741
        %v856 = vpop.f32.mrf.mxu0
        %v857 = vadd.f32 0.0, %v856
        %858 = vmatmul.f32.gmra.mxu0 %v744
        %v859 = vpop.f32.mrf.mxu0
        %v860 = vadd.f32 0.0, %v859
        %861 = vmatmul.f32.gmra.mxu0 %v747
        %v862 = vpop.f32.mrf.mxu0
        %v863 = vadd.f32 0.0, %v862
        %864 = vmatmul.f32.gmra.mxu0 %v750
        %v865 = vpop.f32.mrf.mxu0
        %v866 = vadd.f32 0.0, %v865
        %867 = vmatmul.f32.gmra.mxu0 %v753
        %v868 = vpop.f32.mrf.mxu0
        %v869 = vadd.f32 0.0, %v868
        %870 = vdwg.mxu0
        %v871 = vadd.f32 %v625, %v776
        %v872 = vadd.f32 %v626, %v779
        %v873 = vadd.f32 %v627, %v782
        %v874 = vadd.f32 %v628, %v785
        %v875 = vadd.f32 %v629, %v788
        %v876 = vadd.f32 %v630, %v791
        %v877 = vadd.f32 %v631, %v794
        %v878 = vadd.f32 %v632, %v797
        %v879 = vadd.f32 %v633, %v800
        %v880 = vadd.f32 %v634, %v803
        %v881 = vadd.f32 %v635, %v806
        %v882 = vadd.f32 %v636, %v809
        %v883 = vadd.f32 %v637, %v812
        %v884 = vadd.f32 %v638, %v815
        %v885 = vadd.f32 %v639, %v818
        %v886 = vadd.f32 %v640, %v821
        %v887 = vadd.f32 %v641, %v824
        %v888 = vadd.f32 %v642, %v827
        %v889 = vadd.f32 %v643, %v830
        %v890 = vadd.f32 %v644, %v833
        %v891 = vadd.f32 %v645, %v836
        %v892 = vadd.f32 %v646, %v839
        %v893 = vadd.f32 %v647, %v842
        %v894 = vadd.f32 %v648, %v845
        %v895 = vadd.f32 %v649, %v848
        %v896 = vadd.f32 %v650, %v851
        %v897 = vadd.f32 %v651, %v854
        %v898 = vadd.f32 %v652, %v857
        %v899 = vadd.f32 %v653, %v860
        %v900 = vadd.f32 %v654, %v863
        %v901 = vadd.f32 %v655, %v866
        %v902 = vadd.f32 %v656, %v869
        %903 = vst [vmem:[#allocation2] sm:$0xff] %v871
        %904 = vst [vmem:[#allocation2 + $0x8] sm:$0xff] %v872
        %905 = vst [vmem:[#allocation2 + $0x10] sm:$0xff] %v873
        %906 = vst [vmem:[#allocation2 + $0x18] sm:$0xff] %v874
        %907 = vst [vmem:[#allocation2 + $0x20] sm:$0xff] %v875
        %908 = vst [vmem:[#allocation2 + $0x28] sm:$0xff] %v876
        %909 = vst [vmem:[#allocation2 + $0x30] sm:$0xff] %v877
        %910 = vst [vmem:[#allocation2 + $0x38] sm:$0xff] %v878
        %911 = vst [vmem:[#allocation2 + $0x40] sm:$0xff] %v879
        %912 = vst [vmem:[#allocation2 + $0x48] sm:$0xff] %v880
        %913 = vst [vmem:[#allocation2 + $0x50] sm:$0xff] %v881
        %914 = vst [vmem:[#allocation2 + $0x58] sm:$0xff] %v882
        %915 = vst [vmem:[#allocation2 + $0x60] sm:$0xff] %v883
        %916 = vst [vmem:[#allocation2 + $0x68] sm:$0xff] %v884
        %917 = vst [vmem:[#allocation2 + $0x70] sm:$0xff] %v885
        %918 = vst [vmem:[#allocation2 + $0x78] sm:$0xff] %v886
        %919 = vst [vmem:[#allocation2 + $0x80] sm:$0xff] %v887
        %920 = vst [vmem:[#allocation2 + $0x88] sm:$0xff] %v888
        %921 = vst [vmem:[#allocation2 + $0x90] sm:$0xff] %v889
        %922 = vst [vmem:[#allocation2 + $0x98] sm:$0xff] %v890
        %923 = vst [vmem:[#allocation2 + $0xa0] sm:$0xff] %v891
        %924 = vst [vmem:[#allocation2 + $0xa8] sm:$0xff] %v892
        %925 = vst [vmem:[#allocation2 + $0xb0] sm:$0xff] %v893
        %926 = vst [vmem:[#allocation2 + $0xb8] sm:$0xff] %v894
        %927 = vst [vmem:[#allocation2 + $0xc0] sm:$0xff] %v895
        %928 = vst [vmem:[#allocation2 + $0xc8] sm:$0xff] %v896
        %929 = vst [vmem:[#allocation2 + $0xd0] sm:$0xff] %v897
        %930 = vst [vmem:[#allocation2 + $0xd8] sm:$0xff] %v898
        %931 = vst [vmem:[#allocation2 + $0xe0] sm:$0xff] %v899
        %932 = vst [vmem:[#allocation2 + $0xe8] sm:$0xff] %v900
        %933 = vst [vmem:[#allocation2 + $0xf0] sm:$0xff] %v901
        %934 = vst [vmem:[#allocation2 + $0xf8] sm:$0xff] %v902
        %v935 = vld [vmem:[%s206 + $0x2] sm:$0xff]
        %v936 = vld [vmem:[%s206 + $0xa] sm:$0xff]
        %v937 = vld [vmem:[%s206 + $0x1a] sm:$0xff]
        %v938 = vld [vmem:[%s206 + $0x22] sm:$0xff]
        %v939 = vld [vmem:[%s206 + $0x32] sm:$0xff]
        %v940 = vld [vmem:[%s206 + $0x3a] sm:$0xff]
        %v941 = vld [vmem:[%s206 + $0x4a] sm:$0xff]
        %v942 = vld [vmem:[%s206 + $0x52] sm:$0xff]
        %v943 = vld [vmem:[%s206 + $0x62] sm:$0xff]
        %v944 = vld [vmem:[%s206 + $0x6a] sm:$0xff]
        %v945 = vld [vmem:[%s206 + $0x7a] sm:$0xff]
        %v946 = vld [vmem:[%s206 + $0x82] sm:$0xff]
        %v947 = vld [vmem:[%s206 + $0x92] sm:$0xff]
        %v948 = vld [vmem:[%s206 + $0x9a] sm:$0xff]
        %v949 = vld [vmem:[%s206 + $0xaa] sm:$0xff]
        %v950 = vld [vmem:[%s206 + $0xb2] sm:$0xff]
        %v951 = vld [vmem:[%s206 + $0xc2] sm:$0xff]
        %v952 = vld [vmem:[%s206 + $0xca] sm:$0xff]
        %v953 = vld [vmem:[%s206 + $0xda] sm:$0xff]
        %v954 = vld [vmem:[%s206 + $0xe2] sm:$0xff]
        %v955 = vld [vmem:[%s206 + $0xf2] sm:$0xff]
        %v956 = vld [vmem:[%s206 + $0xfa] sm:$0xff]
        %v957 = vld [vmem:[%s206 + $0x10a] sm:$0xff]
        %v958 = vld [vmem:[%s206 + $0x112] sm:$0xff]
        %v959 = vld [vmem:[%s206 + $0x122] sm:$0xff]
        %v960 = vld [vmem:[%s206 + $0x12a] sm:$0xff]
        %v961 = vld [vmem:[%s206 + $0x13a] sm:$0xff]
        %v962 = vld [vmem:[%s206 + $0x142] sm:$0xff]
        %v963 = vld [vmem:[%s206 + $0x152] sm:$0xff]
        %v964 = vld [vmem:[%s206 + $0x15a] sm:$0xff]
        %v965 = vld [vmem:[%s206 + $0x16a] sm:$0xff]
        %v966 = vld [vmem:[%s206 + $0x172] sm:$0xff]
        %v967 = vld [vmem:[#allocation2] sm:$0xff]
        %v968 = vld [vmem:[#allocation2 + $0x8] sm:$0xff]
        %v969 = vld [vmem:[#allocation2 + $0x10] sm:$0xff]
        %v970 = vld [vmem:[#allocation2 + $0x18] sm:$0xff]
        %v971 = vld [vmem:[#allocation2 + $0x20] sm:$0xff]
        %v972 = vld [vmem:[#allocation2 + $0x28] sm:$0xff]
        %v973 = vld [vmem:[#allocation2 + $0x30] sm:$0xff]
        %v974 = vld [vmem:[#allocation2 + $0x38] sm:$0xff]
        %v975 = vld [vmem:[#allocation2 + $0x40] sm:$0xff]
        %v976 = vld [vmem:[#allocation2 + $0x48] sm:$0xff]
        %v977 = vld [vmem:[#allocation2 + $0x50] sm:$0xff]
        %v978 = vld [vmem:[#allocation2 + $0x58] sm:$0xff]
        %v979 = vld [vmem:[#allocation2 + $0x60] sm:$0xff]
        %v980 = vld [vmem:[#allocation2 + $0x68] sm:$0xff]
        %v981 = vld [vmem:[#allocation2 + $0x70] sm:$0xff]
        %v982 = vld [vmem:[#allocation2 + $0x78] sm:$0xff]
        %v983 = vld [vmem:[#allocation2 + $0x80] sm:$0xff]
        %v984 = vld [vmem:[#allocation2 + $0x88] sm:$0xff]
        %v985 = vld [vmem:[#allocation2 + $0x90] sm:$0xff]
        %v986 = vld [vmem:[#allocation2 + $0x98] sm:$0xff]
        %v987 = vld [vmem:[#allocation2 + $0xa0] sm:$0xff]
        %v988 = vld [vmem:[#allocation2 + $0xa8] sm:$0xff]
        %v989 = vld [vmem:[#allocation2 + $0xb0] sm:$0xff]
        %v990 = vld [vmem:[#allocation2 + $0xb8] sm:$0xff]
        %v991 = vld [vmem:[#allocation2 + $0xc0] sm:$0xff]
        %v992 = vld [vmem:[#allocation2 + $0xc8] sm:$0xff]
        %v993 = vld [vmem:[#allocation2 + $0xd0] sm:$0xff]
        %v994 = vld [vmem:[#allocation2 + $0xd8] sm:$0xff]
        %v995 = vld [vmem:[#allocation2 + $0xe0] sm:$0xff]
        %v996 = vld [vmem:[#allocation2 + $0xe8] sm:$0xff]
        %v997 = vld [vmem:[#allocation2 + $0xf0] sm:$0xff]
        %v998 = vld [vmem:[#allocation2 + $0xf8] sm:$0xff]
        %s999 = scalar_lea.vmem %s210, 8
        %v1000 = vld [vmem:[%s999] sm:$0xf]
        %v1002 = vsel %vm315, %v935, 0
        %v1005 = vsel %vm315, %v936, 0
        %v1008 = vsel %vm315, %v937, 0
        %v1011 = vsel %vm315, %v938, 0
        %v1014 = vsel %vm315, %v939, 0
        %v1017 = vsel %vm315, %v940, 0
        %v1020 = vsel %vm315, %v941, 0
        %v1023 = vsel %vm315, %v942, 0
        %v1026 = vsel %vm315, %v943, 0
        %v1029 = vsel %vm315, %v944, 0
        %v1032 = vsel %vm315, %v945, 0
        %v1035 = vsel %vm315, %v946, 0
        %v1038 = vsel %vm315, %v947, 0
        %v1041 = vsel %vm315, %v948, 0
        %v1044 = vsel %vm315, %v949, 0
        %v1047 = vsel %vm315, %v950, 0
        %v1050 = vsel %vm315, %v951, 0
        %v1053 = vsel %vm315, %v952, 0
        %v1056 = vsel %vm315, %v953, 0
        %v1059 = vsel %vm315, %v954, 0
        %v1062 = vsel %vm315, %v955, 0
        %v1065 = vsel %vm315, %v956, 0
        %v1068 = vsel %vm315, %v957, 0
        %v1071 = vsel %vm315, %v958, 0
        %v1074 = vsel %vm315, %v959, 0
        %v1077 = vsel %vm315, %v960, 0
        %v1080 = vsel %vm315, %v961, 0
        %v1083 = vsel %vm315, %v962, 0
        %v1086 = vsel %vm315, %v963, 0
        %v1089 = vsel %vm315, %v964, 0
        %v1092 = vsel %vm315, %v965, 0
        %v1095 = vsel %vm315, %v966, 0
        %v1098 = vsel %vm412, %v1000, 0
        %1100 = vmatpush.msra.mxu0 0.0
        %1101 = vmatpush.msra.mxu0 0.0
        %1102 = vmatpush.msra.mxu0 0.0
        %1103 = vmatpush.msra.mxu0 0.0
        %1104 = vmatpush.msra.mxu0 0.0
        %1105 = vmatpush.msra.mxu0 0.0
        %1106 = vmatpush.msra.mxu0 0.0
        %1107 = vmatpush.msra.mxu0 0.0
        %1108 = vmatpush.msra.mxu0 0.0
        %1109 = vmatpush.msra.mxu0 0.0
        %1110 = vmatpush.msra.mxu0 0.0
        %1111 = vmatpush.msra.mxu0 0.0
        %1112 = vmatpush.msra.mxu0 0.0
        %1113 = vmatpush.msra.mxu0 0.0
        %1114 = vmatpush.msra.mxu0 0.0
        %1115 = vmatpush.msra.mxu0 %v1098
        %1116 = vmatmul.f32.gmra.mxu0 %v1002
        %v1117 = vpop.f32.mrf.mxu0
        %v1118 = vadd.f32 0.0, %v1117
        %1119 = vmatmul.f32.gmra.mxu0 %v1005
        %v1120 = vpop.f32.mrf.mxu0
        %v1121 = vadd.f32 0.0, %v1120
        %1122 = vmatmul.f32.gmra.mxu0 %v1008
        %v1123 = vpop.f32.mrf.mxu0
        %v1124 = vadd.f32 0.0, %v1123
        %1125 = vmatmul.f32.gmra.mxu0 %v1011
        %v1126 = vpop.f32.mrf.mxu0
        %v1127 = vadd.f32 0.0, %v1126
        %1128 = vmatmul.f32.gmra.mxu0 %v1014
        %v1129 = vpop.f32.mrf.mxu0
        %v1130 = vadd.f32 0.0, %v1129
        %1131 = vmatmul.f32.gmra.mxu0 %v1017
        %v1132 = vpop.f32.mrf.mxu0
        %v1133 = vadd.f32 0.0, %v1132
        %1134 = vmatmul.f32.gmra.mxu0 %v1020
        %v1135 = vpop.f32.mrf.mxu0
        %v1136 = vadd.f32 0.0, %v1135
        %1137 = vmatmul.f32.gmra.mxu0 %v1023
        %v1138 = vpop.f32.mrf.mxu0
        %v1139 = vadd.f32 0.0, %v1138
        %1140 = vmatmul.f32.gmra.mxu0 %v1026
        %v1141 = vpop.f32.mrf.mxu0
        %v1142 = vadd.f32 0.0, %v1141
        %1143 = vmatmul.f32.gmra.mxu0 %v1029
        %v1144 = vpop.f32.mrf.mxu0
        %v1145 = vadd.f32 0.0, %v1144
        %1146 = vmatmul.f32.gmra.mxu0 %v1032
        %v1147 = vpop.f32.mrf.mxu0
        %v1148 = vadd.f32 0.0, %v1147
        %1149 = vmatmul.f32.gmra.mxu0 %v1035
        %v1150 = vpop.f32.mrf.mxu0
        %v1151 = vadd.f32 0.0, %v1150
        %1152 = vmatmul.f32.gmra.mxu0 %v1038
        %v1153 = vpop.f32.mrf.mxu0
        %v1154 = vadd.f32 0.0, %v1153
        %1155 = vmatmul.f32.gmra.mxu0 %v1041
        %v1156 = vpop.f32.mrf.mxu0
        %v1157 = vadd.f32 0.0, %v1156
        %1158 = vmatmul.f32.gmra.mxu0 %v1044
        %v1159 = vpop.f32.mrf.mxu0
        %v1160 = vadd.f32 0.0, %v1159
        %1161 = vmatmul.f32.gmra.mxu0 %v1047
        %v1162 = vpop.f32.mrf.mxu0
        %v1163 = vadd.f32 0.0, %v1162
        %1164 = vmatmul.f32.gmra.mxu0 %v1050
        %v1165 = vpop.f32.mrf.mxu0
        %v1166 = vadd.f32 0.0, %v1165
        %1167 = vmatmul.f32.gmra.mxu0 %v1053
        %v1168 = vpop.f32.mrf.mxu0
        %v1169 = vadd.f32 0.0, %v1168
        %1170 = vmatmul.f32.gmra.mxu0 %v1056
        %v1171 = vpop.f32.mrf.mxu0
        %v1172 = vadd.f32 0.0, %v1171
        %1173 = vmatmul.f32.gmra.mxu0 %v1059
        %v1174 = vpop.f32.mrf.mxu0
        %v1175 = vadd.f32 0.0, %v1174
        %1176 = vmatmul.f32.gmra.mxu0 %v1062
        %v1177 = vpop.f32.mrf.mxu0
        %v1178 = vadd.f32 0.0, %v1177
        %1179 = vmatmul.f32.gmra.mxu0 %v1065
        %v1180 = vpop.f32.mrf.mxu0
        %v1181 = vadd.f32 0.0, %v1180
        %1182 = vmatmul.f32.gmra.mxu0 %v1068
        %v1183 = vpop.f32.mrf.mxu0
        %v1184 = vadd.f32 0.0, %v1183
        %1185 = vmatmul.f32.gmra.mxu0 %v1071
        %v1186 = vpop.f32.mrf.mxu0
        %v1187 = vadd.f32 0.0, %v1186
        %1188 = vmatmul.f32.gmra.mxu0 %v1074
        %v1189 = vpop.f32.mrf.mxu0
        %v1190 = vadd.f32 0.0, %v1189
        %1191 = vmatmul.f32.gmra.mxu0 %v1077
        %v1192 = vpop.f32.mrf.mxu0
        %v1193 = vadd.f32 0.0, %v1192
        %1194 = vmatmul.f32.gmra.mxu0 %v1080
        %v1195 = vpop.f32.mrf.mxu0
        %v1196 = vadd.f32 0.0, %v1195
        %1197 = vmatmul.f32.gmra.mxu0 %v1083
        %v1198 = vpop.f32.mrf.mxu0
        %v1199 = vadd.f32 0.0, %v1198
        %1200 = vmatmul.f32.gmra.mxu0 %v1086
        %v1201 = vpop.f32.mrf.mxu0
        %v1202 = vadd.f32 0.0, %v1201
        %1203 = vmatmul.f32.gmra.mxu0 %v1089
        %v1204 = vpop.f32.mrf.mxu0
        %v1205 = vadd.f32 0.0, %v1204
        %1206 = vmatmul.f32.gmra.mxu0 %v1092
        %v1207 = vpop.f32.mrf.mxu0
        %v1208 = vadd.f32 0.0, %v1207
        %1209 = vmatmul.f32.gmra.mxu0 %v1095
        %v1210 = vpop.f32.mrf.mxu0
        %v1211 = vadd.f32 0.0, %v1210
        %1212 = vdwg.mxu0
        %v1213 = vadd.f32 %v967, %v1118
        %v1214 = vadd.f32 %v968, %v1121
        %v1215 = vadd.f32 %v969, %v1124
        %v1216 = vadd.f32 %v970, %v1127
        %v1217 = vadd.f32 %v971, %v1130
        %v1218 = vadd.f32 %v972, %v1133
        %v1219 = vadd.f32 %v973, %v1136
        %v1220 = vadd.f32 %v974, %v1139
        %v1221 = vadd.f32 %v975, %v1142
        %v1222 = vadd.f32 %v976, %v1145
        %v1223 = vadd.f32 %v977, %v1148
        %v1224 = vadd.f32 %v978, %v1151
        %v1225 = vadd.f32 %v979, %v1154
        %v1226 = vadd.f32 %v980, %v1157
        %v1227 = vadd.f32 %v981, %v1160
        %v1228 = vadd.f32 %v982, %v1163
        %v1229 = vadd.f32 %v983, %v1166
        %v1230 = vadd.f32 %v984, %v1169
        %v1231 = vadd.f32 %v985, %v1172
        %v1232 = vadd.f32 %v986, %v1175
        %v1233 = vadd.f32 %v987, %v1178
        %v1234 = vadd.f32 %v988, %v1181
        %v1235 = vadd.f32 %v989, %v1184
        %v1236 = vadd.f32 %v990, %v1187
        %v1237 = vadd.f32 %v991, %v1190
        %v1238 = vadd.f32 %v992, %v1193
        %v1239 = vadd.f32 %v993, %v1196
        %v1240 = vadd.f32 %v994, %v1199
        %v1241 = vadd.f32 %v995, %v1202
        %v1242 = vadd.f32 %v996, %v1205
        %v1243 = vadd.f32 %v997, %v1208
        %v1244 = vadd.f32 %v998, %v1211
        %1245 = vst [vmem:[#allocation2] sm:$0xff] %v1213
        %1246 = vst [vmem:[#allocation2 + $0x8] sm:$0xff] %v1214
        %1247 = vst [vmem:[#allocation2 + $0x10] sm:$0xff] %v1215
        %1248 = vst [vmem:[#allocation2 + $0x18] sm:$0xff] %v1216
        %1249 = vst [vmem:[#allocation2 + $0x20] sm:$0xff] %v1217
        %1250 = vst [vmem:[#allocation2 + $0x28] sm:$0xff] %v1218
        %1251 = vst [vmem:[#allocation2 + $0x30] sm:$0xff] %v1219
        %1252 = vst [vmem:[#allocation2 + $0x38] sm:$0xff] %v1220
        %1253 = vst [vmem:[#allocation2 + $0x40] sm:$0xff] %v1221
        %1254 = vst [vmem:[#allocation2 + $0x48] sm:$0xff] %v1222
        %1255 = vst [vmem:[#allocation2 + $0x50] sm:$0xff] %v1223
        %1256 = vst [vmem:[#allocation2 + $0x58] sm:$0xff] %v1224
        %1257 = vst [vmem:[#allocation2 + $0x60] sm:$0xff] %v1225
        %1258 = vst [vmem:[#allocation2 + $0x68] sm:$0xff] %v1226
        %1259 = vst [vmem:[#allocation2 + $0x70] sm:$0xff] %v1227
        %1260 = vst [vmem:[#allocation2 + $0x78] sm:$0xff] %v1228
        %1261 = vst [vmem:[#allocation2 + $0x80] sm:$0xff] %v1229
        %1262 = vst [vmem:[#allocation2 + $0x88] sm:$0xff] %v1230
        %1263 = vst [vmem:[#allocation2 + $0x90] sm:$0xff] %v1231
        %1264 = vst [vmem:[#allocation2 + $0x98] sm:$0xff] %v1232
        %1265 = vst [vmem:[#allocation2 + $0xa0] sm:$0xff] %v1233
        %1266 = vst [vmem:[#allocation2 + $0xa8] sm:$0xff] %v1234
        %1267 = vst [vmem:[#allocation2 + $0xb0] sm:$0xff] %v1235
        %1268 = vst [vmem:[#allocation2 + $0xb8] sm:$0xff] %v1236
        %1269 = vst [vmem:[#allocation2 + $0xc0] sm:$0xff] %v1237
        %1270 = vst [vmem:[#allocation2 + $0xc8] sm:$0xff] %v1238
        %1271 = vst [vmem:[#allocation2 + $0xd0] sm:$0xff] %v1239
        %1272 = vst [vmem:[#allocation2 + $0xd8] sm:$0xff] %v1240
        %1273 = vst [vmem:[#allocation2 + $0xe0] sm:$0xff] %v1241
        %1274 = vst [vmem:[#allocation2 + $0xe8] sm:$0xff] %v1242
        %1275 = vst [vmem:[#allocation2 + $0xf0] sm:$0xff] %v1243
        %1276 = vst [vmem:[#allocation2 + $0xf8] sm:$0xff] %v1244
        %s1277 = scalar_lea.vmem %s206, 24
        %v1278 = vld [vmem:[%s1277] sm:$0xff]
        %v1279 = vld [vmem:[%s1277 + $0x8] sm:$0xff]
        %v1280 = vld [vmem:[%s1277 + $0x18] sm:$0xff]
        %v1281 = vld [vmem:[%s1277 + $0x20] sm:$0xff]
        %v1282 = vld [vmem:[%s1277 + $0x30] sm:$0xff]
        %v1283 = vld [vmem:[%s1277 + $0x38] sm:$0xff]
        %v1284 = vld [vmem:[%s1277 + $0x48] sm:$0xff]
        %v1285 = vld [vmem:[%s1277 + $0x50] sm:$0xff]
        %v1286 = vld [vmem:[%s1277 + $0x60] sm:$0xff]
        %v1287 = vld [vmem:[%s1277 + $0x68] sm:$0xff]
        %v1288 = vld [vmem:[%s1277 + $0x78] sm:$0xff]
        %v1289 = vld [vmem:[%s1277 + $0x80] sm:$0xff]
        %v1290 = vld [vmem:[%s1277 + $0x90] sm:$0xff]
        %v1291 = vld [vmem:[%s1277 + $0x98] sm:$0xff]
        %v1292 = vld [vmem:[%s1277 + $0xa8] sm:$0xff]
        %v1293 = vld [vmem:[%s1277 + $0xb0] sm:$0xff]
        %v1294 = vld [vmem:[%s1277 + $0xc0] sm:$0xff]
        %v1295 = vld [vmem:[%s1277 + $0xc8] sm:$0xff]
        %v1296 = vld [vmem:[%s1277 + $0xd8] sm:$0xff]
        %v1297 = vld [vmem:[%s1277 + $0xe0] sm:$0xff]
        %v1298 = vld [vmem:[%s1277 + $0xf0] sm:$0xff]
        %v1299 = vld [vmem:[%s1277 + $0xf8] sm:$0xff]
        %v1300 = vld [vmem:[%s1277 + $0x108] sm:$0xff]
        %v1301 = vld [vmem:[%s1277 + $0x110] sm:$0xff]
        %v1302 = vld [vmem:[%s1277 + $0x120] sm:$0xff]
        %v1303 = vld [vmem:[%s1277 + $0x128] sm:$0xff]
        %v1304 = vld [vmem:[%s1277 + $0x138] sm:$0xff]
        %v1305 = vld [vmem:[%s1277 + $0x140] sm:$0xff]
        %v1306 = vld [vmem:[%s1277 + $0x150] sm:$0xff]
        %v1307 = vld [vmem:[%s1277 + $0x158] sm:$0xff]
        %v1308 = vld [vmem:[%s1277 + $0x168] sm:$0xff]
        %v1309 = vld [vmem:[%s1277 + $0x170] sm:$0xff]
        %v1310 = vld [vmem:[#allocation2] sm:$0xff]
        %v1311 = vld [vmem:[#allocation2 + $0x8] sm:$0xff]
        %v1312 = vld [vmem:[#allocation2 + $0x10] sm:$0xff]
        %v1313 = vld [vmem:[#allocation2 + $0x18] sm:$0xff]
        %v1314 = vld [vmem:[#allocation2 + $0x20] sm:$0xff]
        %v1315 = vld [vmem:[#allocation2 + $0x28] sm:$0xff]
        %v1316 = vld [vmem:[#allocation2 + $0x30] sm:$0xff]
        %v1317 = vld [vmem:[#allocation2 + $0x38] sm:$0xff]
        %v1318 = vld [vmem:[#allocation2 + $0x40] sm:$0xff]
        %v1319 = vld [vmem:[#allocation2 + $0x48] sm:$0xff]
        %v1320 = vld [vmem:[#allocation2 + $0x50] sm:$0xff]
        %v1321 = vld [vmem:[#allocation2 + $0x58] sm:$0xff]
        %v1322 = vld [vmem:[#allocation2 + $0x60] sm:$0xff]
        %v1323 = vld [vmem:[#allocation2 + $0x68] sm:$0xff]
        %v1324 = vld [vmem:[#allocation2 + $0x70] sm:$0xff]
        %v1325 = vld [vmem:[#allocation2 + $0x78] sm:$0xff]
        %v1326 = vld [vmem:[#allocation2 + $0x80] sm:$0xff]
        %v1327 = vld [vmem:[#allocation2 + $0x88] sm:$0xff]
        %v1328 = vld [vmem:[#allocation2 + $0x90] sm:$0xff]
        %v1329 = vld [vmem:[#allocation2 + $0x98] sm:$0xff]
        %v1330 = vld [vmem:[#allocation2 + $0xa0] sm:$0xff]
        %v1331 = vld [vmem:[#allocation2 + $0xa8] sm:$0xff]
        %v1332 = vld [vmem:[#allocation2 + $0xb0] sm:$0xff]
        %v1333 = vld [vmem:[#allocation2 + $0xb8] sm:$0xff]
        %v1334 = vld [vmem:[#allocation2 + $0xc0] sm:$0xff]
        %v1335 = vld [vmem:[#allocation2 + $0xc8] sm:$0xff]
        %v1336 = vld [vmem:[#allocation2 + $0xd0] sm:$0xff]
        %v1337 = vld [vmem:[#allocation2 + $0xd8] sm:$0xff]
        %v1338 = vld [vmem:[#allocation2 + $0xe0] sm:$0xff]
        %v1339 = vld [vmem:[#allocation2 + $0xe8] sm:$0xff]
        %v1340 = vld [vmem:[#allocation2 + $0xf0] sm:$0xff]
        %v1341 = vld [vmem:[#allocation2 + $0xf8] sm:$0xff]
        %s1342 = scalar_lea.vmem %s210, 12
        %v1343 = vld [vmem:[%s1342] sm:$0xf]
        %v1345 = vsel %vm315, %v1278, 0
        %v1348 = vsel %vm315, %v1279, 0
        %v1351 = vsel %vm315, %v1280, 0
        %v1354 = vsel %vm315, %v1281, 0
        %v1357 = vsel %vm315, %v1282, 0
        %v1360 = vsel %vm315, %v1283, 0
        %v1363 = vsel %vm315, %v1284, 0
        %v1366 = vsel %vm315, %v1285, 0
        %v1369 = vsel %vm315, %v1286, 0
        %v1372 = vsel %vm315, %v1287, 0
        %v1375 = vsel %vm315, %v1288, 0
        %v1378 = vsel %vm315, %v1289, 0
        %v1381 = vsel %vm315, %v1290, 0
        %v1384 = vsel %vm315, %v1291, 0
        %v1387 = vsel %vm315, %v1292, 0
        %v1390 = vsel %vm315, %v1293, 0
        %v1393 = vsel %vm315, %v1294, 0
        %v1396 = vsel %vm315, %v1295, 0
        %v1399 = vsel %vm315, %v1296, 0
        %v1402 = vsel %vm315, %v1297, 0
        %v1405 = vsel %vm315, %v1298, 0
        %v1408 = vsel %vm315, %v1299, 0
        %v1411 = vsel %vm315, %v1300, 0
        %v1414 = vsel %vm315, %v1301, 0
        %v1417 = vsel %vm315, %v1302, 0
        %v1420 = vsel %vm315, %v1303, 0
        %v1423 = vsel %vm315, %v1304, 0
        %v1426 = vsel %vm315, %v1305, 0
        %v1429 = vsel %vm315, %v1306, 0
        %v1432 = vsel %vm315, %v1307, 0
        %v1435 = vsel %vm315, %v1308, 0
        %v1438 = vsel %vm315, %v1309, 0
        %v1441 = vsel %vm412, %v1343, 0
        %1443 = vmatpush.msra.mxu0 0.0
        %1444 = vmatpush.msra.mxu0 0.0
        %1445 = vmatpush.msra.mxu0 0.0
        %1446 = vmatpush.msra.mxu0 0.0
        %1447 = vmatpush.msra.mxu0 0.0
        %1448 = vmatpush.msra.mxu0 0.0
        %1449 = vmatpush.msra.mxu0 0.0
        %1450 = vmatpush.msra.mxu0 0.0
        %1451 = vmatpush.msra.mxu0 0.0
        %1452 = vmatpush.msra.mxu0 0.0
        %1453 = vmatpush.msra.mxu0 0.0
        %1454 = vmatpush.msra.mxu0 0.0
        %1455 = vmatpush.msra.mxu0 0.0
        %1456 = vmatpush.msra.mxu0 0.0
        %1457 = vmatpush.msra.mxu0 0.0
        %1458 = vmatpush.msra.mxu0 %v1441
        %1459 = vmatmul.f32.gmra.mxu0 %v1345
        %v1460 = vpop.f32.mrf.mxu0
        %v1461 = vadd.f32 0.0, %v1460
        %1462 = vmatmul.f32.gmra.mxu0 %v1348
        %v1463 = vpop.f32.mrf.mxu0
        %v1464 = vadd.f32 0.0, %v1463
        %1465 = vmatmul.f32.gmra.mxu0 %v1351
        %v1466 = vpop.f32.mrf.mxu0
        %v1467 = vadd.f32 0.0, %v1466
        %1468 = vmatmul.f32.gmra.mxu0 %v1354
        %v1469 = vpop.f32.mrf.mxu0
        %v1470 = vadd.f32 0.0, %v1469
        %1471 = vmatmul.f32.gmra.mxu0 %v1357
        %v1472 = vpop.f32.mrf.mxu0
        %v1473 = vadd.f32 0.0, %v1472
        %1474 = vmatmul.f32.gmra.mxu0 %v1360
        %v1475 = vpop.f32.mrf.mxu0
        %v1476 = vadd.f32 0.0, %v1475
        %1477 = vmatmul.f32.gmra.mxu0 %v1363
        %v1478 = vpop.f32.mrf.mxu0
        %v1479 = vadd.f32 0.0, %v1478
        %1480 = vmatmul.f32.gmra.mxu0 %v1366
        %v1481 = vpop.f32.mrf.mxu0
        %v1482 = vadd.f32 0.0, %v1481
        %1483 = vmatmul.f32.gmra.mxu0 %v1369
        %v1484 = vpop.f32.mrf.mxu0
        %v1485 = vadd.f32 0.0, %v1484
        %1486 = vmatmul.f32.gmra.mxu0 %v1372
        %v1487 = vpop.f32.mrf.mxu0
        %v1488 = vadd.f32 0.0, %v1487
        %1489 = vmatmul.f32.gmra.mxu0 %v1375
        %v1490 = vpop.f32.mrf.mxu0
        %v1491 = vadd.f32 0.0, %v1490
        %1492 = vmatmul.f32.gmra.mxu0 %v1378
        %v1493 = vpop.f32.mrf.mxu0
        %v1494 = vadd.f32 0.0, %v1493
        %1495 = vmatmul.f32.gmra.mxu0 %v1381
        %v1496 = vpop.f32.mrf.mxu0
        %v1497 = vadd.f32 0.0, %v1496
        %1498 = vmatmul.f32.gmra.mxu0 %v1384
        %v1499 = vpop.f32.mrf.mxu0
        %v1500 = vadd.f32 0.0, %v1499
        %1501 = vmatmul.f32.gmra.mxu0 %v1387
        %v1502 = vpop.f32.mrf.mxu0
        %v1503 = vadd.f32 0.0, %v1502
        %1504 = vmatmul.f32.gmra.mxu0 %v1390
        %v1505 = vpop.f32.mrf.mxu0
        %v1506 = vadd.f32 0.0, %v1505
        %1507 = vmatmul.f32.gmra.mxu0 %v1393
        %v1508 = vpop.f32.mrf.mxu0
        %v1509 = vadd.f32 0.0, %v1508
        %1510 = vmatmul.f32.gmra.mxu0 %v1396
        %v1511 = vpop.f32.mrf.mxu0
        %v1512 = vadd.f32 0.0, %v1511
        %1513 = vmatmul.f32.gmra.mxu0 %v1399
        %v1514 = vpop.f32.mrf.mxu0
        %v1515 = vadd.f32 0.0, %v1514
        %1516 = vmatmul.f32.gmra.mxu0 %v1402
        %v1517 = vpop.f32.mrf.mxu0
        %v1518 = vadd.f32 0.0, %v1517
        %1519 = vmatmul.f32.gmra.mxu0 %v1405
        %v1520 = vpop.f32.mrf.mxu0
        %v1521 = vadd.f32 0.0, %v1520
        %1522 = vmatmul.f32.gmra.mxu0 %v1408
        %v1523 = vpop.f32.mrf.mxu0
        %v1524 = vadd.f32 0.0, %v1523
        %1525 = vmatmul.f32.gmra.mxu0 %v1411
        %v1526 = vpop.f32.mrf.mxu0
        %v1527 = vadd.f32 0.0, %v1526
        %1528 = vmatmul.f32.gmra.mxu0 %v1414
        %v1529 = vpop.f32.mrf.mxu0
        %v1530 = vadd.f32 0.0, %v1529
        %1531 = vmatmul.f32.gmra.mxu0 %v1417
        %v1532 = vpop.f32.mrf.mxu0
        %v1533 = vadd.f32 0.0, %v1532
        %1534 = vmatmul.f32.gmra.mxu0 %v1420
        %v1535 = vpop.f32.mrf.mxu0
        %v1536 = vadd.f32 0.0, %v1535
        %1537 = vmatmul.f32.gmra.mxu0 %v1423
        %v1538 = vpop.f32.mrf.mxu0
        %v1539 = vadd.f32 0.0, %v1538
        %1540 = vmatmul.f32.gmra.mxu0 %v1426
        %v1541 = vpop.f32.mrf.mxu0
        %v1542 = vadd.f32 0.0, %v1541
        %1543 = vmatmul.f32.gmra.mxu0 %v1429
        %v1544 = vpop.f32.mrf.mxu0
        %v1545 = vadd.f32 0.0, %v1544
        %1546 = vmatmul.f32.gmra.mxu0 %v1432
        %v1547 = vpop.f32.mrf.mxu0
        %v1548 = vadd.f32 0.0, %v1547
        %1549 = vmatmul.f32.gmra.mxu0 %v1435
        %v1550 = vpop.f32.mrf.mxu0
        %v1551 = vadd.f32 0.0, %v1550
        %1552 = vmatmul.f32.gmra.mxu0 %v1438
        %v1553 = vpop.f32.mrf.mxu0
        %v1554 = vadd.f32 0.0, %v1553
        %1555 = vdwg.mxu0
        %v1556 = vadd.f32 %v1310, %v1461
        %v1557 = vadd.f32 %v1311, %v1464
        %v1558 = vadd.f32 %v1312, %v1467
        %v1559 = vadd.f32 %v1313, %v1470
        %v1560 = vadd.f32 %v1314, %v1473
        %v1561 = vadd.f32 %v1315, %v1476
        %v1562 = vadd.f32 %v1316, %v1479
        %v1563 = vadd.f32 %v1317, %v1482
        %v1564 = vadd.f32 %v1318, %v1485
        %v1565 = vadd.f32 %v1319, %v1488
        %v1566 = vadd.f32 %v1320, %v1491
        %v1567 = vadd.f32 %v1321, %v1494
        %v1568 = vadd.f32 %v1322, %v1497
        %v1569 = vadd.f32 %v1323, %v1500
        %v1570 = vadd.f32 %v1324, %v1503
        %v1571 = vadd.f32 %v1325, %v1506
        %v1572 = vadd.f32 %v1326, %v1509
        %v1573 = vadd.f32 %v1327, %v1512
        %v1574 = vadd.f32 %v1328, %v1515
        %v1575 = vadd.f32 %v1329, %v1518
        %v1576 = vadd.f32 %v1330, %v1521
        %v1577 = vadd.f32 %v1331, %v1524
        %v1578 = vadd.f32 %v1332, %v1527
        %v1579 = vadd.f32 %v1333, %v1530
        %v1580 = vadd.f32 %v1334, %v1533
        %v1581 = vadd.f32 %v1335, %v1536
        %v1582 = vadd.f32 %v1336, %v1539
        %v1583 = vadd.f32 %v1337, %v1542
        %v1584 = vadd.f32 %v1338, %v1545
        %v1585 = vadd.f32 %v1339, %v1548
        %v1586 = vadd.f32 %v1340, %v1551
        %v1587 = vadd.f32 %v1341, %v1554
        %1588 = vst [vmem:[#allocation2] sm:$0xff] %v1556
        %1589 = vst [vmem:[#allocation2 + $0x8] sm:$0xff] %v1557
        %1590 = vst [vmem:[#allocation2 + $0x10] sm:$0xff] %v1558
        %1591 = vst [vmem:[#allocation2 + $0x18] sm:$0xff] %v1559
        %1592 = vst [vmem:[#allocation2 + $0x20] sm:$0xff] %v1560
        %1593 = vst [vmem:[#allocation2 + $0x28] sm:$0xff] %v1561
        %1594 = vst [vmem:[#allocation2 + $0x30] sm:$0xff] %v1562
        %1595 = vst [vmem:[#allocation2 + $0x38] sm:$0xff] %v1563
        %1596 = vst [vmem:[#allocation2 + $0x40] sm:$0xff] %v1564
        %1597 = vst [vmem:[#allocation2 + $0x48] sm:$0xff] %v1565
        %1598 = vst [vmem:[#allocation2 + $0x50] sm:$0xff] %v1566
        %1599 = vst [vmem:[#allocation2 + $0x58] sm:$0xff] %v1567
        %1600 = vst [vmem:[#allocation2 + $0x60] sm:$0xff] %v1568
        %1601 = vst [vmem:[#allocation2 + $0x68] sm:$0xff] %v1569
        %1602 = vst [vmem:[#allocation2 + $0x70] sm:$0xff] %v1570
        %1603 = vst [vmem:[#allocation2 + $0x78] sm:$0xff] %v1571
        %1604 = vst [vmem:[#allocation2 + $0x80] sm:$0xff] %v1572
        %1605 = vst [vmem:[#allocation2 + $0x88] sm:$0xff] %v1573
        %1606 = vst [vmem:[#allocation2 + $0x90] sm:$0xff] %v1574
        %1607 = vst [vmem:[#allocation2 + $0x98] sm:$0xff] %v1575
        %1608 = vst [vmem:[#allocation2 + $0xa0] sm:$0xff] %v1576
        %1609 = vst [vmem:[#allocation2 + $0xa8] sm:$0xff] %v1577
        %1610 = vst [vmem:[#allocation2 + $0xb0] sm:$0xff] %v1578
        %1611 = vst [vmem:[#allocation2 + $0xb8] sm:$0xff] %v1579
        %1612 = vst [vmem:[#allocation2 + $0xc0] sm:$0xff] %v1580
        %1613 = vst [vmem:[#allocation2 + $0xc8] sm:$0xff] %v1581
        %1614 = vst [vmem:[#allocation2 + $0xd0] sm:$0xff] %v1582
        %1615 = vst [vmem:[#allocation2 + $0xd8] sm:$0xff] %v1583
        %1616 = vst [vmem:[#allocation2 + $0xe0] sm:$0xff] %v1584
        %1617 = vst [vmem:[#allocation2 + $0xe8] sm:$0xff] %v1585
        %1618 = vst [vmem:[#allocation2 + $0xf0] sm:$0xff] %v1586
        %1619 = vst [vmem:[#allocation2 + $0xf8] sm:$0xff] %v1587
        %v1620 = vld [vmem:[%s1277 + $0x1] sm:$0xff]
        %v1621 = vld [vmem:[%s1277 + $0x9] sm:$0xff]
        %v1622 = vld [vmem:[%s1277 + $0x19] sm:$0xff]
        %v1623 = vld [vmem:[%s1277 + $0x21] sm:$0xff]
        %v1624 = vld [vmem:[%s1277 + $0x31] sm:$0xff]
        %v1625 = vld [vmem:[%s1277 + $0x39] sm:$0xff]
        %v1626 = vld [vmem:[%s1277 + $0x49] sm:$0xff]
        %v1627 = vld [vmem:[%s1277 + $0x51] sm:$0xff]
        %v1628 = vld [vmem:[%s1277 + $0x61] sm:$0xff]
        %v1629 = vld [vmem:[%s1277 + $0x69] sm:$0xff]
        %v1630 = vld [vmem:[%s1277 + $0x79] sm:$0xff]
        %v1631 = vld [vmem:[%s1277 + $0x81] sm:$0xff]
        %v1632 = vld [vmem:[%s1277 + $0x91] sm:$0xff]
        %v1633 = vld [vmem:[%s1277 + $0x99] sm:$0xff]
        %v1634 = vld [vmem:[%s1277 + $0xa9] sm:$0xff]
        %v1635 = vld [vmem:[%s1277 + $0xb1] sm:$0xff]
        %v1636 = vld [vmem:[%s1277 + $0xc1] sm:$0xff]
        %v1637 = vld [vmem:[%s1277 + $0xc9] sm:$0xff]
        %v1638 = vld [vmem:[%s1277 + $0xd9] sm:$0xff]
        %v1639 = vld [vmem:[%s1277 + $0xe1] sm:$0xff]
        %v1640 = vld [vmem:[%s1277 + $0xf1] sm:$0xff]
        %v1641 = vld [vmem:[%s1277 + $0xf9] sm:$0xff]
        %v1642 = vld [vmem:[%s1277 + $0x109] sm:$0xff]
        %v1643 = vld [vmem:[%s1277 + $0x111] sm:$0xff]
        %v1644 = vld [vmem:[%s1277 + $0x121] sm:$0xff]
        %v1645 = vld [vmem:[%s1277 + $0x129] sm:$0xff]
        %v1646 = vld [vmem:[%s1277 + $0x139] sm:$0xff]
        %v1647 = vld [vmem:[%s1277 + $0x141] sm:$0xff]
        %v1648 = vld [vmem:[%s1277 + $0x151] sm:$0xff]
        %v1649 = vld [vmem:[%s1277 + $0x159] sm:$0xff]
        %v1650 = vld [vmem:[%s1277 + $0x169] sm:$0xff]
        %v1651 = vld [vmem:[%s1277 + $0x171] sm:$0xff]
        %v1652 = vld [vmem:[#allocation2] sm:$0xff]
        %v1653 = vld [vmem:[#allocation2 + $0x8] sm:$0xff]
        %v1654 = vld [vmem:[#allocation2 + $0x10] sm:$0xff]
        %v1655 = vld [vmem:[#allocation2 + $0x18] sm:$0xff]
        %v1656 = vld [vmem:[#allocation2 + $0x20] sm:$0xff]
        %v1657 = vld [vmem:[#allocation2 + $0x28] sm:$0xff]
        %v1658 = vld [vmem:[#allocation2 + $0x30] sm:$0xff]
        %v1659 = vld [vmem:[#allocation2 + $0x38] sm:$0xff]
        %v1660 = vld [vmem:[#allocation2 + $0x40] sm:$0xff]
        %v1661 = vld [vmem:[#allocation2 + $0x48] sm:$0xff]
        %v1662 = vld [vmem:[#allocation2 + $0x50] sm:$0xff]
        %v1663 = vld [vmem:[#allocation2 + $0x58] sm:$0xff]
        %v1664 = vld [vmem:[#allocation2 + $0x60] sm:$0xff]
        %v1665 = vld [vmem:[#allocation2 + $0x68] sm:$0xff]
        %v1666 = vld [vmem:[#allocation2 + $0x70] sm:$0xff]
        %v1667 = vld [vmem:[#allocation2 + $0x78] sm:$0xff]
        %v1668 = vld [vmem:[#allocation2 + $0x80] sm:$0xff]
        %v1669 = vld [vmem:[#allocation2 + $0x88] sm:$0xff]
        %v1670 = vld [vmem:[#allocation2 + $0x90] sm:$0xff]
        %v1671 = vld [vmem:[#allocation2 + $0x98] sm:$0xff]
        %v1672 = vld [vmem:[#allocation2 + $0xa0] sm:$0xff]
        %v1673 = vld [vmem:[#allocation2 + $0xa8] sm:$0xff]
        %v1674 = vld [vmem:[#allocation2 + $0xb0] sm:$0xff]
        %v1675 = vld [vmem:[#allocation2 + $0xb8] sm:$0xff]
        %v1676 = vld [vmem:[#allocation2 + $0xc0] sm:$0xff]
        %v1677 = vld [vmem:[#allocation2 + $0xc8] sm:$0xff]
        %v1678 = vld [vmem:[#allocation2 + $0xd0] sm:$0xff]
        %v1679 = vld [vmem:[#allocation2 + $0xd8] sm:$0xff]
        %v1680 = vld [vmem:[#allocation2 + $0xe0] sm:$0xff]
        %v1681 = vld [vmem:[#allocation2 + $0xe8] sm:$0xff]
        %v1682 = vld [vmem:[#allocation2 + $0xf0] sm:$0xff]
        %v1683 = vld [vmem:[#allocation2 + $0xf8] sm:$0xff]
        %s1684 = scalar_lea.vmem %s210, 16
        %v1685 = vld [vmem:[%s1684] sm:$0xf]
        %v1687 = vsel %vm315, %v1620, 0
        %v1690 = vsel %vm315, %v1621, 0
        %v1693 = vsel %vm315, %v1622, 0
        %v1696 = vsel %vm315, %v1623, 0
        %v1699 = vsel %vm315, %v1624, 0
        %v1702 = vsel %vm315, %v1625, 0
        %v1705 = vsel %vm315, %v1626, 0
        %v1708 = vsel %vm315, %v1627, 0
        %v1711 = vsel %vm315, %v1628, 0
        %v1714 = vsel %vm315, %v1629, 0
        %v1717 = vsel %vm315, %v1630, 0
        %v1720 = vsel %vm315, %v1631, 0
        %v1723 = vsel %vm315, %v1632, 0
        %v1726 = vsel %vm315, %v1633, 0
        %v1729 = vsel %vm315, %v1634, 0
        %v1732 = vsel %vm315, %v1635, 0
        %v1735 = vsel %vm315, %v1636, 0
        %v1738 = vsel %vm315, %v1637, 0
        %v1741 = vsel %vm315, %v1638, 0
        %v1744 = vsel %vm315, %v1639, 0
        %v1747 = vsel %vm315, %v1640, 0
        %v1750 = vsel %vm315, %v1641, 0
        %v1753 = vsel %vm315, %v1642, 0
        %v1756 = vsel %vm315, %v1643, 0
        %v1759 = vsel %vm315, %v1644, 0
        %v1762 = vsel %vm315, %v1645, 0
        %v1765 = vsel %vm315, %v1646, 0
        %v1768 = vsel %vm315, %v1647, 0
        %v1771 = vsel %vm315, %v1648, 0
        %v1774 = vsel %vm315, %v1649, 0
        %v1777 = vsel %vm315, %v1650, 0
        %v1780 = vsel %vm315, %v1651, 0
        %v1783 = vsel %vm412, %v1685, 0
        %1785 = vmatpush.msra.mxu0 0.0
        %1786 = vmatpush.msra.mxu0 0.0
        %1787 = vmatpush.msra.mxu0 0.0
        %1788 = vmatpush.msra.mxu0 0.0
        %1789 = vmatpush.msra.mxu0 0.0
        %1790 = vmatpush.msra.mxu0 0.0
        %1791 = vmatpush.msra.mxu0 0.0
        %1792 = vmatpush.msra.mxu0 0.0
        %1793 = vmatpush.msra.mxu0 0.0
        %1794 = vmatpush.msra.mxu0 0.0
        %1795 = vmatpush.msra.mxu0 0.0
        %1796 = vmatpush.msra.mxu0 0.0
        %1797 = vmatpush.msra.mxu0 0.0
        %1798 = vmatpush.msra.mxu0 0.0
        %1799 = vmatpush.msra.mxu0 0.0
        %1800 = vmatpush.msra.mxu0 %v1783
        %1801 = vmatmul.f32.gmra.mxu0 %v1687
        %v1802 = vpop.f32.mrf.mxu0
        %v1803 = vadd.f32 0.0, %v1802
        %1804 = vmatmul.f32.gmra.mxu0 %v1690
        %v1805 = vpop.f32.mrf.mxu0
        %v1806 = vadd.f32 0.0, %v1805
        %1807 = vmatmul.f32.gmra.mxu0 %v1693
        %v1808 = vpop.f32.mrf.mxu0
        %v1809 = vadd.f32 0.0, %v1808
        %1810 = vmatmul.f32.gmra.mxu0 %v1696
        %v1811 = vpop.f32.mrf.mxu0
        %v1812 = vadd.f32 0.0, %v1811
        %1813 = vmatmul.f32.gmra.mxu0 %v1699
        %v1814 = vpop.f32.mrf.mxu0
        %v1815 = vadd.f32 0.0, %v1814
        %1816 = vmatmul.f32.gmra.mxu0 %v1702
        %v1817 = vpop.f32.mrf.mxu0
        %v1818 = vadd.f32 0.0, %v1817
        %1819 = vmatmul.f32.gmra.mxu0 %v1705
        %v1820 = vpop.f32.mrf.mxu0
        %v1821 = vadd.f32 0.0, %v1820
        %1822 = vmatmul.f32.gmra.mxu0 %v1708
        %v1823 = vpop.f32.mrf.mxu0
        %v1824 = vadd.f32 0.0, %v1823
        %1825 = vmatmul.f32.gmra.mxu0 %v1711
        %v1826 = vpop.f32.mrf.mxu0
        %v1827 = vadd.f32 0.0, %v1826
        %1828 = vmatmul.f32.gmra.mxu0 %v1714
        %v1829 = vpop.f32.mrf.mxu0
        %v1830 = vadd.f32 0.0, %v1829
        %1831 = vmatmul.f32.gmra.mxu0 %v1717
        %v1832 = vpop.f32.mrf.mxu0
        %v1833 = vadd.f32 0.0, %v1832
        %1834 = vmatmul.f32.gmra.mxu0 %v1720
        %v1835 = vpop.f32.mrf.mxu0
        %v1836 = vadd.f32 0.0, %v1835
        %1837 = vmatmul.f32.gmra.mxu0 %v1723
        %v1838 = vpop.f32.mrf.mxu0
        %v1839 = vadd.f32 0.0, %v1838
        %1840 = vmatmul.f32.gmra.mxu0 %v1726
        %v1841 = vpop.f32.mrf.mxu0
        %v1842 = vadd.f32 0.0, %v1841
        %1843 = vmatmul.f32.gmra.mxu0 %v1729
        %v1844 = vpop.f32.mrf.mxu0
        %v1845 = vadd.f32 0.0, %v1844
        %1846 = vmatmul.f32.gmra.mxu0 %v1732
        %v1847 = vpop.f32.mrf.mxu0
        %v1848 = vadd.f32 0.0, %v1847
        %1849 = vmatmul.f32.gmra.mxu0 %v1735
        %v1850 = vpop.f32.mrf.mxu0
        %v1851 = vadd.f32 0.0, %v1850
        %1852 = vmatmul.f32.gmra.mxu0 %v1738
        %v1853 = vpop.f32.mrf.mxu0
        %v1854 = vadd.f32 0.0, %v1853
        %1855 = vmatmul.f32.gmra.mxu0 %v1741
        %v1856 = vpop.f32.mrf.mxu0
        %v1857 = vadd.f32 0.0, %v1856
        %1858 = vmatmul.f32.gmra.mxu0 %v1744
        %v1859 = vpop.f32.mrf.mxu0
        %v1860 = vadd.f32 0.0, %v1859
        %1861 = vmatmul.f32.gmra.mxu0 %v1747
        %v1862 = vpop.f32.mrf.mxu0
        %v1863 = vadd.f32 0.0, %v1862
        %1864 = vmatmul.f32.gmra.mxu0 %v1750
        %v1865 = vpop.f32.mrf.mxu0
        %v1866 = vadd.f32 0.0, %v1865
        %1867 = vmatmul.f32.gmra.mxu0 %v1753
        %v1868 = vpop.f32.mrf.mxu0
        %v1869 = vadd.f32 0.0, %v1868
        %1870 = vmatmul.f32.gmra.mxu0 %v1756
        %v1871 = vpop.f32.mrf.mxu0
        %v1872 = vadd.f32 0.0, %v1871
        %1873 = vmatmul.f32.gmra.mxu0 %v1759
        %v1874 = vpop.f32.mrf.mxu0
        %v1875 = vadd.f32 0.0, %v1874
        %1876 = vmatmul.f32.gmra.mxu0 %v1762
        %v1877 = vpop.f32.mrf.mxu0
        %v1878 = vadd.f32 0.0, %v1877
        %1879 = vmatmul.f32.gmra.mxu0 %v1765
        %v1880 = vpop.f32.mrf.mxu0
        %v1881 = vadd.f32 0.0, %v1880
        %1882 = vmatmul.f32.gmra.mxu0 %v1768
        %v1883 = vpop.f32.mrf.mxu0
        %v1884 = vadd.f32 0.0, %v1883
        %1885 = vmatmul.f32.gmra.mxu0 %v1771
        %v1886 = vpop.f32.mrf.mxu0
        %v1887 = vadd.f32 0.0, %v1886
        %1888 = vmatmul.f32.gmra.mxu0 %v1774
        %v1889 = vpop.f32.mrf.mxu0
        %v1890 = vadd.f32 0.0, %v1889
        %1891 = vmatmul.f32.gmra.mxu0 %v1777
        %v1892 = vpop.f32.mrf.mxu0
        %v1893 = vadd.f32 0.0, %v1892
        %1894 = vmatmul.f32.gmra.mxu0 %v1780
        %v1895 = vpop.f32.mrf.mxu0
        %v1896 = vadd.f32 0.0, %v1895
        %1897 = vdwg.mxu0
        %v1898 = vadd.f32 %v1652, %v1803
        %v1899 = vadd.f32 %v1653, %v1806
        %v1900 = vadd.f32 %v1654, %v1809
        %v1901 = vadd.f32 %v1655, %v1812
        %v1902 = vadd.f32 %v1656, %v1815
        %v1903 = vadd.f32 %v1657, %v1818
        %v1904 = vadd.f32 %v1658, %v1821
        %v1905 = vadd.f32 %v1659, %v1824
        %v1906 = vadd.f32 %v1660, %v1827
        %v1907 = vadd.f32 %v1661, %v1830
        %v1908 = vadd.f32 %v1662, %v1833
        %v1909 = vadd.f32 %v1663, %v1836
        %v1910 = vadd.f32 %v1664, %v1839
        %v1911 = vadd.f32 %v1665, %v1842
        %v1912 = vadd.f32 %v1666, %v1845
        %v1913 = vadd.f32 %v1667, %v1848
        %v1914 = vadd.f32 %v1668, %v1851
        %v1915 = vadd.f32 %v1669, %v1854
        %v1916 = vadd.f32 %v1670, %v1857
        %v1917 = vadd.f32 %v1671, %v1860
        %v1918 = vadd.f32 %v1672, %v1863
        %v1919 = vadd.f32 %v1673, %v1866
        %v1920 = vadd.f32 %v1674, %v1869
        %v1921 = vadd.f32 %v1675, %v1872
        %v1922 = vadd.f32 %v1676, %v1875
        %v1923 = vadd.f32 %v1677, %v1878
        %v1924 = vadd.f32 %v1678, %v1881
        %v1925 = vadd.f32 %v1679, %v1884
        %v1926 = vadd.f32 %v1680, %v1887
        %v1927 = vadd.f32 %v1681, %v1890
        %v1928 = vadd.f32 %v1682, %v1893
        %v1929 = vadd.f32 %v1683, %v1896
        %1930 = vst [vmem:[#allocation2] sm:$0xff] %v1898
        %1931 = vst [vmem:[#allocation2 + $0x8] sm:$0xff] %v1899
        %1932 = vst [vmem:[#allocation2 + $0x10] sm:$0xff] %v1900
        %1933 = vst [vmem:[#allocation2 + $0x18] sm:$0xff] %v1901
        %1934 = vst [vmem:[#allocation2 + $0x20] sm:$0xff] %v1902
        %1935 = vst [vmem:[#allocation2 + $0x28] sm:$0xff] %v1903
        %1936 = vst [vmem:[#allocation2 + $0x30] sm:$0xff] %v1904
        %1937 = vst [vmem:[#allocation2 + $0x38] sm:$0xff] %v1905
        %1938 = vst [vmem:[#allocation2 + $0x40] sm:$0xff] %v1906
        %1939 = vst [vmem:[#allocation2 + $0x48] sm:$0xff] %v1907
        %1940 = vst [vmem:[#allocation2 + $0x50] sm:$0xff] %v1908
        %1941 = vst [vmem:[#allocation2 + $0x58] sm:$0xff] %v1909
        %1942 = vst [vmem:[#allocation2 + $0x60] sm:$0xff] %v1910
        %1943 = vst [vmem:[#allocation2 + $0x68] sm:$0xff] %v1911
        %1944 = vst [vmem:[#allocation2 + $0x70] sm:$0xff] %v1912
        %1945 = vst [vmem:[#allocation2 + $0x78] sm:$0xff] %v1913
        %1946 = vst [vmem:[#allocation2 + $0x80] sm:$0xff] %v1914
        %1947 = vst [vmem:[#allocation2 + $0x88] sm:$0xff] %v1915
        %1948 = vst [vmem:[#allocation2 + $0x90] sm:$0xff] %v1916
        %1949 = vst [vmem:[#allocation2 + $0x98] sm:$0xff] %v1917
        %1950 = vst [vmem:[#allocation2 + $0xa0] sm:$0xff] %v1918
        %1951 = vst [vmem:[#allocation2 + $0xa8] sm:$0xff] %v1919
        %1952 = vst [vmem:[#allocation2 + $0xb0] sm:$0xff] %v1920
        %1953 = vst [vmem:[#allocation2 + $0xb8] sm:$0xff] %v1921
        %1954 = vst [vmem:[#allocation2 + $0xc0] sm:$0xff] %v1922
        %1955 = vst [vmem:[#allocation2 + $0xc8] sm:$0xff] %v1923
        %1956 = vst [vmem:[#allocation2 + $0xd0] sm:$0xff] %v1924
        %1957 = vst [vmem:[#allocation2 + $0xd8] sm:$0xff] %v1925
        %1958 = vst [vmem:[#allocation2 + $0xe0] sm:$0xff] %v1926
        %1959 = vst [vmem:[#allocation2 + $0xe8] sm:$0xff] %v1927
        %1960 = vst [vmem:[#allocation2 + $0xf0] sm:$0xff] %v1928
        %1961 = vst [vmem:[#allocation2 + $0xf8] sm:$0xff] %v1929
        %v1962 = vld [vmem:[%s1277 + $0x2] sm:$0xff]
        %v1963 = vld [vmem:[%s1277 + $0xa] sm:$0xff]
        %v1964 = vld [vmem:[%s1277 + $0x1a] sm:$0xff]
        %v1965 = vld [vmem:[%s1277 + $0x22] sm:$0xff]
        %v1966 = vld [vmem:[%s1277 + $0x32] sm:$0xff]
        %v1967 = vld [vmem:[%s1277 + $0x3a] sm:$0xff]
        %v1968 = vld [vmem:[%s1277 + $0x4a] sm:$0xff]
        %v1969 = vld [vmem:[%s1277 + $0x52] sm:$0xff]
        %v1970 = vld [vmem:[%s1277 + $0x62] sm:$0xff]
        %v1971 = vld [vmem:[%s1277 + $0x6a] sm:$0xff]
        %v1972 = vld [vmem:[%s1277 + $0x7a] sm:$0xff]
        %v1973 = vld [vmem:[%s1277 + $0x82] sm:$0xff]
        %v1974 = vld [vmem:[%s1277 + $0x92] sm:$0xff]
        %v1975 = vld [vmem:[%s1277 + $0x9a] sm:$0xff]
        %v1976 = vld [vmem:[%s1277 + $0xaa] sm:$0xff]
        %v1977 = vld [vmem:[%s1277 + $0xb2] sm:$0xff]
        %v1978 = vld [vmem:[%s1277 + $0xc2] sm:$0xff]
        %v1979 = vld [vmem:[%s1277 + $0xca] sm:$0xff]
        %v1980 = vld [vmem:[%s1277 + $0xda] sm:$0xff]
        %v1981 = vld [vmem:[%s1277 + $0xe2] sm:$0xff]
        %v1982 = vld [vmem:[%s1277 + $0xf2] sm:$0xff]
        %v1983 = vld [vmem:[%s1277 + $0xfa] sm:$0xff]
        %v1984 = vld [vmem:[%s1277 + $0x10a] sm:$0xff]
        %v1985 = vld [vmem:[%s1277 + $0x112] sm:$0xff]
        %v1986 = vld [vmem:[%s1277 + $0x122] sm:$0xff]
        %v1987 = vld [vmem:[%s1277 + $0x12a] sm:$0xff]
        %v1988 = vld [vmem:[%s1277 + $0x13a] sm:$0xff]
        %v1989 = vld [vmem:[%s1277 + $0x142] sm:$0xff]
        %v1990 = vld [vmem:[%s1277 + $0x152] sm:$0xff]
        %v1991 = vld [vmem:[%s1277 + $0x15a] sm:$0xff]
        %v1992 = vld [vmem:[%s1277 + $0x16a] sm:$0xff]
        %v1993 = vld [vmem:[%s1277 + $0x172] sm:$0xff]
        %v1994 = vld [vmem:[#allocation2] sm:$0xff]
        %v1995 = vld [vmem:[#allocation2 + $0x8] sm:$0xff]
        %v1996 = vld [vmem:[#allocation2 + $0x10] sm:$0xff]
        %v1997 = vld [vmem:[#allocation2 + $0x18] sm:$0xff]
        %v1998 = vld [vmem:[#allocation2 + $0x20] sm:$0xff]
        %v1999 = vld [vmem:[#allocation2 + $0x28] sm:$0xff]
        %v2000 = vld [vmem:[#allocation2 + $0x30] sm:$0xff]
        %v2001 = vld [vmem:[#allocation2 + $0x38] sm:$0xff]
        %v2002 = vld [vmem:[#allocation2 + $0x40] sm:$0xff]
        %v2003 = vld [vmem:[#allocation2 + $0x48] sm:$0xff]
        %v2004 = vld [vmem:[#allocation2 + $0x50] sm:$0xff]
        %v2005 = vld [vmem:[#allocation2 + $0x58] sm:$0xff]
        %v2006 = vld [vmem:[#allocation2 + $0x60] sm:$0xff]
        %v2007 = vld [vmem:[#allocation2 + $0x68] sm:$0xff]
        %v2008 = vld [vmem:[#allocation2 + $0x70] sm:$0xff]
        %v2009 = vld [vmem:[#allocation2 + $0x78] sm:$0xff]
        %v2010 = vld [vmem:[#allocation2 + $0x80] sm:$0xff]
        %v2011 = vld [vmem:[#allocation2 + $0x88] sm:$0xff]
        %v2012 = vld [vmem:[#allocation2 + $0x90] sm:$0xff]
        %v2013 = vld [vmem:[#allocation2 + $0x98] sm:$0xff]
        %v2014 = vld [vmem:[#allocation2 + $0xa0] sm:$0xff]
        %v2015 = vld [vmem:[#allocation2 + $0xa8] sm:$0xff]
        %v2016 = vld [vmem:[#allocation2 + $0xb0] sm:$0xff]
        %v2017 = vld [vmem:[#allocation2 + $0xb8] sm:$0xff]
        %v2018 = vld [vmem:[#allocation2 + $0xc0] sm:$0xff]
        %v2019 = vld [vmem:[#allocation2 + $0xc8] sm:$0xff]
        %v2020 = vld [vmem:[#allocation2 + $0xd0] sm:$0xff]
        %v2021 = vld [vmem:[#allocation2 + $0xd8] sm:$0xff]
        %v2022 = vld [vmem:[#allocation2 + $0xe0] sm:$0xff]
        %v2023 = vld [vmem:[#allocation2 + $0xe8] sm:$0xff]
        %v2024 = vld [vmem:[#allocation2 + $0xf0] sm:$0xff]
        %v2025 = vld [vmem:[#allocation2 + $0xf8] sm:$0xff]
        %s2026 = scalar_lea.vmem %s210, 20
        %v2027 = vld [vmem:[%s2026] sm:$0xf]
        %v2029 = vsel %vm315, %v1962, 0
        %v2032 = vsel %vm315, %v1963, 0
        %v2035 = vsel %vm315, %v1964, 0
        %v2038 = vsel %vm315, %v1965, 0
        %v2041 = vsel %vm315, %v1966, 0
        %v2044 = vsel %vm315, %v1967, 0
        %v2047 = vsel %vm315, %v1968, 0
        %v2050 = vsel %vm315, %v1969, 0
        %v2053 = vsel %vm315, %v1970, 0
        %v2056 = vsel %vm315, %v1971, 0
        %v2059 = vsel %vm315, %v1972, 0
        %v2062 = vsel %vm315, %v1973, 0
        %v2065 = vsel %vm315, %v1974, 0
        %v2068 = vsel %vm315, %v1975, 0
        %v2071 = vsel %vm315, %v1976, 0
        %v2074 = vsel %vm315, %v1977, 0
        %v2077 = vsel %vm315, %v1978, 0
        %v2080 = vsel %vm315, %v1979, 0
        %v2083 = vsel %vm315, %v1980, 0
        %v2086 = vsel %vm315, %v1981, 0
        %v2089 = vsel %vm315, %v1982, 0
        %v2092 = vsel %vm315, %v1983, 0
        %v2095 = vsel %vm315, %v1984, 0
        %v2098 = vsel %vm315, %v1985, 0
        %v2101 = vsel %vm315, %v1986, 0
        %v2104 = vsel %vm315, %v1987, 0
        %v2107 = vsel %vm315, %v1988, 0
        %v2110 = vsel %vm315, %v1989, 0
        %v2113 = vsel %vm315, %v1990, 0
        %v2116 = vsel %vm315, %v1991, 0
        %v2119 = vsel %vm315, %v1992, 0
        %v2122 = vsel %vm315, %v1993, 0
        %v2125 = vsel %vm412, %v2027, 0
        %2127 = vmatpush.msra.mxu0 0.0
        %2128 = vmatpush.msra.mxu0 0.0
        %2129 = vmatpush.msra.mxu0 0.0
        %2130 = vmatpush.msra.mxu0 0.0
        %2131 = vmatpush.msra.mxu0 0.0
        %2132 = vmatpush.msra.mxu0 0.0
        %2133 = vmatpush.msra.mxu0 0.0
        %2134 = vmatpush.msra.mxu0 0.0
        %2135 = vmatpush.msra.mxu0 0.0
        %2136 = vmatpush.msra.mxu0 0.0
        %2137 = vmatpush.msra.mxu0 0.0
        %2138 = vmatpush.msra.mxu0 0.0
        %2139 = vmatpush.msra.mxu0 0.0
        %2140 = vmatpush.msra.mxu0 0.0
        %2141 = vmatpush.msra.mxu0 0.0
        %2142 = vmatpush.msra.mxu0 %v2125
        %2143 = vmatmul.f32.gmra.mxu0 %v2029
        %v2144 = vpop.f32.mrf.mxu0
        %v2145 = vadd.f32 0.0, %v2144
        %2146 = vmatmul.f32.gmra.mxu0 %v2032
        %v2147 = vpop.f32.mrf.mxu0
        %v2148 = vadd.f32 0.0, %v2147
        %2149 = vmatmul.f32.gmra.mxu0 %v2035
        %v2150 = vpop.f32.mrf.mxu0
        %v2151 = vadd.f32 0.0, %v2150
        %2152 = vmatmul.f32.gmra.mxu0 %v2038
        %v2153 = vpop.f32.mrf.mxu0
        %v2154 = vadd.f32 0.0, %v2153
        %2155 = vmatmul.f32.gmra.mxu0 %v2041
        %v2156 = vpop.f32.mrf.mxu0
        %v2157 = vadd.f32 0.0, %v2156
        %2158 = vmatmul.f32.gmra.mxu0 %v2044
        %v2159 = vpop.f32.mrf.mxu0
        %v2160 = vadd.f32 0.0, %v2159
        %2161 = vmatmul.f32.gmra.mxu0 %v2047
        %v2162 = vpop.f32.mrf.mxu0
        %v2163 = vadd.f32 0.0, %v2162
        %2164 = vmatmul.f32.gmra.mxu0 %v2050
        %v2165 = vpop.f32.mrf.mxu0
        %v2166 = vadd.f32 0.0, %v2165
        %2167 = vmatmul.f32.gmra.mxu0 %v2053
        %v2168 = vpop.f32.mrf.mxu0
        %v2169 = vadd.f32 0.0, %v2168
        %2170 = vmatmul.f32.gmra.mxu0 %v2056
        %v2171 = vpop.f32.mrf.mxu0
        %v2172 = vadd.f32 0.0, %v2171
        %2173 = vmatmul.f32.gmra.mxu0 %v2059
        %v2174 = vpop.f32.mrf.mxu0
        %v2175 = vadd.f32 0.0, %v2174
        %2176 = vmatmul.f32.gmra.mxu0 %v2062
        %v2177 = vpop.f32.mrf.mxu0
        %v2178 = vadd.f32 0.0, %v2177
        %2179 = vmatmul.f32.gmra.mxu0 %v2065
        %v2180 = vpop.f32.mrf.mxu0
        %v2181 = vadd.f32 0.0, %v2180
        %2182 = vmatmul.f32.gmra.mxu0 %v2068
        %v2183 = vpop.f32.mrf.mxu0
        %v2184 = vadd.f32 0.0, %v2183
        %2185 = vmatmul.f32.gmra.mxu0 %v2071
        %v2186 = vpop.f32.mrf.mxu0
        %v2187 = vadd.f32 0.0, %v2186
        %2188 = vmatmul.f32.gmra.mxu0 %v2074
        %v2189 = vpop.f32.mrf.mxu0
        %v2190 = vadd.f32 0.0, %v2189
        %2191 = vmatmul.f32.gmra.mxu0 %v2077
        %v2192 = vpop.f32.mrf.mxu0
        %v2193 = vadd.f32 0.0, %v2192
        %2194 = vmatmul.f32.gmra.mxu0 %v2080
        %v2195 = vpop.f32.mrf.mxu0
        %v2196 = vadd.f32 0.0, %v2195
        %2197 = vmatmul.f32.gmra.mxu0 %v2083
        %v2198 = vpop.f32.mrf.mxu0
        %v2199 = vadd.f32 0.0, %v2198
        %2200 = vmatmul.f32.gmra.mxu0 %v2086
        %v2201 = vpop.f32.mrf.mxu0
        %v2202 = vadd.f32 0.0, %v2201
        %2203 = vmatmul.f32.gmra.mxu0 %v2089
        %v2204 = vpop.f32.mrf.mxu0
        %v2205 = vadd.f32 0.0, %v2204
        %2206 = vmatmul.f32.gmra.mxu0 %v2092
        %v2207 = vpop.f32.mrf.mxu0
        %v2208 = vadd.f32 0.0, %v2207
        %2209 = vmatmul.f32.gmra.mxu0 %v2095
        %v2210 = vpop.f32.mrf.mxu0
        %v2211 = vadd.f32 0.0, %v2210
        %2212 = vmatmul.f32.gmra.mxu0 %v2098
        %v2213 = vpop.f32.mrf.mxu0
        %v2214 = vadd.f32 0.0, %v2213
        %2215 = vmatmul.f32.gmra.mxu0 %v2101
        %v2216 = vpop.f32.mrf.mxu0
        %v2217 = vadd.f32 0.0, %v2216
        %2218 = vmatmul.f32.gmra.mxu0 %v2104
        %v2219 = vpop.f32.mrf.mxu0
        %v2220 = vadd.f32 0.0, %v2219
        %2221 = vmatmul.f32.gmra.mxu0 %v2107
        %v2222 = vpop.f32.mrf.mxu0
        %v2223 = vadd.f32 0.0, %v2222
        %2224 = vmatmul.f32.gmra.mxu0 %v2110
        %v2225 = vpop.f32.mrf.mxu0
        %v2226 = vadd.f32 0.0, %v2225
        %2227 = vmatmul.f32.gmra.mxu0 %v2113
        %v2228 = vpop.f32.mrf.mxu0
        %v2229 = vadd.f32 0.0, %v2228
        %2230 = vmatmul.f32.gmra.mxu0 %v2116
        %v2231 = vpop.f32.mrf.mxu0
        %v2232 = vadd.f32 0.0, %v2231
        %2233 = vmatmul.f32.gmra.mxu0 %v2119
        %v2234 = vpop.f32.mrf.mxu0
        %v2235 = vadd.f32 0.0, %v2234
        %2236 = vmatmul.f32.gmra.mxu0 %v2122
        %v2237 = vpop.f32.mrf.mxu0
        %v2238 = vadd.f32 0.0, %v2237
        %2239 = vdwg.mxu0
        %v2240 = vadd.f32 %v1994, %v2145
        %v2241 = vadd.f32 %v1995, %v2148
        %v2242 = vadd.f32 %v1996, %v2151
        %v2243 = vadd.f32 %v1997, %v2154
        %v2244 = vadd.f32 %v1998, %v2157
        %v2245 = vadd.f32 %v1999, %v2160
        %v2246 = vadd.f32 %v2000, %v2163
        %v2247 = vadd.f32 %v2001, %v2166
        %v2248 = vadd.f32 %v2002, %v2169
        %v2249 = vadd.f32 %v2003, %v2172
        %v2250 = vadd.f32 %v2004, %v2175
        %v2251 = vadd.f32 %v2005, %v2178
        %v2252 = vadd.f32 %v2006, %v2181
        %v2253 = vadd.f32 %v2007, %v2184
        %v2254 = vadd.f32 %v2008, %v2187
        %v2255 = vadd.f32 %v2009, %v2190
        %v2256 = vadd.f32 %v2010, %v2193
        %v2257 = vadd.f32 %v2011, %v2196
        %v2258 = vadd.f32 %v2012, %v2199
        %v2259 = vadd.f32 %v2013, %v2202
        %v2260 = vadd.f32 %v2014, %v2205
        %v2261 = vadd.f32 %v2015, %v2208
        %v2262 = vadd.f32 %v2016, %v2211
        %v2263 = vadd.f32 %v2017, %v2214
        %v2264 = vadd.f32 %v2018, %v2217
        %v2265 = vadd.f32 %v2019, %v2220
        %v2266 = vadd.f32 %v2020, %v2223
        %v2267 = vadd.f32 %v2021, %v2226
        %v2268 = vadd.f32 %v2022, %v2229
        %v2269 = vadd.f32 %v2023, %v2232
        %v2270 = vadd.f32 %v2024, %v2235
        %v2271 = vadd.f32 %v2025, %v2238
        %2272 = vst [vmem:[#allocation2] sm:$0xff] %v2240
        %2273 = vst [vmem:[#allocation2 + $0x8] sm:$0xff] %v2241
        %2274 = vst [vmem:[#allocation2 + $0x10] sm:$0xff] %v2242
        %2275 = vst [vmem:[#allocation2 + $0x18] sm:$0xff] %v2243
        %2276 = vst [vmem:[#allocation2 + $0x20] sm:$0xff] %v2244
        %2277 = vst [vmem:[#allocation2 + $0x28] sm:$0xff] %v2245
        %2278 = vst [vmem:[#allocation2 + $0x30] sm:$0xff] %v2246
        %2279 = vst [vmem:[#allocation2 + $0x38] sm:$0xff] %v2247
        %2280 = vst [vmem:[#allocation2 + $0x40] sm:$0xff] %v2248
        %2281 = vst [vmem:[#allocation2 + $0x48] sm:$0xff] %v2249
        %2282 = vst [vmem:[#allocation2 + $0x50] sm:$0xff] %v2250
        %2283 = vst [vmem:[#allocation2 + $0x58] sm:$0xff] %v2251
        %2284 = vst [vmem:[#allocation2 + $0x60] sm:$0xff] %v2252
        %2285 = vst [vmem:[#allocation2 + $0x68] sm:$0xff] %v2253
        %2286 = vst [vmem:[#allocation2 + $0x70] sm:$0xff] %v2254
        %2287 = vst [vmem:[#allocation2 + $0x78] sm:$0xff] %v2255
        %2288 = vst [vmem:[#allocation2 + $0x80] sm:$0xff] %v2256
        %2289 = vst [vmem:[#allocation2 + $0x88] sm:$0xff] %v2257
        %2290 = vst [vmem:[#allocation2 + $0x90] sm:$0xff] %v2258
        %2291 = vst [vmem:[#allocation2 + $0x98] sm:$0xff] %v2259
        %2292 = vst [vmem:[#allocation2 + $0xa0] sm:$0xff] %v2260
        %2293 = vst [vmem:[#allocation2 + $0xa8] sm:$0xff] %v2261
        %2294 = vst [vmem:[#allocation2 + $0xb0] sm:$0xff] %v2262
        %2295 = vst [vmem:[#allocation2 + $0xb8] sm:$0xff] %v2263
        %2296 = vst [vmem:[#allocation2 + $0xc0] sm:$0xff] %v2264
        %2297 = vst [vmem:[#allocation2 + $0xc8] sm:$0xff] %v2265
        %2298 = vst [vmem:[#allocation2 + $0xd0] sm:$0xff] %v2266
        %2299 = vst [vmem:[#allocation2 + $0xd8] sm:$0xff] %v2267
        %2300 = vst [vmem:[#allocation2 + $0xe0] sm:$0xff] %v2268
        %2301 = vst [vmem:[#allocation2 + $0xe8] sm:$0xff] %v2269
        %2302 = vst [vmem:[#allocation2 + $0xf0] sm:$0xff] %v2270
        %2303 = vst [vmem:[#allocation2 + $0xf8] sm:$0xff] %v2271
        %s2304 = scalar_lea.vmem %s206, 48
        %v2305 = vld [vmem:[%s2304] sm:$0xff]
        %v2306 = vld [vmem:[%s2304 + $0x8] sm:$0xff]
        %v2307 = vld [vmem:[%s2304 + $0x18] sm:$0xff]
        %v2308 = vld [vmem:[%s2304 + $0x20] sm:$0xff]
        %v2309 = vld [vmem:[%s2304 + $0x30] sm:$0xff]
        %v2310 = vld [vmem:[%s2304 + $0x38] sm:$0xff]
        %v2311 = vld [vmem:[%s2304 + $0x48] sm:$0xff]
        %v2312 = vld [vmem:[%s2304 + $0x50] sm:$0xff]
        %v2313 = vld [vmem:[%s2304 + $0x60] sm:$0xff]
        %v2314 = vld [vmem:[%s2304 + $0x68] sm:$0xff]
        %v2315 = vld [vmem:[%s2304 + $0x78] sm:$0xff]
        %v2316 = vld [vmem:[%s2304 + $0x80] sm:$0xff]
        %v2317 = vld [vmem:[%s2304 + $0x90] sm:$0xff]
        %v2318 = vld [vmem:[%s2304 + $0x98] sm:$0xff]
        %v2319 = vld [vmem:[%s2304 + $0xa8] sm:$0xff]
        %v2320 = vld [vmem:[%s2304 + $0xb0] sm:$0xff]
        %v2321 = vld [vmem:[%s2304 + $0xc0] sm:$0xff]
        %v2322 = vld [vmem:[%s2304 + $0xc8] sm:$0xff]
        %v2323 = vld [vmem:[%s2304 + $0xd8] sm:$0xff]
        %v2324 = vld [vmem:[%s2304 + $0xe0] sm:$0xff]
        %v2325 = vld [vmem:[%s2304 + $0xf0] sm:$0xff]
        %v2326 = vld [vmem:[%s2304 + $0xf8] sm:$0xff]
        %v2327 = vld [vmem:[%s2304 + $0x108] sm:$0xff]
        %v2328 = vld [vmem:[%s2304 + $0x110] sm:$0xff]
        %v2329 = vld [vmem:[%s2304 + $0x120] sm:$0xff]
        %v2330 = vld [vmem:[%s2304 + $0x128] sm:$0xff]
        %v2331 = vld [vmem:[%s2304 + $0x138] sm:$0xff]
        %v2332 = vld [vmem:[%s2304 + $0x140] sm:$0xff]
        %v2333 = vld [vmem:[%s2304 + $0x150] sm:$0xff]
        %v2334 = vld [vmem:[%s2304 + $0x158] sm:$0xff]
        %v2335 = vld [vmem:[%s2304 + $0x168] sm:$0xff]
        %v2336 = vld [vmem:[%s2304 + $0x170] sm:$0xff]
        %v2337 = vld [vmem:[#allocation2] sm:$0xff]
        %v2338 = vld [vmem:[#allocation2 + $0x8] sm:$0xff]
        %v2339 = vld [vmem:[#allocation2 + $0x10] sm:$0xff]
        %v2340 = vld [vmem:[#allocation2 + $0x18] sm:$0xff]
        %v2341 = vld [vmem:[#allocation2 + $0x20] sm:$0xff]
        %v2342 = vld [vmem:[#allocation2 + $0x28] sm:$0xff]
        %v2343 = vld [vmem:[#allocation2 + $0x30] sm:$0xff]
        %v2344 = vld [vmem:[#allocation2 + $0x38] sm:$0xff]
        %v2345 = vld [vmem:[#allocation2 + $0x40] sm:$0xff]
        %v2346 = vld [vmem:[#allocation2 + $0x48] sm:$0xff]
        %v2347 = vld [vmem:[#allocation2 + $0x50] sm:$0xff]
        %v2348 = vld [vmem:[#allocation2 + $0x58] sm:$0xff]
        %v2349 = vld [vmem:[#allocation2 + $0x60] sm:$0xff]
        %v2350 = vld [vmem:[#allocation2 + $0x68] sm:$0xff]
        %v2351 = vld [vmem:[#allocation2 + $0x70] sm:$0xff]
        %v2352 = vld [vmem:[#allocation2 + $0x78] sm:$0xff]
        %v2353 = vld [vmem:[#allocation2 + $0x80] sm:$0xff]
        %v2354 = vld [vmem:[#allocation2 + $0x88] sm:$0xff]
        %v2355 = vld [vmem:[#allocation2 + $0x90] sm:$0xff]
        %v2356 = vld [vmem:[#allocation2 + $0x98] sm:$0xff]
        %v2357 = vld [vmem:[#allocation2 + $0xa0] sm:$0xff]
        %v2358 = vld [vmem:[#allocation2 + $0xa8] sm:$0xff]
        %v2359 = vld [vmem:[#allocation2 + $0xb0] sm:$0xff]
        %v2360 = vld [vmem:[#allocation2 + $0xb8] sm:$0xff]
        %v2361 = vld [vmem:[#allocation2 + $0xc0] sm:$0xff]
        %v2362 = vld [vmem:[#allocation2 + $0xc8] sm:$0xff]
        %v2363 = vld [vmem:[#allocation2 + $0xd0] sm:$0xff]
        %v2364 = vld [vmem:[#allocation2 + $0xd8] sm:$0xff]
        %v2365 = vld [vmem:[#allocation2 + $0xe0] sm:$0xff]
        %v2366 = vld [vmem:[#allocation2 + $0xe8] sm:$0xff]
        %v2367 = vld [vmem:[#allocation2 + $0xf0] sm:$0xff]
        %v2368 = vld [vmem:[#allocation2 + $0xf8] sm:$0xff]
        %s2369 = scalar_lea.vmem %s210, 24
        %v2370 = vld [vmem:[%s2369] sm:$0xf]
        %v2372 = vsel %vm315, %v2305, 0
        %v2375 = vsel %vm315, %v2306, 0
        %v2378 = vsel %vm315, %v2307, 0
        %v2381 = vsel %vm315, %v2308, 0
        %v2384 = vsel %vm315, %v2309, 0
        %v2387 = vsel %vm315, %v2310, 0
        %v2390 = vsel %vm315, %v2311, 0
        %v2393 = vsel %vm315, %v2312, 0
        %v2396 = vsel %vm315, %v2313, 0
        %v2399 = vsel %vm315, %v2314, 0
        %v2402 = vsel %vm315, %v2315, 0
        %v2405 = vsel %vm315, %v2316, 0
        %v2408 = vsel %vm315, %v2317, 0
        %v2411 = vsel %vm315, %v2318, 0
        %v2414 = vsel %vm315, %v2319, 0
        %v2417 = vsel %vm315, %v2320, 0
        %v2420 = vsel %vm315, %v2321, 0
        %v2423 = vsel %vm315, %v2322, 0
        %v2426 = vsel %vm315, %v2323, 0
        %v2429 = vsel %vm315, %v2324, 0
        %v2432 = vsel %vm315, %v2325, 0
        %v2435 = vsel %vm315, %v2326, 0
        %v2438 = vsel %vm315, %v2327, 0
        %v2441 = vsel %vm315, %v2328, 0
        %v2444 = vsel %vm315, %v2329, 0
        %v2447 = vsel %vm315, %v2330, 0
        %v2450 = vsel %vm315, %v2331, 0
        %v2453 = vsel %vm315, %v2332, 0
        %v2456 = vsel %vm315, %v2333, 0
        %v2459 = vsel %vm315, %v2334, 0
        %v2462 = vsel %vm315, %v2335, 0
        %v2465 = vsel %vm315, %v2336, 0
        %v2468 = vsel %vm412, %v2370, 0
        %2470 = vmatpush.msra.mxu0 0.0
        %2471 = vmatpush.msra.mxu0 0.0
        %2472 = vmatpush.msra.mxu0 0.0
        %2473 = vmatpush.msra.mxu0 0.0
        %2474 = vmatpush.msra.mxu0 0.0
        %2475 = vmatpush.msra.mxu0 0.0
        %2476 = vmatpush.msra.mxu0 0.0
        %2477 = vmatpush.msra.mxu0 0.0
        %2478 = vmatpush.msra.mxu0 0.0
        %2479 = vmatpush.msra.mxu0 0.0
        %2480 = vmatpush.msra.mxu0 0.0
        %2481 = vmatpush.msra.mxu0 0.0
        %2482 = vmatpush.msra.mxu0 0.0
        %2483 = vmatpush.msra.mxu0 0.0
        %2484 = vmatpush.msra.mxu0 0.0
        %2485 = vmatpush.msra.mxu0 %v2468
        %2486 = vmatmul.f32.gmra.mxu0 %v2372
        %v2487 = vpop.f32.mrf.mxu0
        %v2488 = vadd.f32 0.0, %v2487
        %2489 = vmatmul.f32.gmra.mxu0 %v2375
        %v2490 = vpop.f32.mrf.mxu0
        %v2491 = vadd.f32 0.0, %v2490
        %2492 = vmatmul.f32.gmra.mxu0 %v2378
        %v2493 = vpop.f32.mrf.mxu0
        %v2494 = vadd.f32 0.0, %v2493
        %2495 = vmatmul.f32.gmra.mxu0 %v2381
        %v2496 = vpop.f32.mrf.mxu0
        %v2497 = vadd.f32 0.0, %v2496
        %2498 = vmatmul.f32.gmra.mxu0 %v2384
        %v2499 = vpop.f32.mrf.mxu0
        %v2500 = vadd.f32 0.0, %v2499
        %2501 = vmatmul.f32.gmra.mxu0 %v2387
        %v2502 = vpop.f32.mrf.mxu0
        %v2503 = vadd.f32 0.0, %v2502
        %2504 = vmatmul.f32.gmra.mxu0 %v2390
        %v2505 = vpop.f32.mrf.mxu0
        %v2506 = vadd.f32 0.0, %v2505
        %2507 = vmatmul.f32.gmra.mxu0 %v2393
        %v2508 = vpop.f32.mrf.mxu0
        %v2509 = vadd.f32 0.0, %v2508
        %2510 = vmatmul.f32.gmra.mxu0 %v2396
        %v2511 = vpop.f32.mrf.mxu0
        %v2512 = vadd.f32 0.0, %v2511
        %2513 = vmatmul.f32.gmra.mxu0 %v2399
        %v2514 = vpop.f32.mrf.mxu0
        %v2515 = vadd.f32 0.0, %v2514
        %2516 = vmatmul.f32.gmra.mxu0 %v2402
        %v2517 = vpop.f32.mrf.mxu0
        %v2518 = vadd.f32 0.0, %v2517
        %2519 = vmatmul.f32.gmra.mxu0 %v2405
        %v2520 = vpop.f32.mrf.mxu0
        %v2521 = vadd.f32 0.0, %v2520
        %2522 = vmatmul.f32.gmra.mxu0 %v2408
        %v2523 = vpop.f32.mrf.mxu0
        %v2524 = vadd.f32 0.0, %v2523
        %2525 = vmatmul.f32.gmra.mxu0 %v2411
        %v2526 = vpop.f32.mrf.mxu0
        %v2527 = vadd.f32 0.0, %v2526
        %2528 = vmatmul.f32.gmra.mxu0 %v2414
        %v2529 = vpop.f32.mrf.mxu0
        %v2530 = vadd.f32 0.0, %v2529
        %2531 = vmatmul.f32.gmra.mxu0 %v2417
        %v2532 = vpop.f32.mrf.mxu0
        %v2533 = vadd.f32 0.0, %v2532
        %2534 = vmatmul.f32.gmra.mxu0 %v2420
        %v2535 = vpop.f32.mrf.mxu0
        %v2536 = vadd.f32 0.0, %v2535
        %2537 = vmatmul.f32.gmra.mxu0 %v2423
        %v2538 = vpop.f32.mrf.mxu0
        %v2539 = vadd.f32 0.0, %v2538
        %2540 = vmatmul.f32.gmra.mxu0 %v2426
        %v2541 = vpop.f32.mrf.mxu0
        %v2542 = vadd.f32 0.0, %v2541
        %2543 = vmatmul.f32.gmra.mxu0 %v2429
        %v2544 = vpop.f32.mrf.mxu0
        %v2545 = vadd.f32 0.0, %v2544
        %2546 = vmatmul.f32.gmra.mxu0 %v2432
        %v2547 = vpop.f32.mrf.mxu0
        %v2548 = vadd.f32 0.0, %v2547
        %2549 = vmatmul.f32.gmra.mxu0 %v2435
        %v2550 = vpop.f32.mrf.mxu0
        %v2551 = vadd.f32 0.0, %v2550
        %2552 = vmatmul.f32.gmra.mxu0 %v2438
        %v2553 = vpop.f32.mrf.mxu0
        %v2554 = vadd.f32 0.0, %v2553
        %2555 = vmatmul.f32.gmra.mxu0 %v2441
        %v2556 = vpop.f32.mrf.mxu0
        %v2557 = vadd.f32 0.0, %v2556
        %2558 = vmatmul.f32.gmra.mxu0 %v2444
        %v2559 = vpop.f32.mrf.mxu0
        %v2560 = vadd.f32 0.0, %v2559
        %2561 = vmatmul.f32.gmra.mxu0 %v2447
        %v2562 = vpop.f32.mrf.mxu0
        %v2563 = vadd.f32 0.0, %v2562
        %2564 = vmatmul.f32.gmra.mxu0 %v2450
        %v2565 = vpop.f32.mrf.mxu0
        %v2566 = vadd.f32 0.0, %v2565
        %2567 = vmatmul.f32.gmra.mxu0 %v2453
        %v2568 = vpop.f32.mrf.mxu0
        %v2569 = vadd.f32 0.0, %v2568
        %2570 = vmatmul.f32.gmra.mxu0 %v2456
        %v2571 = vpop.f32.mrf.mxu0
        %v2572 = vadd.f32 0.0, %v2571
        %2573 = vmatmul.f32.gmra.mxu0 %v2459
        %v2574 = vpop.f32.mrf.mxu0
        %v2575 = vadd.f32 0.0, %v2574
        %2576 = vmatmul.f32.gmra.mxu0 %v2462
        %v2577 = vpop.f32.mrf.mxu0
        %v2578 = vadd.f32 0.0, %v2577
        %2579 = vmatmul.f32.gmra.mxu0 %v2465
        %v2580 = vpop.f32.mrf.mxu0
        %v2581 = vadd.f32 0.0, %v2580
        %2582 = vdwg.mxu0
        %v2583 = vadd.f32 %v2337, %v2488
        %v2584 = vadd.f32 %v2338, %v2491
        %v2585 = vadd.f32 %v2339, %v2494
        %v2586 = vadd.f32 %v2340, %v2497
        %v2587 = vadd.f32 %v2341, %v2500
        %v2588 = vadd.f32 %v2342, %v2503
        %v2589 = vadd.f32 %v2343, %v2506
        %v2590 = vadd.f32 %v2344, %v2509
        %v2591 = vadd.f32 %v2345, %v2512
        %v2592 = vadd.f32 %v2346, %v2515
        %v2593 = vadd.f32 %v2347, %v2518
        %v2594 = vadd.f32 %v2348, %v2521
        %v2595 = vadd.f32 %v2349, %v2524
        %v2596 = vadd.f32 %v2350, %v2527
        %v2597 = vadd.f32 %v2351, %v2530
        %v2598 = vadd.f32 %v2352, %v2533
        %v2599 = vadd.f32 %v2353, %v2536
        %v2600 = vadd.f32 %v2354, %v2539
        %v2601 = vadd.f32 %v2355, %v2542
        %v2602 = vadd.f32 %v2356, %v2545
        %v2603 = vadd.f32 %v2357, %v2548
        %v2604 = vadd.f32 %v2358, %v2551
        %v2605 = vadd.f32 %v2359, %v2554
        %v2606 = vadd.f32 %v2360, %v2557
        %v2607 = vadd.f32 %v2361, %v2560
        %v2608 = vadd.f32 %v2362, %v2563
        %v2609 = vadd.f32 %v2363, %v2566
        %v2610 = vadd.f32 %v2364, %v2569
        %v2611 = vadd.f32 %v2365, %v2572
        %v2612 = vadd.f32 %v2366, %v2575
        %v2613 = vadd.f32 %v2367, %v2578
        %v2614 = vadd.f32 %v2368, %v2581
        %2615 = vst [vmem:[#allocation2] sm:$0xff] %v2583
        %2616 = vst [vmem:[#allocation2 + $0x8] sm:$0xff] %v2584
        %2617 = vst [vmem:[#allocation2 + $0x10] sm:$0xff] %v2585
        %2618 = vst [vmem:[#allocation2 + $0x18] sm:$0xff] %v2586
        %2619 = vst [vmem:[#allocation2 + $0x20] sm:$0xff] %v2587
        %2620 = vst [vmem:[#allocation2 + $0x28] sm:$0xff] %v2588
        %2621 = vst [vmem:[#allocation2 + $0x30] sm:$0xff] %v2589
        %2622 = vst [vmem:[#allocation2 + $0x38] sm:$0xff] %v2590
        %2623 = vst [vmem:[#allocation2 + $0x40] sm:$0xff] %v2591
        %2624 = vst [vmem:[#allocation2 + $0x48] sm:$0xff] %v2592
        %2625 = vst [vmem:[#allocation2 + $0x50] sm:$0xff] %v2593
        %2626 = vst [vmem:[#allocation2 + $0x58] sm:$0xff] %v2594
        %2627 = vst [vmem:[#allocation2 + $0x60] sm:$0xff] %v2595
        %2628 = vst [vmem:[#allocation2 + $0x68] sm:$0xff] %v2596
        %2629 = vst [vmem:[#allocation2 + $0x70] sm:$0xff] %v2597
        %2630 = vst [vmem:[#allocation2 + $0x78] sm:$0xff] %v2598
        %2631 = vst [vmem:[#allocation2 + $0x80] sm:$0xff] %v2599
        %2632 = vst [vmem:[#allocation2 + $0x88] sm:$0xff] %v2600
        %2633 = vst [vmem:[#allocation2 + $0x90] sm:$0xff] %v2601
        %2634 = vst [vmem:[#allocation2 + $0x98] sm:$0xff] %v2602
        %2635 = vst [vmem:[#allocation2 + $0xa0] sm:$0xff] %v2603
        %2636 = vst [vmem:[#allocation2 + $0xa8] sm:$0xff] %v2604
        %2637 = vst [vmem:[#allocation2 + $0xb0] sm:$0xff] %v2605
        %2638 = vst [vmem:[#allocation2 + $0xb8] sm:$0xff] %v2606
        %2639 = vst [vmem:[#allocation2 + $0xc0] sm:$0xff] %v2607
        %2640 = vst [vmem:[#allocation2 + $0xc8] sm:$0xff] %v2608
        %2641 = vst [vmem:[#allocation2 + $0xd0] sm:$0xff] %v2609
        %2642 = vst [vmem:[#allocation2 + $0xd8] sm:$0xff] %v2610
        %2643 = vst [vmem:[#allocation2 + $0xe0] sm:$0xff] %v2611
        %2644 = vst [vmem:[#allocation2 + $0xe8] sm:$0xff] %v2612
        %2645 = vst [vmem:[#allocation2 + $0xf0] sm:$0xff] %v2613
        %2646 = vst [vmem:[#allocation2 + $0xf8] sm:$0xff] %v2614
        %v2647 = vld [vmem:[%s2304 + $0x1] sm:$0xff]
        %v2648 = vld [vmem:[%s2304 + $0x9] sm:$0xff]
        %v2649 = vld [vmem:[%s2304 + $0x19] sm:$0xff]
        %v2650 = vld [vmem:[%s2304 + $0x21] sm:$0xff]
        %v2651 = vld [vmem:[%s2304 + $0x31] sm:$0xff]
        %v2652 = vld [vmem:[%s2304 + $0x39] sm:$0xff]
        %v2653 = vld [vmem:[%s2304 + $0x49] sm:$0xff]
        %v2654 = vld [vmem:[%s2304 + $0x51] sm:$0xff]
        %v2655 = vld [vmem:[%s2304 + $0x61] sm:$0xff]
        %v2656 = vld [vmem:[%s2304 + $0x69] sm:$0xff]
        %v2657 = vld [vmem:[%s2304 + $0x79] sm:$0xff]
        %v2658 = vld [vmem:[%s2304 + $0x81] sm:$0xff]
        %v2659 = vld [vmem:[%s2304 + $0x91] sm:$0xff]
        %v2660 = vld [vmem:[%s2304 + $0x99] sm:$0xff]
        %v2661 = vld [vmem:[%s2304 + $0xa9] sm:$0xff]
        %v2662 = vld [vmem:[%s2304 + $0xb1] sm:$0xff]
        %v2663 = vld [vmem:[%s2304 + $0xc1] sm:$0xff]
        %v2664 = vld [vmem:[%s2304 + $0xc9] sm:$0xff]
        %v2665 = vld [vmem:[%s2304 + $0xd9] sm:$0xff]
        %v2666 = vld [vmem:[%s2304 + $0xe1] sm:$0xff]
        %v2667 = vld [vmem:[%s2304 + $0xf1] sm:$0xff]
        %v2668 = vld [vmem:[%s2304 + $0xf9] sm:$0xff]
        %v2669 = vld [vmem:[%s2304 + $0x109] sm:$0xff]
        %v2670 = vld [vmem:[%s2304 + $0x111] sm:$0xff]
        %v2671 = vld [vmem:[%s2304 + $0x121] sm:$0xff]
        %v2672 = vld [vmem:[%s2304 + $0x129] sm:$0xff]
        %v2673 = vld [vmem:[%s2304 + $0x139] sm:$0xff]
        %v2674 = vld [vmem:[%s2304 + $0x141] sm:$0xff]
        %v2675 = vld [vmem:[%s2304 + $0x151] sm:$0xff]
        %v2676 = vld [vmem:[%s2304 + $0x159] sm:$0xff]
        %v2677 = vld [vmem:[%s2304 + $0x169] sm:$0xff]
        %v2678 = vld [vmem:[%s2304 + $0x171] sm:$0xff]
        %v2679 = vld [vmem:[#allocation2] sm:$0xff]
        %v2680 = vld [vmem:[#allocation2 + $0x8] sm:$0xff]
        %v2681 = vld [vmem:[#allocation2 + $0x10] sm:$0xff]
        %v2682 = vld [vmem:[#allocation2 + $0x18] sm:$0xff]
        %v2683 = vld [vmem:[#allocation2 + $0x20] sm:$0xff]
        %v2684 = vld [vmem:[#allocation2 + $0x28] sm:$0xff]
        %v2685 = vld [vmem:[#allocation2 + $0x30] sm:$0xff]
        %v2686 = vld [vmem:[#allocation2 + $0x38] sm:$0xff]
        %v2687 = vld [vmem:[#allocation2 + $0x40] sm:$0xff]
        %v2688 = vld [vmem:[#allocation2 + $0x48] sm:$0xff]
        %v2689 = vld [vmem:[#allocation2 + $0x50] sm:$0xff]
        %v2690 = vld [vmem:[#allocation2 + $0x58] sm:$0xff]
        %v2691 = vld [vmem:[#allocation2 + $0x60] sm:$0xff]
        %v2692 = vld [vmem:[#allocation2 + $0x68] sm:$0xff]
        %v2693 = vld [vmem:[#allocation2 + $0x70] sm:$0xff]
        %v2694 = vld [vmem:[#allocation2 + $0x78] sm:$0xff]
        %v2695 = vld [vmem:[#allocation2 + $0x80] sm:$0xff]
        %v2696 = vld [vmem:[#allocation2 + $0x88] sm:$0xff]
        %v2697 = vld [vmem:[#allocation2 + $0x90] sm:$0xff]
        %v2698 = vld [vmem:[#allocation2 + $0x98] sm:$0xff]
        %v2699 = vld [vmem:[#allocation2 + $0xa0] sm:$0xff]
        %v2700 = vld [vmem:[#allocation2 + $0xa8] sm:$0xff]
        %v2701 = vld [vmem:[#allocation2 + $0xb0] sm:$0xff]
        %v2702 = vld [vmem:[#allocation2 + $0xb8] sm:$0xff]
        %v2703 = vld [vmem:[#allocation2 + $0xc0] sm:$0xff]
        %v2704 = vld [vmem:[#allocation2 + $0xc8] sm:$0xff]
        %v2705 = vld [vmem:[#allocation2 + $0xd0] sm:$0xff]
        %v2706 = vld [vmem:[#allocation2 + $0xd8] sm:$0xff]
        %v2707 = vld [vmem:[#allocation2 + $0xe0] sm:$0xff]
        %v2708 = vld [vmem:[#allocation2 + $0xe8] sm:$0xff]
        %v2709 = vld [vmem:[#allocation2 + $0xf0] sm:$0xff]
        %v2710 = vld [vmem:[#allocation2 + $0xf8] sm:$0xff]
        %s2711 = scalar_lea.vmem %s210, 28
        %v2712 = vld [vmem:[%s2711] sm:$0xf]
        %v2714 = vsel %vm315, %v2647, 0
        %v2717 = vsel %vm315, %v2648, 0
        %v2720 = vsel %vm315, %v2649, 0
        %v2723 = vsel %vm315, %v2650, 0
        %v2726 = vsel %vm315, %v2651, 0
        %v2729 = vsel %vm315, %v2652, 0
        %v2732 = vsel %vm315, %v2653, 0
        %v2735 = vsel %vm315, %v2654, 0
        %v2738 = vsel %vm315, %v2655, 0
        %v2741 = vsel %vm315, %v2656, 0
        %v2744 = vsel %vm315, %v2657, 0
        %v2747 = vsel %vm315, %v2658, 0
        %v2750 = vsel %vm315, %v2659, 0
        %v2753 = vsel %vm315, %v2660, 0
        %v2756 = vsel %vm315, %v2661, 0
        %v2759 = vsel %vm315, %v2662, 0
        %v2762 = vsel %vm315, %v2663, 0
        %v2765 = vsel %vm315, %v2664, 0
        %v2768 = vsel %vm315, %v2665, 0
        %v2771 = vsel %vm315, %v2666, 0
        %v2774 = vsel %vm315, %v2667, 0
        %v2777 = vsel %vm315, %v2668, 0
        %v2780 = vsel %vm315, %v2669, 0
        %v2783 = vsel %vm315, %v2670, 0
        %v2786 = vsel %vm315, %v2671, 0
        %v2789 = vsel %vm315, %v2672, 0
        %v2792 = vsel %vm315, %v2673, 0
        %v2795 = vsel %vm315, %v2674, 0
        %v2798 = vsel %vm315, %v2675, 0
        %v2801 = vsel %vm315, %v2676, 0
        %v2804 = vsel %vm315, %v2677, 0
        %v2807 = vsel %vm315, %v2678, 0
        %v2810 = vsel %vm412, %v2712, 0
        %2812 = vmatpush.msra.mxu0 0.0
        %2813 = vmatpush.msra.mxu0 0.0
        %2814 = vmatpush.msra.mxu0 0.0
        %2815 = vmatpush.msra.mxu0 0.0
        %2816 = vmatpush.msra.mxu0 0.0
        %2817 = vmatpush.msra.mxu0 0.0
        %2818 = vmatpush.msra.mxu0 0.0
        %2819 = vmatpush.msra.mxu0 0.0
        %2820 = vmatpush.msra.mxu0 0.0
        %2821 = vmatpush.msra.mxu0 0.0
        %2822 = vmatpush.msra.mxu0 0.0
        %2823 = vmatpush.msra.mxu0 0.0
        %2824 = vmatpush.msra.mxu0 0.0
        %2825 = vmatpush.msra.mxu0 0.0
        %2826 = vmatpush.msra.mxu0 0.0
        %2827 = vmatpush.msra.mxu0 %v2810
        %2828 = vmatmul.f32.gmra.mxu0 %v2714
        %v2829 = vpop.f32.mrf.mxu0
        %v2830 = vadd.f32 0.0, %v2829
        %2831 = vmatmul.f32.gmra.mxu0 %v2717
        %v2832 = vpop.f32.mrf.mxu0
        %v2833 = vadd.f32 0.0, %v2832
        %2834 = vmatmul.f32.gmra.mxu0 %v2720
        %v2835 = vpop.f32.mrf.mxu0
        %v2836 = vadd.f32 0.0, %v2835
        %2837 = vmatmul.f32.gmra.mxu0 %v2723
        %v2838 = vpop.f32.mrf.mxu0
        %v2839 = vadd.f32 0.0, %v2838
        %2840 = vmatmul.f32.gmra.mxu0 %v2726
        %v2841 = vpop.f32.mrf.mxu0
        %v2842 = vadd.f32 0.0, %v2841
        %2843 = vmatmul.f32.gmra.mxu0 %v2729
        %v2844 = vpop.f32.mrf.mxu0
        %v2845 = vadd.f32 0.0, %v2844
        %2846 = vmatmul.f32.gmra.mxu0 %v2732
        %v2847 = vpop.f32.mrf.mxu0
        %v2848 = vadd.f32 0.0, %v2847
        %2849 = vmatmul.f32.gmra.mxu0 %v2735
        %v2850 = vpop.f32.mrf.mxu0
        %v2851 = vadd.f32 0.0, %v2850
        %2852 = vmatmul.f32.gmra.mxu0 %v2738
        %v2853 = vpop.f32.mrf.mxu0
        %v2854 = vadd.f32 0.0, %v2853
        %2855 = vmatmul.f32.gmra.mxu0 %v2741
        %v2856 = vpop.f32.mrf.mxu0
        %v2857 = vadd.f32 0.0, %v2856
        %2858 = vmatmul.f32.gmra.mxu0 %v2744
        %v2859 = vpop.f32.mrf.mxu0
        %v2860 = vadd.f32 0.0, %v2859
        %2861 = vmatmul.f32.gmra.mxu0 %v2747
        %v2862 = vpop.f32.mrf.mxu0
        %v2863 = vadd.f32 0.0, %v2862
        %2864 = vmatmul.f32.gmra.mxu0 %v2750
        %v2865 = vpop.f32.mrf.mxu0
        %v2866 = vadd.f32 0.0, %v2865
        %2867 = vmatmul.f32.gmra.mxu0 %v2753
        %v2868 = vpop.f32.mrf.mxu0
        %v2869 = vadd.f32 0.0, %v2868
        %2870 = vmatmul.f32.gmra.mxu0 %v2756
        %v2871 = vpop.f32.mrf.mxu0
        %v2872 = vadd.f32 0.0, %v2871
        %2873 = vmatmul.f32.gmra.mxu0 %v2759
        %v2874 = vpop.f32.mrf.mxu0
        %v2875 = vadd.f32 0.0, %v2874
        %2876 = vmatmul.f32.gmra.mxu0 %v2762
        %v2877 = vpop.f32.mrf.mxu0
        %v2878 = vadd.f32 0.0, %v2877
        %2879 = vmatmul.f32.gmra.mxu0 %v2765
        %v2880 = vpop.f32.mrf.mxu0
        %v2881 = vadd.f32 0.0, %v2880
        %2882 = vmatmul.f32.gmra.mxu0 %v2768
        %v2883 = vpop.f32.mrf.mxu0
        %v2884 = vadd.f32 0.0, %v2883
        %2885 = vmatmul.f32.gmra.mxu0 %v2771
        %v2886 = vpop.f32.mrf.mxu0
        %v2887 = vadd.f32 0.0, %v2886
        %2888 = vmatmul.f32.gmra.mxu0 %v2774
        %v2889 = vpop.f32.mrf.mxu0
        %v2890 = vadd.f32 0.0, %v2889
        %2891 = vmatmul.f32.gmra.mxu0 %v2777
        %v2892 = vpop.f32.mrf.mxu0
        %v2893 = vadd.f32 0.0, %v2892
        %2894 = vmatmul.f32.gmra.mxu0 %v2780
        %v2895 = vpop.f32.mrf.mxu0
        %v2896 = vadd.f32 0.0, %v2895
        %2897 = vmatmul.f32.gmra.mxu0 %v2783
        %v2898 = vpop.f32.mrf.mxu0
        %v2899 = vadd.f32 0.0, %v2898
        %2900 = vmatmul.f32.gmra.mxu0 %v2786
        %v2901 = vpop.f32.mrf.mxu0
        %v2902 = vadd.f32 0.0, %v2901
        %2903 = vmatmul.f32.gmra.mxu0 %v2789
        %v2904 = vpop.f32.mrf.mxu0
        %v2905 = vadd.f32 0.0, %v2904
        %2906 = vmatmul.f32.gmra.mxu0 %v2792
        %v2907 = vpop.f32.mrf.mxu0
        %v2908 = vadd.f32 0.0, %v2907
        %2909 = vmatmul.f32.gmra.mxu0 %v2795
        %v2910 = vpop.f32.mrf.mxu0
        %v2911 = vadd.f32 0.0, %v2910
        %2912 = vmatmul.f32.gmra.mxu0 %v2798
        %v2913 = vpop.f32.mrf.mxu0
        %v2914 = vadd.f32 0.0, %v2913
        %2915 = vmatmul.f32.gmra.mxu0 %v2801
        %v2916 = vpop.f32.mrf.mxu0
        %v2917 = vadd.f32 0.0, %v2916
        %2918 = vmatmul.f32.gmra.mxu0 %v2804
        %v2919 = vpop.f32.mrf.mxu0
        %v2920 = vadd.f32 0.0, %v2919
        %2921 = vmatmul.f32.gmra.mxu0 %v2807
        %v2922 = vpop.f32.mrf.mxu0
        %v2923 = vadd.f32 0.0, %v2922
        %2924 = vdwg.mxu0
        %v2925 = vadd.f32 %v2679, %v2830
        %v2926 = vadd.f32 %v2680, %v2833
        %v2927 = vadd.f32 %v2681, %v2836
        %v2928 = vadd.f32 %v2682, %v2839
        %v2929 = vadd.f32 %v2683, %v2842
        %v2930 = vadd.f32 %v2684, %v2845
        %v2931 = vadd.f32 %v2685, %v2848
        %v2932 = vadd.f32 %v2686, %v2851
        %v2933 = vadd.f32 %v2687, %v2854
        %v2934 = vadd.f32 %v2688, %v2857
        %v2935 = vadd.f32 %v2689, %v2860
        %v2936 = vadd.f32 %v2690, %v2863
        %v2937 = vadd.f32 %v2691, %v2866
        %v2938 = vadd.f32 %v2692, %v2869
        %v2939 = vadd.f32 %v2693, %v2872
        %v2940 = vadd.f32 %v2694, %v2875
        %v2941 = vadd.f32 %v2695, %v2878
        %v2942 = vadd.f32 %v2696, %v2881
        %v2943 = vadd.f32 %v2697, %v2884
        %v2944 = vadd.f32 %v2698, %v2887
        %v2945 = vadd.f32 %v2699, %v2890
        %v2946 = vadd.f32 %v2700, %v2893
        %v2947 = vadd.f32 %v2701, %v2896
        %v2948 = vadd.f32 %v2702, %v2899
        %v2949 = vadd.f32 %v2703, %v2902
        %v2950 = vadd.f32 %v2704, %v2905
        %v2951 = vadd.f32 %v2705, %v2908
        %v2952 = vadd.f32 %v2706, %v2911
        %v2953 = vadd.f32 %v2707, %v2914
        %v2954 = vadd.f32 %v2708, %v2917
        %v2955 = vadd.f32 %v2709, %v2920
        %v2956 = vadd.f32 %v2710, %v2923
        %2957 = vst [vmem:[#allocation2] sm:$0xff] %v2925
        %2958 = vst [vmem:[#allocation2 + $0x8] sm:$0xff] %v2926
        %2959 = vst [vmem:[#allocation2 + $0x10] sm:$0xff] %v2927
        %2960 = vst [vmem:[#allocation2 + $0x18] sm:$0xff] %v2928
        %2961 = vst [vmem:[#allocation2 + $0x20] sm:$0xff] %v2929
        %2962 = vst [vmem:[#allocation2 + $0x28] sm:$0xff] %v2930
        %2963 = vst [vmem:[#allocation2 + $0x30] sm:$0xff] %v2931
        %2964 = vst [vmem:[#allocation2 + $0x38] sm:$0xff] %v2932
        %2965 = vst [vmem:[#allocation2 + $0x40] sm:$0xff] %v2933
        %2966 = vst [vmem:[#allocation2 + $0x48] sm:$0xff] %v2934
        %2967 = vst [vmem:[#allocation2 + $0x50] sm:$0xff] %v2935
        %2968 = vst [vmem:[#allocation2 + $0x58] sm:$0xff] %v2936
        %2969 = vst [vmem:[#allocation2 + $0x60] sm:$0xff] %v2937
        %2970 = vst [vmem:[#allocation2 + $0x68] sm:$0xff] %v2938
        %2971 = vst [vmem:[#allocation2 + $0x70] sm:$0xff] %v2939
        %2972 = vst [vmem:[#allocation2 + $0x78] sm:$0xff] %v2940
        %2973 = vst [vmem:[#allocation2 + $0x80] sm:$0xff] %v2941
        %2974 = vst [vmem:[#allocation2 + $0x88] sm:$0xff] %v2942
        %2975 = vst [vmem:[#allocation2 + $0x90] sm:$0xff] %v2943
        %2976 = vst [vmem:[#allocation2 + $0x98] sm:$0xff] %v2944
        %2977 = vst [vmem:[#allocation2 + $0xa0] sm:$0xff] %v2945
        %2978 = vst [vmem:[#allocation2 + $0xa8] sm:$0xff] %v2946
        %2979 = vst [vmem:[#allocation2 + $0xb0] sm:$0xff] %v2947
        %2980 = vst [vmem:[#allocation2 + $0xb8] sm:$0xff] %v2948
        %2981 = vst [vmem:[#allocation2 + $0xc0] sm:$0xff] %v2949
        %2982 = vst [vmem:[#allocation2 + $0xc8] sm:$0xff] %v2950
        %2983 = vst [vmem:[#allocation2 + $0xd0] sm:$0xff] %v2951
        %2984 = vst [vmem:[#allocation2 + $0xd8] sm:$0xff] %v2952
        %2985 = vst [vmem:[#allocation2 + $0xe0] sm:$0xff] %v2953
        %2986 = vst [vmem:[#allocation2 + $0xe8] sm:$0xff] %v2954
        %2987 = vst [vmem:[#allocation2 + $0xf0] sm:$0xff] %v2955
        %2988 = vst [vmem:[#allocation2 + $0xf8] sm:$0xff] %v2956
        %v2989 = vld [vmem:[%s2304 + $0x2] sm:$0xff]
        %v2990 = vld [vmem:[%s2304 + $0xa] sm:$0xff]
        %v2991 = vld [vmem:[%s2304 + $0x1a] sm:$0xff]
        %v2992 = vld [vmem:[%s2304 + $0x22] sm:$0xff]
        %v2993 = vld [vmem:[%s2304 + $0x32] sm:$0xff]
        %v2994 = vld [vmem:[%s2304 + $0x3a] sm:$0xff]
        %v2995 = vld [vmem:[%s2304 + $0x4a] sm:$0xff]
        %v2996 = vld [vmem:[%s2304 + $0x52] sm:$0xff]
        %v2997 = vld [vmem:[%s2304 + $0x62] sm:$0xff]
        %v2998 = vld [vmem:[%s2304 + $0x6a] sm:$0xff]
        %v2999 = vld [vmem:[%s2304 + $0x7a] sm:$0xff]
        %v3000 = vld [vmem:[%s2304 + $0x82] sm:$0xff]
        %v3001 = vld [vmem:[%s2304 + $0x92] sm:$0xff]
        %v3002 = vld [vmem:[%s2304 + $0x9a] sm:$0xff]
        %v3003 = vld [vmem:[%s2304 + $0xaa] sm:$0xff]
        %v3004 = vld [vmem:[%s2304 + $0xb2] sm:$0xff]
        %v3005 = vld [vmem:[%s2304 + $0xc2] sm:$0xff]
        %v3006 = vld [vmem:[%s2304 + $0xca] sm:$0xff]
        %v3007 = vld [vmem:[%s2304 + $0xda] sm:$0xff]
        %v3008 = vld [vmem:[%s2304 + $0xe2] sm:$0xff]
        %v3009 = vld [vmem:[%s2304 + $0xf2] sm:$0xff]
        %v3010 = vld [vmem:[%s2304 + $0xfa] sm:$0xff]
        %v3011 = vld [vmem:[%s2304 + $0x10a] sm:$0xff]
        %v3012 = vld [vmem:[%s2304 + $0x112] sm:$0xff]
        %v3013 = vld [vmem:[%s2304 + $0x122] sm:$0xff]
        %v3014 = vld [vmem:[%s2304 + $0x12a] sm:$0xff]
        %v3015 = vld [vmem:[%s2304 + $0x13a] sm:$0xff]
        %v3016 = vld [vmem:[%s2304 + $0x142] sm:$0xff]
        %v3017 = vld [vmem:[%s2304 + $0x152] sm:$0xff]
        %v3018 = vld [vmem:[%s2304 + $0x15a] sm:$0xff]
        %v3019 = vld [vmem:[%s2304 + $0x16a] sm:$0xff]
        %v3020 = vld [vmem:[%s2304 + $0x172] sm:$0xff]
        %v3021 = vld [vmem:[#allocation2] sm:$0xff]
        %v3022 = vld [vmem:[#allocation2 + $0x8] sm:$0xff]
        %v3023 = vld [vmem:[#allocation2 + $0x10] sm:$0xff]
        %v3024 = vld [vmem:[#allocation2 + $0x18] sm:$0xff]
        %v3025 = vld [vmem:[#allocation2 + $0x20] sm:$0xff]
        %v3026 = vld [vmem:[#allocation2 + $0x28] sm:$0xff]
        %v3027 = vld [vmem:[#allocation2 + $0x30] sm:$0xff]
        %v3028 = vld [vmem:[#allocation2 + $0x38] sm:$0xff]
        %v3029 = vld [vmem:[#allocation2 + $0x40] sm:$0xff]
        %v3030 = vld [vmem:[#allocation2 + $0x48] sm:$0xff]
        %v3031 = vld [vmem:[#allocation2 + $0x50] sm:$0xff]
        %v3032 = vld [vmem:[#allocation2 + $0x58] sm:$0xff]
        %v3033 = vld [vmem:[#allocation2 + $0x60] sm:$0xff]
        %v3034 = vld [vmem:[#allocation2 + $0x68] sm:$0xff]
        %v3035 = vld [vmem:[#allocation2 + $0x70] sm:$0xff]
        %v3036 = vld [vmem:[#allocation2 + $0x78] sm:$0xff]
        %v3037 = vld [vmem:[#allocation2 + $0x80] sm:$0xff]
        %v3038 = vld [vmem:[#allocation2 + $0x88] sm:$0xff]
        %v3039 = vld [vmem:[#allocation2 + $0x90] sm:$0xff]
        %v3040 = vld [vmem:[#allocation2 + $0x98] sm:$0xff]
        %v3041 = vld [vmem:[#allocation2 + $0xa0] sm:$0xff]
        %v3042 = vld [vmem:[#allocation2 + $0xa8] sm:$0xff]
        %v3043 = vld [vmem:[#allocation2 + $0xb0] sm:$0xff]
        %v3044 = vld [vmem:[#allocation2 + $0xb8] sm:$0xff]
        %v3045 = vld [vmem:[#allocation2 + $0xc0] sm:$0xff]
        %v3046 = vld [vmem:[#allocation2 + $0xc8] sm:$0xff]
        %v3047 = vld [vmem:[#allocation2 + $0xd0] sm:$0xff]
        %v3048 = vld [vmem:[#allocation2 + $0xd8] sm:$0xff]
        %v3049 = vld [vmem:[#allocation2 + $0xe0] sm:$0xff]
        %v3050 = vld [vmem:[#allocation2 + $0xe8] sm:$0xff]
        %v3051 = vld [vmem:[#allocation2 + $0xf0] sm:$0xff]
        %v3052 = vld [vmem:[#allocation2 + $0xf8] sm:$0xff]
        %s3053 = scalar_lea.vmem %s210, 32
        %v3054 = vld [vmem:[%s3053] sm:$0xf]
        %v3056 = vsel %vm315, %v2989, 0
        %v3059 = vsel %vm315, %v2990, 0
        %v3062 = vsel %vm315, %v2991, 0
        %v3065 = vsel %vm315, %v2992, 0
        %v3068 = vsel %vm315, %v2993, 0
        %v3071 = vsel %vm315, %v2994, 0
        %v3074 = vsel %vm315, %v2995, 0
        %v3077 = vsel %vm315, %v2996, 0
        %v3080 = vsel %vm315, %v2997, 0
        %v3083 = vsel %vm315, %v2998, 0
        %v3086 = vsel %vm315, %v2999, 0
        %v3089 = vsel %vm315, %v3000, 0
        %v3092 = vsel %vm315, %v3001, 0
        %v3095 = vsel %vm315, %v3002, 0
        %v3098 = vsel %vm315, %v3003, 0
        %v3101 = vsel %vm315, %v3004, 0
        %v3104 = vsel %vm315, %v3005, 0
        %v3107 = vsel %vm315, %v3006, 0
        %v3110 = vsel %vm315, %v3007, 0
        %v3113 = vsel %vm315, %v3008, 0
        %v3116 = vsel %vm315, %v3009, 0
        %v3119 = vsel %vm315, %v3010, 0
        %v3122 = vsel %vm315, %v3011, 0
        %v3125 = vsel %vm315, %v3012, 0
        %v3128 = vsel %vm315, %v3013, 0
        %v3131 = vsel %vm315, %v3014, 0
        %v3134 = vsel %vm315, %v3015, 0
        %v3137 = vsel %vm315, %v3016, 0
        %v3140 = vsel %vm315, %v3017, 0
        %v3143 = vsel %vm315, %v3018, 0
        %v3146 = vsel %vm315, %v3019, 0
        %v3149 = vsel %vm315, %v3020, 0
        %v3152 = vsel %vm412, %v3054, 0
        %3154 = vmatpush.msra.mxu0 0.0
        %3155 = vmatpush.msra.mxu0 0.0
        %3156 = vmatpush.msra.mxu0 0.0
        %3157 = vmatpush.msra.mxu0 0.0
        %3158 = vmatpush.msra.mxu0 0.0
        %3159 = vmatpush.msra.mxu0 0.0
        %3160 = vmatpush.msra.mxu0 0.0
        %3161 = vmatpush.msra.mxu0 0.0
        %3162 = vmatpush.msra.mxu0 0.0
        %3163 = vmatpush.msra.mxu0 0.0
        %3164 = vmatpush.msra.mxu0 0.0
        %3165 = vmatpush.msra.mxu0 0.0
        %3166 = vmatpush.msra.mxu0 0.0
        %3167 = vmatpush.msra.mxu0 0.0
        %3168 = vmatpush.msra.mxu0 0.0
        %3169 = vmatpush.msra.mxu0 %v3152
        %3170 = vmatmul.f32.gmra.mxu0 %v3056
        %v3171 = vpop.f32.mrf.mxu0
        %v3172 = vadd.f32 0.0, %v3171
        %3173 = vmatmul.f32.gmra.mxu0 %v3059
        %v3174 = vpop.f32.mrf.mxu0
        %v3175 = vadd.f32 0.0, %v3174
        %3176 = vmatmul.f32.gmra.mxu0 %v3062
        %v3177 = vpop.f32.mrf.mxu0
        %v3178 = vadd.f32 0.0, %v3177
        %3179 = vmatmul.f32.gmra.mxu0 %v3065
        %v3180 = vpop.f32.mrf.mxu0
        %v3181 = vadd.f32 0.0, %v3180
        %3182 = vmatmul.f32.gmra.mxu0 %v3068
        %v3183 = vpop.f32.mrf.mxu0
        %v3184 = vadd.f32 0.0, %v3183
        %3185 = vmatmul.f32.gmra.mxu0 %v3071
        %v3186 = vpop.f32.mrf.mxu0
        %v3187 = vadd.f32 0.0, %v3186
        %3188 = vmatmul.f32.gmra.mxu0 %v3074
        %v3189 = vpop.f32.mrf.mxu0
        %v3190 = vadd.f32 0.0, %v3189
        %3191 = vmatmul.f32.gmra.mxu0 %v3077
        %v3192 = vpop.f32.mrf.mxu0
        %v3193 = vadd.f32 0.0, %v3192
        %3194 = vmatmul.f32.gmra.mxu0 %v3080
        %v3195 = vpop.f32.mrf.mxu0
        %v3196 = vadd.f32 0.0, %v3195
        %3197 = vmatmul.f32.gmra.mxu0 %v3083
        %v3198 = vpop.f32.mrf.mxu0
        %v3199 = vadd.f32 0.0, %v3198
        %3200 = vmatmul.f32.gmra.mxu0 %v3086
        %v3201 = vpop.f32.mrf.mxu0
        %v3202 = vadd.f32 0.0, %v3201
        %3203 = vmatmul.f32.gmra.mxu0 %v3089
        %v3204 = vpop.f32.mrf.mxu0
        %v3205 = vadd.f32 0.0, %v3204
        %3206 = vmatmul.f32.gmra.mxu0 %v3092
        %v3207 = vpop.f32.mrf.mxu0
        %v3208 = vadd.f32 0.0, %v3207
        %3209 = vmatmul.f32.gmra.mxu0 %v3095
        %v3210 = vpop.f32.mrf.mxu0
        %v3211 = vadd.f32 0.0, %v3210
        %3212 = vmatmul.f32.gmra.mxu0 %v3098
        %v3213 = vpop.f32.mrf.mxu0
        %v3214 = vadd.f32 0.0, %v3213
        %3215 = vmatmul.f32.gmra.mxu0 %v3101
        %v3216 = vpop.f32.mrf.mxu0
        %v3217 = vadd.f32 0.0, %v3216
        %3218 = vmatmul.f32.gmra.mxu0 %v3104
        %v3219 = vpop.f32.mrf.mxu0
        %v3220 = vadd.f32 0.0, %v3219
        %3221 = vmatmul.f32.gmra.mxu0 %v3107
        %v3222 = vpop.f32.mrf.mxu0
        %v3223 = vadd.f32 0.0, %v3222
        %3224 = vmatmul.f32.gmra.mxu0 %v3110
        %v3225 = vpop.f32.mrf.mxu0
        %v3226 = vadd.f32 0.0, %v3225
        %3227 = vmatmul.f32.gmra.mxu0 %v3113
        %v3228 = vpop.f32.mrf.mxu0
        %v3229 = vadd.f32 0.0, %v3228
        %3230 = vmatmul.f32.gmra.mxu0 %v3116
        %v3231 = vpop.f32.mrf.mxu0
        %v3232 = vadd.f32 0.0, %v3231
        %3233 = vmatmul.f32.gmra.mxu0 %v3119
        %v3234 = vpop.f32.mrf.mxu0
        %v3235 = vadd.f32 0.0, %v3234
        %3236 = vmatmul.f32.gmra.mxu0 %v3122
        %v3237 = vpop.f32.mrf.mxu0
        %v3238 = vadd.f32 0.0, %v3237
        %3239 = vmatmul.f32.gmra.mxu0 %v3125
        %v3240 = vpop.f32.mrf.mxu0
        %v3241 = vadd.f32 0.0, %v3240
        %3242 = vmatmul.f32.gmra.mxu0 %v3128
        %v3243 = vpop.f32.mrf.mxu0
        %v3244 = vadd.f32 0.0, %v3243
        %3245 = vmatmul.f32.gmra.mxu0 %v3131
        %v3246 = vpop.f32.mrf.mxu0
        %v3247 = vadd.f32 0.0, %v3246
        %3248 = vmatmul.f32.gmra.mxu0 %v3134
        %v3249 = vpop.f32.mrf.mxu0
        %v3250 = vadd.f32 0.0, %v3249
        %3251 = vmatmul.f32.gmra.mxu0 %v3137
        %v3252 = vpop.f32.mrf.mxu0
        %v3253 = vadd.f32 0.0, %v3252
        %3254 = vmatmul.f32.gmra.mxu0 %v3140
        %v3255 = vpop.f32.mrf.mxu0
        %v3256 = vadd.f32 0.0, %v3255
        %3257 = vmatmul.f32.gmra.mxu0 %v3143
        %v3258 = vpop.f32.mrf.mxu0
        %v3259 = vadd.f32 0.0, %v3258
        %3260 = vmatmul.f32.gmra.mxu0 %v3146
        %v3261 = vpop.f32.mrf.mxu0
        %v3262 = vadd.f32 0.0, %v3261
        %3263 = vmatmul.f32.gmra.mxu0 %v3149
        %v3264 = vpop.f32.mrf.mxu0
        %v3265 = vadd.f32 0.0, %v3264
        %3266 = vdwg.mxu0
        %v3267 = vadd.f32 %v3021, %v3172
        %v3268 = vadd.f32 %v3022, %v3175
        %v3269 = vadd.f32 %v3023, %v3178
        %v3270 = vadd.f32 %v3024, %v3181
        %v3271 = vadd.f32 %v3025, %v3184
        %v3272 = vadd.f32 %v3026, %v3187
        %v3273 = vadd.f32 %v3027, %v3190
        %v3274 = vadd.f32 %v3028, %v3193
        %v3275 = vadd.f32 %v3029, %v3196
        %v3276 = vadd.f32 %v3030, %v3199
        %v3277 = vadd.f32 %v3031, %v3202
        %v3278 = vadd.f32 %v3032, %v3205
        %v3279 = vadd.f32 %v3033, %v3208
        %v3280 = vadd.f32 %v3034, %v3211
        %v3281 = vadd.f32 %v3035, %v3214
        %v3282 = vadd.f32 %v3036, %v3217
        %v3283 = vadd.f32 %v3037, %v3220
        %v3284 = vadd.f32 %v3038, %v3223
        %v3285 = vadd.f32 %v3039, %v3226
        %v3286 = vadd.f32 %v3040, %v3229
        %v3287 = vadd.f32 %v3041, %v3232
        %v3288 = vadd.f32 %v3042, %v3235
        %v3289 = vadd.f32 %v3043, %v3238
        %v3290 = vadd.f32 %v3044, %v3241
        %v3291 = vadd.f32 %v3045, %v3244
        %v3292 = vadd.f32 %v3046, %v3247
        %v3293 = vadd.f32 %v3047, %v3250
        %v3294 = vadd.f32 %v3048, %v3253
        %v3295 = vadd.f32 %v3049, %v3256
        %v3296 = vadd.f32 %v3050, %v3259
        %v3297 = vadd.f32 %v3051, %v3262
        %v3298 = vadd.f32 %v3052, %v3265
        %3299 = vst [vmem:[#allocation2] sm:$0xff] %v3267
        %3300 = vst [vmem:[#allocation2 + $0x8] sm:$0xff] %v3268
        %3301 = vst [vmem:[#allocation2 + $0x10] sm:$0xff] %v3269
        %3302 = vst [vmem:[#allocation2 + $0x18] sm:$0xff] %v3270
        %3303 = vst [vmem:[#allocation2 + $0x20] sm:$0xff] %v3271
        %3304 = vst [vmem:[#allocation2 + $0x28] sm:$0xff] %v3272
        %3305 = vst [vmem:[#allocation2 + $0x30] sm:$0xff] %v3273
        %3306 = vst [vmem:[#allocation2 + $0x38] sm:$0xff] %v3274
        %3307 = vst [vmem:[#allocation2 + $0x40] sm:$0xff] %v3275
        %3308 = vst [vmem:[#allocation2 + $0x48] sm:$0xff] %v3276
        %3309 = vst [vmem:[#allocation2 + $0x50] sm:$0xff] %v3277
        %3310 = vst [vmem:[#allocation2 + $0x58] sm:$0xff] %v3278
        %3311 = vst [vmem:[#allocation2 + $0x60] sm:$0xff] %v3279
        %3312 = vst [vmem:[#allocation2 + $0x68] sm:$0xff] %v3280
        %3313 = vst [vmem:[#allocation2 + $0x70] sm:$0xff] %v3281
        %3314 = vst [vmem:[#allocation2 + $0x78] sm:$0xff] %v3282
        %3315 = vst [vmem:[#allocation2 + $0x80] sm:$0xff] %v3283
        %3316 = vst [vmem:[#allocation2 + $0x88] sm:$0xff] %v3284
        %3317 = vst [vmem:[#allocation2 + $0x90] sm:$0xff] %v3285
        %3318 = vst [vmem:[#allocation2 + $0x98] sm:$0xff] %v3286
        %3319 = vst [vmem:[#allocation2 + $0xa0] sm:$0xff] %v3287
        %3320 = vst [vmem:[#allocation2 + $0xa8] sm:$0xff] %v3288
        %3321 = vst [vmem:[#allocation2 + $0xb0] sm:$0xff] %v3289
        %3322 = vst [vmem:[#allocation2 + $0xb8] sm:$0xff] %v3290
        %3323 = vst [vmem:[#allocation2 + $0xc0] sm:$0xff] %v3291
        %3324 = vst [vmem:[#allocation2 + $0xc8] sm:$0xff] %v3292
        %3325 = vst [vmem:[#allocation2 + $0xd0] sm:$0xff] %v3293
        %3326 = vst [vmem:[#allocation2 + $0xd8] sm:$0xff] %v3294
        %3327 = vst [vmem:[#allocation2 + $0xe0] sm:$0xff] %v3295
        %3328 = vst [vmem:[#allocation2 + $0xe8] sm:$0xff] %v3296
        %3329 = vst [vmem:[#allocation2 + $0xf0] sm:$0xff] %v3297
        %3330 = vst [vmem:[#allocation2 + $0xf8] sm:$0xff] %v3298
        %v3331 = vld [vmem:[#allocation2] sm:$0xff]
        %v3332 = vld [vmem:[#allocation2 + $0x8] sm:$0xff]
        %v3333 = vld [vmem:[#allocation2 + $0x10] sm:$0xff]
        %v3334 = vld [vmem:[#allocation2 + $0x18] sm:$0xff]
        %v3335 = vld [vmem:[#allocation2 + $0x20] sm:$0xff]
        %v3336 = vld [vmem:[#allocation2 + $0x28] sm:$0xff]
        %v3337 = vld [vmem:[#allocation2 + $0x30] sm:$0xff]
        %v3338 = vld [vmem:[#allocation2 + $0x38] sm:$0xff]
        %v3339 = vld [vmem:[#allocation2 + $0x40] sm:$0xff]
        %v3340 = vld [vmem:[#allocation2 + $0x48] sm:$0xff]
        %v3341 = vld [vmem:[#allocation2 + $0x50] sm:$0xff]
        %v3342 = vld [vmem:[#allocation2 + $0x58] sm:$0xff]
        %v3343 = vld [vmem:[#allocation2 + $0x60] sm:$0xff]
        %v3344 = vld [vmem:[#allocation2 + $0x68] sm:$0xff]
        %v3345 = vld [vmem:[#allocation2 + $0x70] sm:$0xff]
        %v3346 = vld [vmem:[#allocation2 + $0x78] sm:$0xff]
        %v3347 = vld [vmem:[#allocation2 + $0x80] sm:$0xff]
        %v3348 = vld [vmem:[#allocation2 + $0x88] sm:$0xff]
        %v3349 = vld [vmem:[#allocation2 + $0x90] sm:$0xff]
        %v3350 = vld [vmem:[#allocation2 + $0x98] sm:$0xff]
        %v3351 = vld [vmem:[#allocation2 + $0xa0] sm:$0xff]
        %v3352 = vld [vmem:[#allocation2 + $0xa8] sm:$0xff]
        %v3353 = vld [vmem:[#allocation2 + $0xb0] sm:$0xff]
        %v3354 = vld [vmem:[#allocation2 + $0xb8] sm:$0xff]
        %v3355 = vld [vmem:[#allocation2 + $0xc0] sm:$0xff]
        %v3356 = vld [vmem:[#allocation2 + $0xc8] sm:$0xff]
        %v3357 = vld [vmem:[#allocation2 + $0xd0] sm:$0xff]
        %v3358 = vld [vmem:[#allocation2 + $0xd8] sm:$0xff]
        %v3359 = vld [vmem:[#allocation2 + $0xe0] sm:$0xff]
        %v3360 = vld [vmem:[#allocation2 + $0xe8] sm:$0xff]
        %v3361 = vld [vmem:[#allocation2 + $0xf0] sm:$0xff]
        %v3362 = vld [vmem:[#allocation2 + $0xf8] sm:$0xff]
        %3363 = vst [vmem:[%s201] sm:$0xff] %v3331
        %3364 = vst [vmem:[%s201 + $0x8] sm:$0xff] %v3332
        %3365 = vst [vmem:[%s201 + $0x10] sm:$0xff] %v3333
        %3366 = vst [vmem:[%s201 + $0x18] sm:$0xff] %v3334
        %3367 = vst [vmem:[%s201 + $0x20] sm:$0xff] %v3335
        %3368 = vst [vmem:[%s201 + $0x28] sm:$0xff] %v3336
        %3369 = vst [vmem:[%s201 + $0x30] sm:$0xff] %v3337
        %3370 = vst [vmem:[%s201 + $0x38] sm:$0xff] %v3338
        %3371 = vst [vmem:[%s201 + $0x40] sm:$0xff] %v3339
        %3372 = vst [vmem:[%s201 + $0x48] sm:$0xff] %v3340
        %3373 = vst [vmem:[%s201 + $0x50] sm:$0xff] %v3341
        %3374 = vst [vmem:[%s201 + $0x58] sm:$0xff] %v3342
        %3375 = vst [vmem:[%s201 + $0x60] sm:$0xff] %v3343
        %3376 = vst [vmem:[%s201 + $0x68] sm:$0xff] %v3344
        %3377 = vst [vmem:[%s201 + $0x70] sm:$0xff] %v3345
        %3378 = vst [vmem:[%s201 + $0x78] sm:$0xff] %v3346
        %3379 = vst [vmem:[%s201 + $0x80] sm:$0xff] %v3347
        %3380 = vst [vmem:[%s201 + $0x88] sm:$0xff] %v3348
        %3381 = vst [vmem:[%s201 + $0x90] sm:$0xff] %v3349
        %3382 = vst [vmem:[%s201 + $0x98] sm:$0xff] %v3350
        %3383 = vst [vmem:[%s201 + $0xa0] sm:$0xff] %v3351
        %3384 = vst [vmem:[%s201 + $0xa8] sm:$0xff] %v3352
        %3385 = vst [vmem:[%s201 + $0xb0] sm:$0xff] %v3353
        %3386 = vst [vmem:[%s201 + $0xb8] sm:$0xff] %v3354
        %3387 = vst [vmem:[%s201 + $0xc0] sm:$0xff] %v3355
        %3388 = vst [vmem:[%s201 + $0xc8] sm:$0xff] %v3356
        %3389 = vst [vmem:[%s201 + $0xd0] sm:$0xff] %v3357
        %3390 = vst [vmem:[%s201 + $0xd8] sm:$0xff] %v3358
        %3391 = vst [vmem:[%s201 + $0xe0] sm:$0xff] %v3359
        %3392 = vst [vmem:[%s201 + $0xe8] sm:$0xff] %v3360
        %3393 = vst [vmem:[%s201 + $0xf0] sm:$0xff] %v3361
        %3394 = vst [vmem:[%s201 + $0xf8] sm:$0xff] %v3362
        %s3395 = sand.u32 %s117, 1
        %s3396 = scalar_lea.sflag [#allocation4], %s3395
        %s3397 = sand.u32 %s117, 1
        %s3398 = smul.addr %s3397, 256
        %s3399 = scalar_lea.vmem [#allocation3], %s3398
        // Predicated region
        $region33: #{tpu_custom_call.1} parent=31 // pred_check
          %p3400 = pneg %p127
        $region34: #{tpu_custom_call.1} parent=31 // pred_check_branch
          %3402 = sbr.rel (%p3400) target = $region36
        $region35: #{tpu_custom_call.1} parent=31 // pred_region
          %3404 = vsyncadd %s3396, 0
          %s3405 = smul.addr %s21, 32
          %s3406 = sadd.s32 %s22, %s3405
          %s3407 = smul.addr %s3406, 8
          %s3408 = scalar_lea.hbm %s3, %s3407
          %s3409 = sshll.u32 %s3399, 4
          %s3410 = int_to_ptr.vmem [resolvable:$true] %s3409
          %s3411 = sshll.u32 %s3408, 4
          %s3412 = int_to_ptr.hbm [resolvable:$true] %s3411
          %3417 = dma.vmem_to_hbm [thread:$0]  %s3410, 4096, %s3412, %s3396, 128, 128, 8
        $region36: #{tpu_custom_call.1} parent=31 // pred_fallthru
          _
      $region32: #{tpu_custom_call.1} parent=5 // pred_fallthru
        _
      %p3418 = scmp.le.s32.totalorder 2, %s12
      // Predicated region
      $region37: #{tpu_custom_call.1} parent=5 // pred_check
        %p3419 = pneg %p3418
      $region38: #{tpu_custom_call.1} parent=5 // pred_check_branch
        %3421 = sbr.rel (%p3419) target = $region40
      $region39: #{tpu_custom_call.1} parent=5 // pred_region
        %s3422 = ssub.s32 %s12, 2
        // Predicated region
        $region41: #{tpu_custom_call.1} parent=39 // pred_check
          %p3423 = pneg %p133
        $region42: #{tpu_custom_call.1} parent=39 // pred_check_branch
          %3425 = sbr.rel (%p3423) target = $region44
        $region43: #{tpu_custom_call.1} parent=39 // pred_region
          %s3426 = sand.u32 %s118, 1
          %s3427 = scalar_lea.sflag [#allocation4], %s3426
          %s3428 = sand.u32 %s118, 1
          %s3429 = smul.addr %s3428, 256
          %s3430 = scalar_lea.vmem [#allocation3], %s3429
          %3432 = dma.done %s3427, 4096
        $region44: #{tpu_custom_call.1} parent=39 // pred_fallthru
          _
      $region40: #{tpu_custom_call.1} parent=5 // pred_fallthru
        _
    $region6: #{tpu_custom_call.1} parent=1 // loop_footer
      %s16 = sadd.s32 1, %s12
    $region7: #{tpu_custom_call.1} parent=1 // loop_footer_branch
      %11 = sbr.rel target = $region3
    $region8: #{tpu_custom_call.1} parent=1 // loop_exit
      _
    %3433 = vsyncpa [#allocation4], 1
    %s3434 = scalar_lea.sflag [#allocation4], 1
    %3435 = vsyncpa %s3434, 1

</llo_original>
